<compile_context>
chip_gen: v7x
topology: tpu7x:2x2x1
jax: 0.10.0
libtpu: 0.0.40
codegen_flags: <defaults>
</compile_context>

<pallas_src>
import random

import numpy as np
import jax
import jax.numpy as jnp
from jax import lax
from jax.experimental import pallas as pl
from jax.experimental.pallas import tpu as pltpu

N_FFT = 128                   # TODO(synk): librosa default is n_fft=2048, hop=512
HOP = 32                      # n_fft // 4 (librosa relation)
N_SLAB = N_FFT // HOP         # 4 hop chunks per frame
N_BINS = N_FFT // 2 + 1       # 65 real rfft bins
LB = 128                      # lane-padded bin count
BLK = 64                      # phasor-scan block (rows) -> bounded vreg working set
T_BUCKET = 64                 # stretched-time padding bucket (avoids recompiles)
EPS_MAG = 1e-12               # magnitude guard (consistent across all branches)


def _round_up(x, m):
    return ((x + m - 1) // m) * m


def _hann(n_fft):
    n = np.arange(n_fft)
    return (0.5 - 0.5 * np.cos(2.0 * np.pi * n / n_fft)).astype(np.float32)


def _fused_matrices():
    """Window-folded, lane-padded analysis (128,256) and synthesis (256,128) matrices."""
    win = _hann(N_FFT).astype(np.float64)

    n = np.arange(N_FFT)[:, None]
    k = np.arange(N_BINS)[None, :]
    ang = 2.0 * np.pi * n * k / N_FFT
    dftm = np.zeros((N_FFT, 2 * LB), np.float64)
    dftm[:, :N_BINS] = win[:, None] * np.cos(ang)          # -> Re(STFT)
    dftm[:, LB:LB + N_BINS] = -win[:, None] * np.sin(ang)  # -> Im(STFT)

    k2 = np.arange(N_BINS)[:, None]
    n2 = np.arange(N_FFT)[None, :]
    ang2 = 2.0 * np.pi * k2 * n2 / N_FFT
    c = np.full((N_BINS, 1), 2.0)
    c[0, 0] = 1.0
    c[-1, 0] = 1.0
    icos = c * np.cos(ang2) / N_FFT
    isin = -c * np.sin(ang2) / N_FFT
    synth = np.zeros((2 * LB, N_FFT), np.float64)
    synth[:N_BINS, :] = icos * win[None, :]                # multiplies Re(D)
    synth[LB:LB + N_BINS, :] = isin * win[None, :]         # multiplies Im(D)
    return dftm.astype(np.float32), synth.astype(np.float32)


_WINDOW = _hann(N_FFT)
_DFT_FUSED, _SYNTH_FUSED = _fused_matrices()

_DEVICE_CONSTS = {}


def _dev_consts():
    """Module-level device constants: uploaded once, reused across calls."""
    if "dft" not in _DEVICE_CONSTS:
        _DEVICE_CONSTS["dft"] = jnp.asarray(_DFT_FUSED)
        _DEVICE_CONSTS["synth"] = jnp.asarray(_SYNTH_FUSED)
    return _DEVICE_CONSTS["dft"], _DEVICE_CONSTS["synth"]


# ----------------------------------------------------------------------------
# Fused kernel: windowed STFT of the gathered frames -> phase vocoder ->
# synthesis-windowed iDFT -> overlap-add + window-square normalisation.
# ----------------------------------------------------------------------------
def _time_stretch_kernel(fr_ref, dft_ref, alpha_ref, synth_ref, wsq_ref, out_ref):
    t_pad = out_ref.shape[0]

    # STFT of both gathered frame sets: one (2T,128)x(128,256) MXU contraction;
    # the analysis Hann window is folded into dft_ref.
    spec = jnp.dot(fr_ref[...], dft_ref[...], preferred_element_type=jnp.float32)
    re0, im0 = spec[:t_pad, :LB], spec[:t_pad, LB:]
    re1, im1 = spec[t_pad:, :LB], spec[t_pad:, LB:]
    alpha = alpha_ref[...]                                   # lane-dense (T,128)

    mag0 = jnp.sqrt(re0 * re0 + im0 * im0)
    mag1 = jnp.sqrt(re1 * re1 + im1 * im1)
    mag = (1.0 - alpha) * mag0 + alpha * mag1                # linear mag interp

    # per-step unit rotation exp(i*(angle(c1)-angle(c0))) = (c1*conj(c0))/(|c0||c1|)
    g0 = mag0 > EPS_MAG
    g1 = mag1 > EPS_MAG
    good = jnp.logical_and(g0, g1)
    rr = re1 * re0 + im1 * im0
    ri = im1 * re0 - re1 * im0
    inv01 = pl.reciprocal(jnp.where(good, mag0 * mag1, 1.0), approx=True)
    inv1 = pl.reciprocal(jnp.where(g1, mag1, 1.0), approx=True)
    inv0 = pl.reciprocal(jnp.where(g0, mag0, 1.0), approx=True)
    st_re = jnp.where(good, rr * inv01,
                      jnp.where(g1, re1 * inv1, jnp.where(g0, re0 * inv0, 1.0)))
    st_im = jnp.where(good, ri * inv01,
                      jnp.where(g1, im1 * inv1, jnp.where(g0, -im0 * inv0, 0.0)))

    # initial accumulated phasor = angle of the first original STFT column
    m00 = mag0[0:1, :]
    ga = m00 > EPS_MAG
    inva = pl.reciprocal(jnp.where(ga, m00, 1.0), approx=True)
    carry_re = jnp.where(ga, re0[0:1, :] * inva, 1.0)
    carry_im = jnp.where(ga, im0[0:1, :] * inva, 0.0)

    # exclusive shift folded in FRONT of the scan: e[0] = 1, e[t] = st[t-1]
    row = lax.broadcasted_iota(jnp.int32, (t_pad, LB), 0)
    e_re = jnp.where(row >= 1, pltpu.roll(st_re, 1, axis=0), 1.0)
    e_im = jnp.where(row >= 1, pltpu.roll(st_im, 1, axis=0), 0.0)

    # blocked log-depth (Hillis-Steele) cumulative complex product along time
    # with a carried (1,128) prefix phasor; renormalised per block.
    row_b = lax.broadcasted_iota(jnp.int32, (BLK, LB), 0)
    n_blk = t_pad // BLK
    p_parts = []
    for b in range(n_blk):
        cre = e_re[b * BLK:(b + 1) * BLK, :]
        cim = e_im[b * BLK:(b + 1) * BLK, :]
        d = 1
        while d < BLK:
            keep = row_b >= d
            sre = jnp.where(keep, pltpu.roll(cre, d, axis=0), 1.0)
            sim = jnp.where(keep, pltpu.roll(cim, d, axis=0), 0.0)
            cre, cim = cre * sre - cim * sim, cre * sim + cim * sre
            d *= 2
        pre = carry_re * cre - carry_im * cim
        pim = carry_re * cim + carry_im * cre
        inv_n = lax.rsqrt(jnp.maximum(pre * pre + pim * pim, 1e-30))
        pre = pre * inv_n
        pim = pim * inv_n
        p_parts.append((pre, pim))
        if b + 1 < n_blk:
            # carry for the next block = accumulated phasor at this block's last row
            carry_re = pltpu.roll(pre, 1, axis=0)[0:1, :]
            carry_im = pltpu.roll(pim, 1, axis=0)[0:1, :]
    p_re = jnp.concatenate([p[0] for p in p_parts], axis=0)
    p_im = jnp.concatenate([p[1] for p in p_parts], axis=0)

    # stretched spectrum -> synthesis-windowed inverse rfft frames,
    # a single K=256 contraction (fills the full MXU depth on v6e/v7x).
    lhs = jnp.concatenate([mag * p_re, mag * p_im], axis=1)
    ywin = jnp.dot(lhs, synth_ref[...], preferred_element_type=jnp.float32)

    # fused overlap-add + 1/sum(win^2): OLA chunk m lives in lanes [0, HOP) of
    # output row m:   chunk m = sum_c ywin[m-c, c*HOP:(c+1)*HOP]
    # (rows >= n_t of ywin are exactly zero, so the sublane-roll wrap is harmless;
    #  wrapped lane garbage lands in lanes >= HOP and is zeroed by wsq_ref).
    acc = ywin
    for c in range(1, N_SLAB):
        shifted = pltpu.roll(ywin, c, axis=0)                 # rows shifted down by c
        acc = acc + pltpu.roll(shifted, LB - c * HOP, axis=1)  # lane group c -> lanes 0:HOP
    out_ref[...] = acc * wsq_ref[...]


# ----------------------------------------------------------------------------
# jit-cached device pipeline: framing -> frame gather -> fused kernel.
# Shapes inside depend only on (n_samples, bucketed T) -> few distinct compiles.
# ----------------------------------------------------------------------------
@jax.jit
def _stretch_core(y, idx, alpha_lanes, inv_wsq_lanes, dftm, synth):
    n = y.shape[0]
    pad = N_FFT // 2
    ypad = jnp.pad(y, (pad, pad), mode="reflect")
    n_frames = 1 + n // HOP

    # frame matrix from hop-chunk slices (no gather); +2 zero frames emulate
    # librosa's zero padding of D along time.
    chunks = ypad[:(n_frames + N_SLAB - 1) * HOP].reshape(n_frames + N_SLAB - 1, HOP)
    frames = jnp.concatenate(
        [chunks[c:c + n_frames, :] for c in range(N_SLAB)], axis=1)
    frames = jnp.concatenate([frames, jnp.zeros((2, N_FFT), jnp.float32)], axis=0)

    # gather-before-DFT: rows [0:T] = frames at i0, rows [T:2T] = frames at i0+1
    gathered = jnp.take(frames, idx, axis=0)                  # (2*t_pad, 128)

    t_pad = alpha_lanes.shape[0]
    vmem = pl.BlockSpec(memory_space=pltpu.MemorySpace.VMEM)
    return pl.pallas_call(
        _time_stretch_kernel,
        out_shape=jax.ShapeDtypeStruct((t_pad, N_FFT), jnp.float32),
        in_specs=[vmem] * 5,
        out_specs=vmem,
    )(gathered, dftm, alpha_lanes, synth, inv_wsq_lanes)


# ----------------------------------------------------------------------------
# full time-stretch pipeline (librosa.effects.time_stretch equivalent)
# ----------------------------------------------------------------------------
def time_stretch_pallas(y, rate):
    y = jnp.asarray(y, jnp.float32)
    n = int(y.shape[0])
    n_frames = 1 + n // HOP

    # ---- host-side phase-vocoder schedule (rate is a python float) ----------
    steps = np.arange(0.0, n_frames, rate)
    n_t = int(steps.shape[0])
    n_chunks = n_t + N_SLAB - 1
    t_pad = _round_up(n_chunks, T_BUCKET)            # bucketed -> few compiles
    i0 = np.floor(steps).astype(np.int32)

    idx = np.full((2 * t_pad,), n_frames, np.int32)  # padded rows -> zero frame
    idx[:n_t] = i0
    idx[t_pad:t_pad + n_t] = i0 + 1

    alpha = np.zeros((t_pad, N_FFT), np.float32)     # lane-dense alpha
    alpha[:n_t, :] = (steps - i0).astype(np.float32)[:, None]

    # inverse of the synthesis window-square envelope, per OLA chunk, lanes 0:HOP
    w2 = (_WINDOW.astype(np.float64) ** 2).reshape(N_SLAB, HOP)
    wsq = np.zeros((n_chunks, HOP), np.float64)
    for c in range(N_SLAB):
        wsq[c:c + n_t, :] += w2[c][None, :]
    inv_wsq = np.where(wsq > np.finfo(np.float32).tiny,
                       1.0 / np.maximum(wsq, 1e-30), 1.0)
    inv_wsq_lanes = np.zeros((t_pad, N_FFT), np.float32)
    inv_wsq_lanes[:n_chunks, :HOP] = inv_wsq.astype(np.float32)

    dftm, synth = _dev_consts()
    out = _stretch_core(y, jnp.asarray(idx), jnp.asarray(alpha),
                        jnp.asarray(inv_wsq_lanes), dftm, synth)

    # ---- tiny epilogue: flatten chunks, trim centre pad, fix output length ---
    # (matches librosa.istft(length=...) for center=True: drop n_fft//2 at the
    #  start, then truncate / zero-pad to round(n / rate) samples.)
    yfull = out[:n_chunks, :HOP].reshape(-1)
    pad = N_FFT // 2
    length = int(round(n / rate))
    avail = int(yfull.shape[0]) - pad
    if avail >= length:
        return yfull[pad:pad + length]
    return jnp.pad(yfull[pad:], (0, length - avail))


# ----------------------------------------------------------------------------
# module wrapper (mirrors the PyTorch RandomTimeStretch forward)
# ----------------------------------------------------------------------------
class RandomTimeStretch:
    def __init__(self, min_rate, max_rate, p):
        self._min_rate = min_rate
        self._max_rate = max_rate
        self._p = p

    def __call__(self, x):
        if x.shape[0] != 1:
            raise ValueError('x must have one channel')
        # The random branch / rate use host Python RNG with a data-dependent
        # output length, exactly like the original module; stays untraced.
        if random.random() < self._p:
            rate = random.uniform(self._min_rate, self._max_rate)
            return time_stretch_pallas(x[0], rate)[None, :]
        return x


if __name__ == "__main__":
    random.seed(0)
    key = jax.random.PRNGKey(0)
    n_samples = 2048
    x = jax.random.normal(key, (1, n_samples), dtype=jnp.float32)

    # internal consistency check: rate=1.0 must reconstruct the signal interior.
    # Tightened from 0.1 to 0.03; the bound covers default (bf16-pass) MXU f32
    # matmul precision.
    # TODO(synk): with fp32 contract precision on the MXU this could be ~1e-4.
    y_id = jax.block_until_ready(time_stretch_pallas(x[0], 1.0))
    ref = x[0, 256:1792]
    got = y_id[256:1792]
    rel_l2 = float(jnp.linalg.norm(got - ref) / jnp.linalg.norm(ref))
    assert rel_l2 < 0.03, f"rate=1.0 reconstruction rel-L2 error too high: {rel_l2}"

    transform = RandomTimeStretch(min_rate=0.8, max_rate=1.25, p=1.0)
    out = jax.block_until_ready(transform(x))

    assert out.ndim == 2 and out.shape[0] == 1
    assert out.dtype == jnp.float32
    assert bool(jnp.all(jnp.isfinite(out)))
    print("KERNEL_OK")
</pallas_src>

<mosaic_0001>
module attributes {stable_mosaic.version = 11 : i64} {
  func.func @_time_stretch_kernel(%arg0: memref<256x128xf32, #tpu.memory_space<vmem>>, %arg1: memref<128x256xf32, #tpu.memory_space<vmem>>, %arg2: memref<128x128xf32, #tpu.memory_space<vmem>>, %arg3: memref<256x128xf32, #tpu.memory_space<vmem>>, %arg4: memref<128x128xf32, #tpu.memory_space<vmem>>, %arg5: memref<128x128xf32, #tpu.memory_space<vmem>>) attributes {dimension_semantics = [], scalar_prefetch = 0 : i64, scratch_operands = 0 : i64, tpu.core_type = #tpu.core_type<tc>} {
    %c0 = arith.constant 0 : index
    %c0_0 = arith.constant 0 : index
    %0 = vector.load %arg0[%c0, %c0_0] : memref<256x128xf32, #tpu.memory_space<vmem>>, vector<256x128xf32>
    %c0_1 = arith.constant 0 : index
    %c0_2 = arith.constant 0 : index
    %1 = vector.load %arg1[%c0_1, %c0_2] : memref<128x256xf32, #tpu.memory_space<vmem>>, vector<128x256xf32>
    %cst = arith.constant dense<0.000000e+00> : vector<256x256xf32>
    %2 = tpu.matmul %0, %1, %cst {dimension_numbers = #tpu.dot_dimension_numbers<[1], [0], [0], [1], [0, 0, 1, 1], [], []>} : vector<256x128xf32>, vector<128x256xf32>, vector<256x256xf32> -> vector<256x256xf32>
    %3 = vector.extract_strided_slice %2 {offsets = [0, 0], sizes = [128, 128], strides = [1, 1]} : vector<256x256xf32> to vector<128x128xf32>
    %4 = vector.extract_strided_slice %2 {offsets = [0, 128], sizes = [128, 128], strides = [1, 1]} : vector<256x256xf32> to vector<128x128xf32>
    %5 = vector.extract_strided_slice %2 {offsets = [128, 0], sizes = [128, 128], strides = [1, 1]} : vector<256x256xf32> to vector<128x128xf32>
    %6 = vector.extract_strided_slice %2 {offsets = [128, 128], sizes = [128, 128], strides = [1, 1]} : vector<256x256xf32> to vector<128x128xf32>
    %c0_3 = arith.constant 0 : index
    %c0_4 = arith.constant 0 : index
    %7 = vector.load %arg2[%c0_3, %c0_4] : memref<128x128xf32, #tpu.memory_space<vmem>>, vector<128x128xf32>
    %8 = arith.mulf %3, %3 : vector<128x128xf32>
    %9 = arith.mulf %4, %4 : vector<128x128xf32>
    %10 = arith.addf %8, %9 : vector<128x128xf32>
    %11 = math.sqrt %10 : vector<128x128xf32>
    %12 = arith.mulf %5, %5 : vector<128x128xf32>
    %13 = arith.mulf %6, %6 : vector<128x128xf32>
    %14 = arith.addf %12, %13 : vector<128x128xf32>
    %15 = math.sqrt %14 : vector<128x128xf32>
    %cst_5 = arith.constant 1.000000e+00 : f32
    %16 = vector.broadcast %cst_5 : f32 to vector<128x128xf32>
    %17 = arith.subf %16, %7 : vector<128x128xf32>
    %18 = arith.mulf %17, %11 : vector<128x128xf32>
    %19 = arith.mulf %7, %15 : vector<128x128xf32>
    %20 = arith.addf %18, %19 : vector<128x128xf32>
    %cst_6 = arith.constant 9.99999996E-13 : f32
    %21 = vector.broadcast %cst_6 : f32 to vector<128x128xf32>
    %22 = arith.cmpf ogt, %11, %21 : vector<128x128xf32>
    %cst_7 = arith.constant 9.99999996E-13 : f32
    %23 = vector.broadcast %cst_7 : f32 to vector<128x128xf32>
    %24 = arith.cmpf ogt, %15, %23 : vector<128x128xf32>
    %25 = arith.andi %22, %24 : vector<128x128xi1>
    %26 = arith.mulf %5, %3 : vector<128x128xf32>
    %27 = arith.mulf %6, %4 : vector<128x128xf32>
    %28 = arith.addf %26, %27 : vector<128x128xf32>
    %29 = arith.mulf %6, %3 : vector<128x128xf32>
    %30 = arith.mulf %5, %4 : vector<128x128xf32>
    %31 = arith.subf %29, %30 : vector<128x128xf32>
    %32 = arith.mulf %11, %15 : vector<128x128xf32>
    %cst_8 = arith.constant 1.000000e+00 : f32
    %33 = vector.broadcast %cst_8 : f32 to vector<128x128xf32>
    %34 = arith.select %25, %32, %33 : vector<128x128xi1>, vector<128x128xf32>
    %35 = tpu.reciprocal %34 {approx = true} : vector<128x128xf32> -> vector<128x128xf32>
    %cst_9 = arith.constant 1.000000e+00 : f32
    %36 = vector.broadcast %cst_9 : f32 to vector<128x128xf32>
    %37 = arith.select %24, %15, %36 : vector<128x128xi1>, vector<128x128xf32>
    %38 = tpu.reciprocal %37 {approx = true} : vector<128x128xf32> -> vector<128x128xf32>
    %cst_10 = arith.constant 1.000000e+00 : f32
    %39 = vector.broadcast %cst_10 : f32 to vector<128x128xf32>
    %40 = arith.select %22, %11, %39 : vector<128x128xi1>, vector<128x128xf32>
    %41 = tpu.reciprocal %40 {approx = true} : vector<128x128xf32> -> vector<128x128xf32>
    %42 = arith.mulf %28, %35 : vector<128x128xf32>
    %43 = arith.mulf %5, %38 : vector<128x128xf32>
    %44 = arith.mulf %3, %41 : vector<128x128xf32>
    %cst_11 = arith.constant 1.000000e+00 : f32
    %45 = vector.broadcast %cst_11 : f32 to vector<128x128xf32>
    %46 = arith.select %22, %44, %45 : vector<128x128xi1>, vector<128x128xf32>
    %47 = arith.select %24, %43, %46 : vector<128x128xi1>, vector<128x128xf32>
    %48 = arith.select %25, %42, %47 : vector<128x128xi1>, vector<128x128xf32>
    %49 = arith.mulf %31, %35 : vector<128x128xf32>
    %50 = arith.mulf %6, %38 : vector<128x128xf32>
    %cst_12 = arith.constant 0.000000e+00 : f32
    %51 = vector.broadcast %cst_12 : f32 to vector<128x128xf32>
    %52 = arith.subf %51, %4 : vector<128x128xf32>
    %53 = arith.mulf %52, %41 : vector<128x128xf32>
    %cst_13 = arith.constant 0.000000e+00 : f32
    %54 = vector.broadcast %cst_13 : f32 to vector<128x128xf32>
    %55 = arith.select %22, %53, %54 : vector<128x128xi1>, vector<128x128xf32>
    %56 = arith.select %24, %50, %55 : vector<128x128xi1>, vector<128x128xf32>
    %57 = arith.select %25, %49, %56 : vector<128x128xi1>, vector<128x128xf32>
    %58 = vector.extract_strided_slice %11 {offsets = [0, 0], sizes = [1, 128], strides = [1, 1]} : vector<128x128xf32> to vector<1x128xf32>
    %cst_14 = arith.constant 9.99999996E-13 : f32
    %59 = vector.broadcast %cst_14 : f32 to vector<1x128xf32>
    %60 = arith.cmpf ogt, %58, %59 : vector<1x128xf32>
    %cst_15 = arith.constant 1.000000e+00 : f32
    %61 = vector.broadcast %cst_15 : f32 to vector<1x128xf32>
    %62 = arith.select %60, %58, %61 : vector<1x128xi1>, vector<1x128xf32>
    %63 = tpu.reciprocal %62 {approx = true} : vector<1x128xf32> -> vector<1x128xf32>
    %64 = vector.extract_strided_slice %3 {offsets = [0, 0], sizes = [1, 128], strides = [1, 1]} : vector<128x128xf32> to vector<1x128xf32>
    %65 = arith.mulf %64, %63 : vector<1x128xf32>
    %cst_16 = arith.constant 1.000000e+00 : f32
    %66 = vector.broadcast %cst_16 : f32 to vector<1x128xf32>
    %67 = arith.select %60, %65, %66 : vector<1x128xi1>, vector<1x128xf32>
    %68 = vector.extract_strided_slice %4 {offsets = [0, 0], sizes = [1, 128], strides = [1, 1]} : vector<128x128xf32> to vector<1x128xf32>
    %69 = arith.mulf %68, %63 : vector<1x128xf32>
    %cst_17 = arith.constant 0.000000e+00 : f32
    %70 = vector.broadcast %cst_17 : f32 to vector<1x128xf32>
    %71 = arith.select %60, %69, %70 : vector<1x128xi1>, vector<1x128xf32>
    %72 = tpu.iota {dimensions = array<i32: 0>} : vector<128x128xi32>
    %c1_i32 = arith.constant 1 : i32
    %73 = vector.broadcast %c1_i32 : i32 to vector<128x128xi32>
    %74 = arith.cmpi sge, %72, %73 : vector<128x128xi32>
    %c1_i32_18 = arith.constant 1 : i32
    %75 = tpu.dynamic_rotate %48 by %c1_i32_18 dim 0 : vector<128x128xf32>, i32 -> vector<128x128xf32>
    %cst_19 = arith.constant 1.000000e+00 : f32
    %76 = vector.broadcast %cst_19 : f32 to vector<128x128xf32>
    %77 = arith.select %74, %75, %76 : vector<128x128xi1>, vector<128x128xf32>
    %c1_i32_20 = arith.constant 1 : i32
    %78 = vector.broadcast %c1_i32_20 : i32 to vector<128x128xi32>
    %79 = arith.cmpi sge, %72, %78 : vector<128x128xi32>
    %c1_i32_21 = arith.constant 1 : i32
    %80 = tpu.dynamic_rotate %57 by %c1_i32_21 dim 0 : vector<128x128xf32>, i32 -> vector<128x128xf32>
    %cst_22 = arith.constant 0.000000e+00 : f32
    %81 = vector.broadcast %cst_22 : f32 to vector<128x128xf32>
    %82 = arith.select %79, %80, %81 : vector<128x128xi1>, vector<128x128xf32>
    %83 = tpu.iota {dimensions = array<i32: 0>} : vector<64x128xi32>
    %84 = vector.extract_strided_slice %77 {offsets = [0, 0], sizes = [64, 128], strides = [1, 1]} : vector<128x128xf32> to vector<64x128xf32>
    %85 = vector.extract_strided_slice %82 {offsets = [0, 0], sizes = [64, 128], strides = [1, 1]} : vector<128x128xf32> to vector<64x128xf32>
    %c1_i32_23 = arith.constant 1 : i32
    %86 = vector.broadcast %c1_i32_23 : i32 to vector<64x128xi32>
    %87 = arith.cmpi sge, %83, %86 : vector<64x128xi32>
    %c1_i32_24 = arith.constant 1 : i32
    %88 = tpu.dynamic_rotate %84 by %c1_i32_24 dim 0 : vector<64x128xf32>, i32 -> vector<64x128xf32>
    %cst_25 = arith.constant 1.000000e+00 : f32
    %89 = vector.broadcast %cst_25 : f32 to vector<64x128xf32>
    %90 = arith.select %87, %88, %89 : vector<64x128xi1>, vector<64x128xf32>
    %c1_i32_26 = arith.constant 1 : i32
    %91 = tpu.dynamic_rotate %85 by %c1_i32_26 dim 0 : vector<64x128xf32>, i32 -> vector<64x128xf32>
    %cst_27 = arith.constant 0.000000e+00 : f32
    %92 = vector.broadcast %cst_27 : f32 to vector<64x128xf32>
    %93 = arith.select %87, %91, %92 : vector<64x128xi1>, vector<64x128xf32>
    %94 = arith.mulf %84, %90 : vector<64x128xf32>
    %95 = arith.mulf %85, %93 : vector<64x128xf32>
    %96 = arith.subf %94, %95 : vector<64x128xf32>
    %97 = arith.mulf %84, %93 : vector<64x128xf32>
    %98 = arith.mulf %85, %90 : vector<64x128xf32>
    %99 = arith.addf %97, %98 : vector<64x128xf32>
    %c2_i32 = arith.constant 2 : i32
    %100 = vector.broadcast %c2_i32 : i32 to vector<64x128xi32>
    %101 = arith.cmpi sge, %83, %100 : vector<64x128xi32>
    %c2_i32_28 = arith.constant 2 : i32
    %102 = tpu.dynamic_rotate %96 by %c2_i32_28 dim 0 : vector<64x128xf32>, i32 -> vector<64x128xf32>
    %cst_29 = arith.constant 1.000000e+00 : f32
    %103 = vector.broadcast %cst_29 : f32 to vector<64x128xf32>
    %104 = arith.select %101, %102, %103 : vector<64x128xi1>, vector<64x128xf32>
    %c2_i32_30 = arith.constant 2 : i32
    %105 = tpu.dynamic_rotate %99 by %c2_i32_30 dim 0 : vector<64x128xf32>, i32 -> vector<64x128xf32>
    %cst_31 = arith.constant 0.000000e+00 : f32
    %106 = vector.broadcast %cst_31 : f32 to vector<64x128xf32>
    %107 = arith.select %101, %105, %106 : vector<64x128xi1>, vector<64x128xf32>
    %108 = arith.mulf %96, %104 : vector<64x128xf32>
    %109 = arith.mulf %99, %107 : vector<64x128xf32>
    %110 = arith.subf %108, %109 : vector<64x128xf32>
    %111 = arith.mulf %96, %107 : vector<64x128xf32>
    %112 = arith.mulf %99, %104 : vector<64x128xf32>
    %113 = arith.addf %111, %112 : vector<64x128xf32>
    %c4_i32 = arith.constant 4 : i32
    %114 = vector.broadcast %c4_i32 : i32 to vector<64x128xi32>
    %115 = arith.cmpi sge, %83, %114 : vector<64x128xi32>
    %c4_i32_32 = arith.constant 4 : i32
    %116 = tpu.dynamic_rotate %110 by %c4_i32_32 dim 0 : vector<64x128xf32>, i32 -> vector<64x128xf32>
    %cst_33 = arith.constant 1.000000e+00 : f32
    %117 = vector.broadcast %cst_33 : f32 to vector<64x128xf32>
    %118 = arith.select %115, %116, %117 : vector<64x128xi1>, vector<64x128xf32>
    %c4_i32_34 = arith.constant 4 : i32
    %119 = tpu.dynamic_rotate %113 by %c4_i32_34 dim 0 : vector<64x128xf32>, i32 -> vector<64x128xf32>
    %cst_35 = arith.constant 0.000000e+00 : f32
    %120 = vector.broadcast %cst_35 : f32 to vector<64x128xf32>
    %121 = arith.select %115, %119, %120 : vector<64x128xi1>, vector<64x128xf32>
    %122 = arith.mulf %110, %118 : vector<64x128xf32>
    %123 = arith.mulf %113, %121 : vector<64x128xf32>
    %124 = arith.subf %122, %123 : vector<64x128xf32>
    %125 = arith.mulf %110, %121 : vector<64x128xf32>
    %126 = arith.mulf %113, %118 : vector<64x128xf32>
    %127 = arith.addf %125, %126 : vector<64x128xf32>
    %c8_i32 = arith.constant 8 : i32
    %128 = vector.broadcast %c8_i32 : i32 to vector<64x128xi32>
    %129 = arith.cmpi sge, %83, %128 : vector<64x128xi32>
    %c8_i32_36 = arith.constant 8 : i32
    %130 = tpu.dynamic_rotate %124 by %c8_i32_36 dim 0 : vector<64x128xf32>, i32 -> vector<64x128xf32>
    %cst_37 = arith.constant 1.000000e+00 : f32
    %131 = vector.broadcast %cst_37 : f32 to vector<64x128xf32>
    %132 = arith.select %129, %130, %131 : vector<64x128xi1>, vector<64x128xf32>
    %c8_i32_38 = arith.constant 8 : i32
    %133 = tpu.dynamic_rotate %127 by %c8_i32_38 dim 0 : vector<64x128xf32>, i32 -> vector<64x128xf32>
    %cst_39 = arith.constant 0.000000e+00 : f32
    %134 = vector.broadcast %cst_39 : f32 to vector<64x128xf32>
    %135 = arith.select %129, %133, %134 : vector<64x128xi1>, vector<64x128xf32>
    %136 = arith.mulf %124, %132 : vector<64x128xf32>
    %137 = arith.mulf %127, %135 : vector<64x128xf32>
    %138 = arith.subf %136, %137 : vector<64x128xf32>
    %139 = arith.mulf %124, %135 : vector<64x128xf32>
    %140 = arith.mulf %127, %132 : vector<64x128xf32>
    %141 = arith.addf %139, %140 : vector<64x128xf32>
    %c16_i32 = arith.constant 16 : i32
    %142 = vector.broadcast %c16_i32 : i32 to vector<64x128xi32>
    %143 = arith.cmpi sge, %83, %142 : vector<64x128xi32>
    %c16_i32_40 = arith.constant 16 : i32
    %144 = tpu.dynamic_rotate %138 by %c16_i32_40 dim 0 : vector<64x128xf32>, i32 -> vector<64x128xf32>
    %cst_41 = arith.constant 1.000000e+00 : f32
    %145 = vector.broadcast %cst_41 : f32 to vector<64x128xf32>
    %146 = arith.select %143, %144, %145 : vector<64x128xi1>, vector<64x128xf32>
    %c16_i32_42 = arith.constant 16 : i32
    %147 = tpu.dynamic_rotate %141 by %c16_i32_42 dim 0 : vector<64x128xf32>, i32 -> vector<64x128xf32>
    %cst_43 = arith.constant 0.000000e+00 : f32
    %148 = vector.broadcast %cst_43 : f32 to vector<64x128xf32>
    %149 = arith.select %143, %147, %148 : vector<64x128xi1>, vector<64x128xf32>
    %150 = arith.mulf %138, %146 : vector<64x128xf32>
    %151 = arith.mulf %141, %149 : vector<64x128xf32>
    %152 = arith.subf %150, %151 : vector<64x128xf32>
    %153 = arith.mulf %138, %149 : vector<64x128xf32>
    %154 = arith.mulf %141, %146 : vector<64x128xf32>
    %155 = arith.addf %153, %154 : vector<64x128xf32>
    %c32_i32 = arith.constant 32 : i32
    %156 = vector.broadcast %c32_i32 : i32 to vector<64x128xi32>
    %157 = arith.cmpi sge, %83, %156 : vector<64x128xi32>
    %c32_i32_44 = arith.constant 32 : i32
    %158 = tpu.dynamic_rotate %152 by %c32_i32_44 dim 0 : vector<64x128xf32>, i32 -> vector<64x128xf32>
    %cst_45 = arith.constant 1.000000e+00 : f32
    %159 = vector.broadcast %cst_45 : f32 to vector<64x128xf32>
    %160 = arith.select %157, %158, %159 : vector<64x128xi1>, vector<64x128xf32>
    %c32_i32_46 = arith.constant 32 : i32
    %161 = tpu.dynamic_rotate %155 by %c32_i32_46 dim 0 : vector<64x128xf32>, i32 -> vector<64x128xf32>
    %cst_47 = arith.constant 0.000000e+00 : f32
    %162 = vector.broadcast %cst_47 : f32 to vector<64x128xf32>
    %163 = arith.select %157, %161, %162 : vector<64x128xi1>, vector<64x128xf32>
    %164 = arith.mulf %152, %160 : vector<64x128xf32>
    %165 = arith.mulf %155, %163 : vector<64x128xf32>
    %166 = arith.subf %164, %165 : vector<64x128xf32>
    %167 = arith.mulf %152, %163 : vector<64x128xf32>
    %168 = arith.mulf %155, %160 : vector<64x128xf32>
    %169 = arith.addf %167, %168 : vector<64x128xf32>
    %170 = vector.broadcast %67 : vector<1x128xf32> to vector<64x128xf32>
    %171 = arith.mulf %170, %166 : vector<64x128xf32>
    %172 = vector.broadcast %71 : vector<1x128xf32> to vector<64x128xf32>
    %173 = arith.mulf %172, %169 : vector<64x128xf32>
    %174 = arith.subf %171, %173 : vector<64x128xf32>
    %175 = vector.broadcast %67 : vector<1x128xf32> to vector<64x128xf32>
    %176 = arith.mulf %175, %169 : vector<64x128xf32>
    %177 = vector.broadcast %71 : vector<1x128xf32> to vector<64x128xf32>
    %178 = arith.mulf %177, %166 : vector<64x128xf32>
    %179 = arith.addf %176, %178 : vector<64x128xf32>
    %180 = arith.mulf %174, %174 : vector<64x128xf32>
    %181 = arith.mulf %179, %179 : vector<64x128xf32>
    %182 = arith.addf %180, %181 : vector<64x128xf32>
    %cst_48 = arith.constant 1.000000e-30 : f32
    %183 = vector.broadcast %cst_48 : f32 to vector<64x128xf32>
    %184 = arith.maximumf %182, %183 : vector<64x128xf32>
    %185 = math.rsqrt %184 : vector<64x128xf32>
    %186 = arith.mulf %174, %185 : vector<64x128xf32>
    %187 = arith.mulf %179, %185 : vector<64x128xf32>
    %c1_i32_49 = arith.constant 1 : i32
    %188 = tpu.dynamic_rotate %186 by %c1_i32_49 dim 0 : vector<64x128xf32>, i32 -> vector<64x128xf32>
    %189 = vector.extract_strided_slice %188 {offsets = [0, 0], sizes = [1, 128], strides = [1, 1]} : vector<64x128xf32> to vector<1x128xf32>
    %c1_i32_50 = arith.constant 1 : i32
    %190 = tpu.dynamic_rotate %187 by %c1_i32_50 dim 0 : vector<64x128xf32>, i32 -> vector<64x128xf32>
    %191 = vector.extract_strided_slice %190 {offsets = [0, 0], sizes = [1, 128], strides = [1, 1]} : vector<64x128xf32> to vector<1x128xf32>
    %192 = vector.extract_strided_slice %77 {offsets = [64, 0], sizes = [64, 128], strides = [1, 1]} : vector<128x128xf32> to vector<64x128xf32>
    %193 = vector.extract_strided_slice %82 {offsets = [64, 0], sizes = [64, 128], strides = [1, 1]} : vector<128x128xf32> to vector<64x128xf32>
    %c1_i32_51 = arith.constant 1 : i32
    %194 = vector.broadcast %c1_i32_51 : i32 to vector<64x128xi32>
    %195 = arith.cmpi sge, %83, %194 : vector<64x128xi32>
    %c1_i32_52 = arith.constant 1 : i32
    %196 = tpu.dynamic_rotate %192 by %c1_i32_52 dim 0 : vector<64x128xf32>, i32 -> vector<64x128xf32>
    %cst_53 = arith.constant 1.000000e+00 : f32
    %197 = vector.broadcast %cst_53 : f32 to vector<64x128xf32>
    %198 = arith.select %195, %196, %197 : vector<64x128xi1>, vector<64x128xf32>
    %c1_i32_54 = arith.constant 1 : i32
    %199 = tpu.dynamic_rotate %193 by %c1_i32_54 dim 0 : vector<64x128xf32>, i32 -> vector<64x128xf32>
    %cst_55 = arith.constant 0.000000e+00 : f32
    %200 = vector.broadcast %cst_55 : f32 to vector<64x128xf32>
    %201 = arith.select %195, %199, %200 : vector<64x128xi1>, vector<64x128xf32>
    %202 = arith.mulf %192, %198 : vector<64x128xf32>
    %203 = arith.mulf %193, %201 : vector<64x128xf32>
    %204 = arith.subf %202, %203 : vector<64x128xf32>
    %205 = arith.mulf %192, %201 : vector<64x128xf32>
    %206 = arith.mulf %193, %198 : vector<64x128xf32>
    %207 = arith.addf %205, %206 : vector<64x128xf32>
    %c2_i32_56 = arith.constant 2 : i32
    %208 = vector.broadcast %c2_i32_56 : i32 to vector<64x128xi32>
    %209 = arith.cmpi sge, %83, %208 : vector<64x128xi32>
    %c2_i32_57 = arith.constant 2 : i32
    %210 = tpu.dynamic_rotate %204 by %c2_i32_57 dim 0 : vector<64x128xf32>, i32 -> vector<64x128xf32>
    %cst_58 = arith.constant 1.000000e+00 : f32
    %211 = vector.broadcast %cst_58 : f32 to vector<64x128xf32>
    %212 = arith.select %209, %210, %211 : vector<64x128xi1>, vector<64x128xf32>
    %c2_i32_59 = arith.constant 2 : i32
    %213 = tpu.dynamic_rotate %207 by %c2_i32_59 dim 0 : vector<64x128xf32>, i32 -> vector<64x128xf32>
    %cst_60 = arith.constant 0.000000e+00 : f32
    %214 = vector.broadcast %cst_60 : f32 to vector<64x128xf32>
    %215 = arith.select %209, %213, %214 : vector<64x128xi1>, vector<64x128xf32>
    %216 = arith.mulf %204, %212 : vector<64x128xf32>
    %217 = arith.mulf %207, %215 : vector<64x128xf32>
    %218 = arith.subf %216, %217 : vector<64x128xf32>
    %219 = arith.mulf %204, %215 : vector<64x128xf32>
    %220 = arith.mulf %207, %212 : vector<64x128xf32>
    %221 = arith.addf %219, %220 : vector<64x128xf32>
    %c4_i32_61 = arith.constant 4 : i32
    %222 = vector.broadcast %c4_i32_61 : i32 to vector<64x128xi32>
    %223 = arith.cmpi sge, %83, %222 : vector<64x128xi32>
    %c4_i32_62 = arith.constant 4 : i32
    %224 = tpu.dynamic_rotate %218 by %c4_i32_62 dim 0 : vector<64x128xf32>, i32 -> vector<64x128xf32>
    %cst_63 = arith.constant 1.000000e+00 : f32
    %225 = vector.broadcast %cst_63 : f32 to vector<64x128xf32>
    %226 = arith.select %223, %224, %225 : vector<64x128xi1>, vector<64x128xf32>
    %c4_i32_64 = arith.constant 4 : i32
    %227 = tpu.dynamic_rotate %221 by %c4_i32_64 dim 0 : vector<64x128xf32>, i32 -> vector<64x128xf32>
    %cst_65 = arith.constant 0.000000e+00 : f32
    %228 = vector.broadcast %cst_65 : f32 to vector<64x128xf32>
    %229 = arith.select %223, %227, %228 : vector<64x128xi1>, vector<64x128xf32>
    %230 = arith.mulf %218, %226 : vector<64x128xf32>
    %231 = arith.mulf %221, %229 : vector<64x128xf32>
    %232 = arith.subf %230, %231 : vector<64x128xf32>
    %233 = arith.mulf %218, %229 : vector<64x128xf32>
    %234 = arith.mulf %221, %226 : vector<64x128xf32>
    %235 = arith.addf %233, %234 : vector<64x128xf32>
    %c8_i32_66 = arith.constant 8 : i32
    %236 = vector.broadcast %c8_i32_66 : i32 to vector<64x128xi32>
    %237 = arith.cmpi sge, %83, %236 : vector<64x128xi32>
    %c8_i32_67 = arith.constant 8 : i32
    %238 = tpu.dynamic_rotate %232 by %c8_i32_67 dim 0 : vector<64x128xf32>, i32 -> vector<64x128xf32>
    %cst_68 = arith.constant 1.000000e+00 : f32
    %239 = vector.broadcast %cst_68 : f32 to vector<64x128xf32>
    %240 = arith.select %237, %238, %239 : vector<64x128xi1>, vector<64x128xf32>
    %c8_i32_69 = arith.constant 8 : i32
    %241 = tpu.dynamic_rotate %235 by %c8_i32_69 dim 0 : vector<64x128xf32>, i32 -> vector<64x128xf32>
    %cst_70 = arith.constant 0.000000e+00 : f32
    %242 = vector.broadcast %cst_70 : f32 to vector<64x128xf32>
    %243 = arith.select %237, %241, %242 : vector<64x128xi1>, vector<64x128xf32>
    %244 = arith.mulf %232, %240 : vector<64x128xf32>
    %245 = arith.mulf %235, %243 : vector<64x128xf32>
    %246 = arith.subf %244, %245 : vector<64x128xf32>
    %247 = arith.mulf %232, %243 : vector<64x128xf32>
    %248 = arith.mulf %235, %240 : vector<64x128xf32>
    %249 = arith.addf %247, %248 : vector<64x128xf32>
    %c16_i32_71 = arith.constant 16 : i32
    %250 = vector.broadcast %c16_i32_71 : i32 to vector<64x128xi32>
    %251 = arith.cmpi sge, %83, %250 : vector<64x128xi32>
    %c16_i32_72 = arith.constant 16 : i32
    %252 = tpu.dynamic_rotate %246 by %c16_i32_72 dim 0 : vector<64x128xf32>, i32 -> vector<64x128xf32>
    %cst_73 = arith.constant 1.000000e+00 : f32
    %253 = vector.broadcast %cst_73 : f32 to vector<64x128xf32>
    %254 = arith.select %251, %252, %253 : vector<64x128xi1>, vector<64x128xf32>
    %c16_i32_74 = arith.constant 16 : i32
    %255 = tpu.dynamic_rotate %249 by %c16_i32_74 dim 0 : vector<64x128xf32>, i32 -> vector<64x128xf32>
    %cst_75 = arith.constant 0.000000e+00 : f32
    %256 = vector.broadcast %cst_75 : f32 to vector<64x128xf32>
    %257 = arith.select %251, %255, %256 : vector<64x128xi1>, vector<64x128xf32>
    %258 = arith.mulf %246, %254 : vector<64x128xf32>
    %259 = arith.mulf %249, %257 : vector<64x128xf32>
    %260 = arith.subf %258, %259 : vector<64x128xf32>
    %261 = arith.mulf %246, %257 : vector<64x128xf32>
    %262 = arith.mulf %249, %254 : vector<64x128xf32>
    %263 = arith.addf %261, %262 : vector<64x128xf32>
    %c32_i32_76 = arith.constant 32 : i32
    %264 = vector.broadcast %c32_i32_76 : i32 to vector<64x128xi32>
    %265 = arith.cmpi sge, %83, %264 : vector<64x128xi32>
    %c32_i32_77 = arith.constant 32 : i32
    %266 = tpu.dynamic_rotate %260 by %c32_i32_77 dim 0 : vector<64x128xf32>, i32 -> vector<64x128xf32>
    %cst_78 = arith.constant 1.000000e+00 : f32
    %267 = vector.broadcast %cst_78 : f32 to vector<64x128xf32>
    %268 = arith.select %265, %266, %267 : vector<64x128xi1>, vector<64x128xf32>
    %c32_i32_79 = arith.constant 32 : i32
    %269 = tpu.dynamic_rotate %263 by %c32_i32_79 dim 0 : vector<64x128xf32>, i32 -> vector<64x128xf32>
    %cst_80 = arith.constant 0.000000e+00 : f32
    %270 = vector.broadcast %cst_80 : f32 to vector<64x128xf32>
    %271 = arith.select %265, %269, %270 : vector<64x128xi1>, vector<64x128xf32>
    %272 = arith.mulf %260, %268 : vector<64x128xf32>
    %273 = arith.mulf %263, %271 : vector<64x128xf32>
    %274 = arith.subf %272, %273 : vector<64x128xf32>
    %275 = arith.mulf %260, %271 : vector<64x128xf32>
    %276 = arith.mulf %263, %268 : vector<64x128xf32>
    %277 = arith.addf %275, %276 : vector<64x128xf32>
    %278 = vector.broadcast %189 : vector<1x128xf32> to vector<64x128xf32>
    %279 = arith.mulf %278, %274 : vector<64x128xf32>
    %280 = vector.broadcast %191 : vector<1x128xf32> to vector<64x128xf32>
    %281 = arith.mulf %280, %277 : vector<64x128xf32>
    %282 = arith.subf %279, %281 : vector<64x128xf32>
    %283 = vector.broadcast %189 : vector<1x128xf32> to vector<64x128xf32>
    %284 = arith.mulf %283, %277 : vector<64x128xf32>
    %285 = vector.broadcast %191 : vector<1x128xf32> to vector<64x128xf32>
    %286 = arith.mulf %285, %274 : vector<64x128xf32>
    %287 = arith.addf %284, %286 : vector<64x128xf32>
    %288 = arith.mulf %282, %282 : vector<64x128xf32>
    %289 = arith.mulf %287, %287 : vector<64x128xf32>
    %290 = arith.addf %288, %289 : vector<64x128xf32>
    %cst_81 = arith.constant 1.000000e-30 : f32
    %291 = vector.broadcast %cst_81 : f32 to vector<64x128xf32>
    %292 = arith.maximumf %290, %291 : vector<64x128xf32>
    %293 = math.rsqrt %292 : vector<64x128xf32>
    %294 = arith.mulf %282, %293 : vector<64x128xf32>
    %295 = arith.mulf %287, %293 : vector<64x128xf32>
    %296 = tpu.concatenate %186, %294 in 0 : vector<64x128xf32>, vector<64x128xf32> -> vector<128x128xf32>
    %297 = tpu.concatenate %187, %295 in 0 : vector<64x128xf32>, vector<64x128xf32> -> vector<128x128xf32>
    %298 = arith.mulf %20, %296 : vector<128x128xf32>
    %299 = arith.mulf %20, %297 : vector<128x128xf32>
    %300 = tpu.concatenate %298, %299 in 1 : vector<128x128xf32>, vector<128x128xf32> -> vector<128x256xf32>
    %c0_82 = arith.constant 0 : index
    %c0_83 = arith.constant 0 : index
    %301 = vector.load %arg3[%c0_82, %c0_83] : memref<256x128xf32, #tpu.memory_space<vmem>>, vector<256x128xf32>
    %cst_84 = arith.constant dense<0.000000e+00> : vector<128x128xf32>
    %302 = tpu.matmul %300, %301, %cst_84 {dimension_numbers = #tpu.dot_dimension_numbers<[1], [0], [0], [1], [0, 0, 1, 1], [], []>} : vector<128x256xf32>, vector<256x128xf32>, vector<128x128xf32> -> vector<128x128xf32>
    %c1_i32_85 = arith.constant 1 : i32
    %303 = tpu.dynamic_rotate %302 by %c1_i32_85 dim 0 : vector<128x128xf32>, i32 -> vector<128x128xf32>
    %c96_i32 = arith.constant 96 : i32
    %304 = tpu.dynamic_rotate %303 by %c96_i32 dim 1 : vector<128x128xf32>, i32 -> vector<128x128xf32>
    %305 = arith.addf %302, %304 : vector<128x128xf32>
    %c2_i32_86 = arith.constant 2 : i32
    %306 = tpu.dynamic_rotate %302 by %c2_i32_86 dim 0 : vector<128x128xf32>, i32 -> vector<128x128xf32>
    %c64_i32 = arith.constant 64 : i32
    %307 = tpu.dynamic_rotate %306 by %c64_i32 dim 1 : vector<128x128xf32>, i32 -> vector<128x128xf32>
    %308 = arith.addf %305, %307 : vector<128x128xf32>
    %c3_i32 = arith.constant 3 : i32
    %309 = tpu.dynamic_rotate %302 by %c3_i32 dim 0 : vector<128x128xf32>, i32 -> vector<128x128xf32>
    %c32_i32_87 = arith.constant 32 : i32
    %310 = tpu.dynamic_rotate %309 by %c32_i32_87 dim 1 : vector<128x128xf32>, i32 -> vector<128x128xf32>
    %311 = arith.addf %308, %310 : vector<128x128xf32>
    %c0_88 = arith.constant 0 : index
    %c0_89 = arith.constant 0 : index
    %312 = vector.load %arg4[%c0_88, %c0_89] : memref<128x128xf32, #tpu.memory_space<vmem>>, vector<128x128xf32>
    %313 = arith.mulf %311, %312 : vector<128x128xf32>
    %c0_90 = arith.constant 0 : index
    %c0_91 = arith.constant 0 : index
    %314 = vector.load %arg5[%c0_90, %c0_91] : memref<128x128xf32, #tpu.memory_space<vmem>>, vector<128x128xf32>
    tpu.vector_store %arg5[%c0_90, %c0_91], %313 {strides = array<i32>} : memref<128x128xf32, #tpu.memory_space<vmem>>, vector<128x128xf32>,
    return
  }
}

</mosaic_0001>

<llo_original>
// kernel: _stretch_core.1
$region0: #{_stretch_core.1}
  #allocation0 [shape = 'u32[]', space=smem, size = 0x4, offset = 0x4, fixed_abs, tag = 'smem constant byte address 0x4 - core index']
  #allocation1 [shape = 'u32[144,128]{1,0:T(1,128)}', space=vmem, size = 0x12000, scoped, tag = 'internal scratch']
  %s0 = inlined_call_operand.vmem [shape: f32[256,128], index: 0, kind: input, shape index: {}]
  %s1 = inlined_call_operand.vmem [shape: f32[128,256], index: 1, kind: input, shape index: {}]
  %s2 = inlined_call_operand.vmem [shape: f32[128,128], index: 2, kind: input, shape index: {}]
  %s3 = inlined_call_operand.vmem [shape: f32[256,128], index: 3, kind: input, shape index: {}]
  %s4 = inlined_call_operand.vmem [shape: f32[128,128], index: 4, kind: input, shape index: {}]
  %s5 = inlined_call_operand.hbm [shape: f32[128,128], index: 5, kind: output, shape index: {}]
  %s6 = sld [smem:[#allocation0]]
  $region30: #{_stretch_core.1} parent=0
    _
  %s8 = ssub.s32 1, %s6
  %s9 = scalar_select 0, %s8, %s6
  $region1: #{_stretch_core.1} parent=0
    #allocation2 [shape = 'u8[65536]{0}', space=vmem, size = 0x10000, scoped, tag = 'output window, operand 0, single buffered']
    #allocation3 [shape = 's32[1]{0}', space=sflag, size = 0x4, scoped, tag = 'scoped memory for _stretch_core.1']
    %10 = vsyncpa [#allocation3], 0
    // Predicated region
    $region2: #{_stretch_core.1} parent=1 // pred_check
      _
    $region3: #{_stretch_core.1} parent=1 // pred_check_branch
      %12 = sbr.rel (0) target = $region5
    $region4: #{_stretch_core.1} parent=1 // pred_region
      _
    $region5: #{_stretch_core.1} parent=1 // pred_fallthru
      _
    // Predicated region
    $region6: #{_stretch_core.1} parent=1 // pred_check
      _
    $region7: #{_stretch_core.1} parent=1 // pred_check_branch
      %14 = sbr.rel (0) target = $region9
    $region8: #{_stretch_core.1} parent=1 // pred_region
      _
    $region9: #{_stretch_core.1} parent=1 // pred_fallthru
      _
    // Predicated region
    $region10: #{_stretch_core.1} parent=1 // pred_check
      _
    $region11: #{_stretch_core.1} parent=1 // pred_check_branch
      %16 = sbr.rel (0) target = $region13
    $region12: #{_stretch_core.1} parent=1 // pred_region
      _
    $region13: #{_stretch_core.1} parent=1 // pred_fallthru
      _
    // Predicated region
    $region14: #{_stretch_core.1} parent=1 // pred_check
      _
    $region15: #{_stretch_core.1} parent=1 // pred_check_branch
      %18 = sbr.rel (0) target = $region17
    $region16: #{_stretch_core.1} parent=1 // pred_region
      _
    $region17: #{_stretch_core.1} parent=1 // pred_fallthru
      _
    // Predicated region
    $region18: #{_stretch_core.1} parent=1 // pred_check
      _
    $region19: #{_stretch_core.1} parent=1 // pred_check_branch
      %20 = sbr.rel (0) target = $region21
    $region20: #{_stretch_core.1} parent=1 // pred_region
      _
    $region21: #{_stretch_core.1} parent=1 // pred_fallthru
      _
    %v21 = vld [vmem:[%s0] sm:$0xff]
    %v22 = vld [vmem:[%s0 + $0x8] sm:$0xff]
    %v23 = vld [vmem:[%s0 + $0x10] sm:$0xff]
    %v24 = vld [vmem:[%s0 + $0x18] sm:$0xff]
    %v25 = vld [vmem:[%s0 + $0x20] sm:$0xff]
    %v26 = vld [vmem:[%s0 + $0x28] sm:$0xff]
    %v27 = vld [vmem:[%s0 + $0x30] sm:$0xff]
    %v28 = vld [vmem:[%s0 + $0x38] sm:$0xff]
    %v29 = vld [vmem:[%s0 + $0x40] sm:$0xff]
    %v30 = vld [vmem:[%s0 + $0x48] sm:$0xff]
    %v31 = vld [vmem:[%s0 + $0x50] sm:$0xff]
    %v32 = vld [vmem:[%s0 + $0x58] sm:$0xff]
    %v33 = vld [vmem:[%s0 + $0x60] sm:$0xff]
    %v34 = vld [vmem:[%s0 + $0x68] sm:$0xff]
    %v35 = vld [vmem:[%s0 + $0x70] sm:$0xff]
    %v36 = vld [vmem:[%s0 + $0x78] sm:$0xff]
    %v37 = vld [vmem:[%s0 + $0x80] sm:$0xff]
    %v38 = vld [vmem:[%s0 + $0x88] sm:$0xff]
    %v39 = vld [vmem:[%s0 + $0x90] sm:$0xff]
    %v40 = vld [vmem:[%s0 + $0x98] sm:$0xff]
    %v41 = vld [vmem:[%s0 + $0xa0] sm:$0xff]
    %v42 = vld [vmem:[%s0 + $0xa8] sm:$0xff]
    %v43 = vld [vmem:[%s0 + $0xb0] sm:$0xff]
    %v44 = vld [vmem:[%s0 + $0xb8] sm:$0xff]
    %v45 = vld [vmem:[%s0 + $0xc0] sm:$0xff]
    %v46 = vld [vmem:[%s0 + $0xc8] sm:$0xff]
    %v47 = vld [vmem:[%s0 + $0xd0] sm:$0xff]
    %v48 = vld [vmem:[%s0 + $0xd8] sm:$0xff]
    %v49 = vld [vmem:[%s0 + $0xe0] sm:$0xff]
    %v50 = vld [vmem:[%s0 + $0xe8] sm:$0xff]
    %v51 = vld [vmem:[%s0 + $0xf0] sm:$0xff]
    %v52 = vld [vmem:[%s0 + $0xf8] sm:$0xff]
    %v53 = vld [vmem:[%s1] sm:$0xff]
    %v54 = vld [vmem:[%s1 + $0x8] sm:$0xff]
    %v55 = vld [vmem:[%s1 + $0x10] sm:$0xff]
    %v56 = vld [vmem:[%s1 + $0x18] sm:$0xff]
    %v57 = vld [vmem:[%s1 + $0x20] sm:$0xff]
    %v58 = vld [vmem:[%s1 + $0x28] sm:$0xff]
    %v59 = vld [vmem:[%s1 + $0x30] sm:$0xff]
    %v60 = vld [vmem:[%s1 + $0x38] sm:$0xff]
    %v61 = vld [vmem:[%s1 + $0x40] sm:$0xff]
    %v62 = vld [vmem:[%s1 + $0x48] sm:$0xff]
    %v63 = vld [vmem:[%s1 + $0x50] sm:$0xff]
    %v64 = vld [vmem:[%s1 + $0x58] sm:$0xff]
    %v65 = vld [vmem:[%s1 + $0x60] sm:$0xff]
    %v66 = vld [vmem:[%s1 + $0x68] sm:$0xff]
    %v67 = vld [vmem:[%s1 + $0x70] sm:$0xff]
    %v68 = vld [vmem:[%s1 + $0x78] sm:$0xff]
    %v69 = vld [vmem:[%s1 + $0x80] sm:$0xff]
    %v70 = vld [vmem:[%s1 + $0x88] sm:$0xff]
    %v71 = vld [vmem:[%s1 + $0x90] sm:$0xff]
    %v72 = vld [vmem:[%s1 + $0x98] sm:$0xff]
    %v73 = vld [vmem:[%s1 + $0xa0] sm:$0xff]
    %v74 = vld [vmem:[%s1 + $0xa8] sm:$0xff]
    %v75 = vld [vmem:[%s1 + $0xb0] sm:$0xff]
    %v76 = vld [vmem:[%s1 + $0xb8] sm:$0xff]
    %v77 = vld [vmem:[%s1 + $0xc0] sm:$0xff]
    %v78 = vld [vmem:[%s1 + $0xc8] sm:$0xff]
    %v79 = vld [vmem:[%s1 + $0xd0] sm:$0xff]
    %v80 = vld [vmem:[%s1 + $0xd8] sm:$0xff]
    %v81 = vld [vmem:[%s1 + $0xe0] sm:$0xff]
    %v82 = vld [vmem:[%s1 + $0xe8] sm:$0xff]
    %v83 = vld [vmem:[%s1 + $0xf0] sm:$0xff]
    %v84 = vld [vmem:[%s1 + $0xf8] sm:$0xff]
    %85 = vmatprep.subr.mxu0 %v54
    %86 = vmatpush1.msra.mxu0 %v53
    %87 = vmatprep.subr.mxu0 %v56
    %88 = vmatpush1.msra.mxu0 %v55
    %89 = vmatprep.subr.mxu0 %v58
    %90 = vmatpush1.msra.mxu0 %v57
    %91 = vmatprep.subr.mxu0 %v60
    %92 = vmatpush1.msra.mxu0 %v59
    %93 = vmatprep.subr.mxu0 %v62
    %94 = vmatpush1.msra.mxu0 %v61
    %95 = vmatprep.subr.mxu0 %v64
    %96 = vmatpush1.msra.mxu0 %v63
    %97 = vmatprep.subr.mxu0 %v66
    %98 = vmatpush1.msra.mxu0 %v65
    %99 = vmatprep.subr.mxu0 %v68
    %100 = vmatpush1.msra.mxu0 %v67
    %101 = vmatprep.subr.mxu0 %v70
    %102 = vmatpush1.msra.mxu0 %v69
    %103 = vmatprep.subr.mxu0 %v72
    %104 = vmatpush1.msra.mxu0 %v71
    %105 = vmatprep.subr.mxu0 %v74
    %106 = vmatpush1.msra.mxu0 %v73
    %107 = vmatprep.subr.mxu0 %v76
    %108 = vmatpush1.msra.mxu0 %v75
    %109 = vmatprep.subr.mxu0 %v78
    %110 = vmatpush1.msra.mxu0 %v77
    %111 = vmatprep.subr.mxu0 %v80
    %112 = vmatpush1.msra.mxu0 %v79
    %113 = vmatprep.subr.mxu0 %v82
    %114 = vmatpush1.msra.mxu0 %v81
    %115 = vmatprep.subr.mxu0 %v84
    %116 = vmatpush1.msra.mxu0 %v83
    %117 = vmatprep.subr.mxu0 0.0
    %118 = vmatpush1.msra.mxu0 0.0
    %119 = vmatprep.subr.mxu0 0.0
    %120 = vmatpush1.msra.mxu0 0.0
    %121 = vmatprep.subr.mxu0 0.0
    %122 = vmatpush1.msra.mxu0 0.0
    %123 = vmatprep.subr.mxu0 0.0
    %124 = vmatpush1.msra.mxu0 0.0
    %125 = vmatprep.subr.mxu0 0.0
    %126 = vmatpush1.msra.mxu0 0.0
    %127 = vmatprep.subr.mxu0 0.0
    %128 = vmatpush1.msra.mxu0 0.0
    %129 = vmatprep.subr.mxu0 0.0
    %130 = vmatpush1.msra.mxu0 0.0
    %131 = vmatprep.subr.mxu0 0.0
    %132 = vmatpush1.msra.mxu0 0.0
    %133 = vmatprep.subr.mxu0 0.0
    %134 = vmatpush1.msra.mxu0 0.0
    %135 = vmatprep.subr.mxu0 0.0
    %136 = vmatpush1.msra.mxu0 0.0
    %137 = vmatprep.subr.mxu0 0.0
    %138 = vmatpush1.msra.mxu0 0.0
    %139 = vmatprep.subr.mxu0 0.0
    %140 = vmatpush1.msra.mxu0 0.0
    %141 = vmatprep.subr.mxu0 0.0
    %142 = vmatpush1.msra.mxu0 0.0
    %143 = vmatprep.subr.mxu0 0.0
    %144 = vmatpush1.msra.mxu0 0.0
    %145 = vmatprep.subr.mxu0 0.0
    %146 = vmatpush1.msra.mxu0 0.0
    %147 = vmatprep.subr.mxu0 0.0
    %148 = vmatpush1.msra.mxu0 0.0
    %149 = vmatprep.mubr.f32.mxu0 0.0
    %150 = vmatmul.mubr.f32.gmra.mrb[0].mxu0 %v21
    %v151 = vpop.f32.mrb[0].mxu0
    %v152 = vadd.f32 0.0, %v151
    %v153 = vpop.f32.mrb[0].mxu0
    %v154 = vadd.f32 0.0, %v153
    %155 = vmatprep.mubr.f32.mxu0 0.0
    %156 = vmatmul.mubr.f32.gmra.mrb[0].mxu0 %v22
    %v157 = vpop.f32.mrb[0].mxu0
    %v158 = vadd.f32 0.0, %v157
    %v159 = vpop.f32.mrb[0].mxu0
    %v160 = vadd.f32 0.0, %v159
    %161 = vmatprep.mubr.f32.mxu0 0.0
    %162 = vmatmul.mubr.f32.gmra.mrb[0].mxu0 %v23
    %v163 = vpop.f32.mrb[0].mxu0
    %v164 = vadd.f32 0.0, %v163
    %v165 = vpop.f32.mrb[0].mxu0
    %v166 = vadd.f32 0.0, %v165
    %167 = vmatprep.mubr.f32.mxu0 0.0
    %168 = vmatmul.mubr.f32.gmra.mrb[0].mxu0 %v24
    %v169 = vpop.f32.mrb[0].mxu0
    %v170 = vadd.f32 0.0, %v169
    %v171 = vpop.f32.mrb[0].mxu0
    %v172 = vadd.f32 0.0, %v171
    %173 = vmatprep.mubr.f32.mxu0 0.0
    %174 = vmatmul.mubr.f32.gmra.mrb[0].mxu0 %v25
    %v175 = vpop.f32.mrb[0].mxu0
    %v176 = vadd.f32 0.0, %v175
    %v177 = vpop.f32.mrb[0].mxu0
    %v178 = vadd.f32 0.0, %v177
    %179 = vmatprep.mubr.f32.mxu0 0.0
    %180 = vmatmul.mubr.f32.gmra.mrb[0].mxu0 %v26
    %v181 = vpop.f32.mrb[0].mxu0
    %v182 = vadd.f32 0.0, %v181
    %v183 = vpop.f32.mrb[0].mxu0
    %v184 = vadd.f32 0.0, %v183
    %185 = vmatprep.mubr.f32.mxu0 0.0
    %186 = vmatmul.mubr.f32.gmra.mrb[0].mxu0 %v27
    %v187 = vpop.f32.mrb[0].mxu0
    %v188 = vadd.f32 0.0, %v187
    %v189 = vpop.f32.mrb[0].mxu0
    %v190 = vadd.f32 0.0, %v189
    %191 = vmatprep.mubr.f32.mxu0 0.0
    %192 = vmatmul.mubr.f32.gmra.mrb[0].mxu0 %v28
    %v193 = vpop.f32.mrb[0].mxu0
    %v194 = vadd.f32 0.0, %v193
    %v195 = vpop.f32.mrb[0].mxu0
    %v196 = vadd.f32 0.0, %v195
    %197 = vmatprep.mubr.f32.mxu0 0.0
    %198 = vmatmul.mubr.f32.gmra.mrb[0].mxu0 %v29
    %v199 = vpop.f32.mrb[0].mxu0
    %v200 = vadd.f32 0.0, %v199
    %v201 = vpop.f32.mrb[0].mxu0
    %v202 = vadd.f32 0.0, %v201
    %203 = vmatprep.mubr.f32.mxu0 0.0
    %204 = vmatmul.mubr.f32.gmra.mrb[0].mxu0 %v30
    %v205 = vpop.f32.mrb[0].mxu0
    %v206 = vadd.f32 0.0, %v205
    %v207 = vpop.f32.mrb[0].mxu0
    %v208 = vadd.f32 0.0, %v207
    %209 = vmatprep.mubr.f32.mxu0 0.0
    %210 = vmatmul.mubr.f32.gmra.mrb[0].mxu0 %v31
    %v211 = vpop.f32.mrb[0].mxu0
    %v212 = vadd.f32 0.0, %v211
    %v213 = vpop.f32.mrb[0].mxu0
    %v214 = vadd.f32 0.0, %v213
    %215 = vmatprep.mubr.f32.mxu0 0.0
    %216 = vmatmul.mubr.f32.gmra.mrb[0].mxu0 %v32
    %v217 = vpop.f32.mrb[0].mxu0
    %v218 = vadd.f32 0.0, %v217
    %v219 = vpop.f32.mrb[0].mxu0
    %v220 = vadd.f32 0.0, %v219
    %221 = vmatprep.mubr.f32.mxu0 0.0
    %222 = vmatmul.mubr.f32.gmra.mrb[0].mxu0 %v33
    %v223 = vpop.f32.mrb[0].mxu0
    %v224 = vadd.f32 0.0, %v223
    %v225 = vpop.f32.mrb[0].mxu0
    %v226 = vadd.f32 0.0, %v225
    %227 = vmatprep.mubr.f32.mxu0 0.0
    %228 = vmatmul.mubr.f32.gmra.mrb[0].mxu0 %v34
    %v229 = vpop.f32.mrb[0].mxu0
    %v230 = vadd.f32 0.0, %v229
    %v231 = vpop.f32.mrb[0].mxu0
    %v232 = vadd.f32 0.0, %v231
    %233 = vmatprep.mubr.f32.mxu0 0.0
    %234 = vmatmul.mubr.f32.gmra.mrb[0].mxu0 %v35
    %v235 = vpop.f32.mrb[0].mxu0
    %v236 = vadd.f32 0.0, %v235
    %v237 = vpop.f32.mrb[0].mxu0
    %v238 = vadd.f32 0.0, %v237
    %239 = vmatprep.mubr.f32.mxu0 0.0
    %240 = vmatmul.mubr.f32.gmra.mrb[0].mxu0 %v36
    %v241 = vpop.f32.mrb[0].mxu0
    %v242 = vadd.f32 0.0, %v241
    %v243 = vpop.f32.mrb[0].mxu0
    %v244 = vadd.f32 0.0, %v243
    %245 = vmatprep.mubr.f32.mxu0 0.0
    %246 = vmatmul.mubr.f32.gmra.mrb[0].mxu0 %v37
    %v247 = vpop.f32.mrb[0].mxu0
    %v248 = vadd.f32 0.0, %v247
    %v249 = vpop.f32.mrb[0].mxu0
    %v250 = vadd.f32 0.0, %v249
    %251 = vmatprep.mubr.f32.mxu0 0.0
    %252 = vmatmul.mubr.f32.gmra.mrb[0].mxu0 %v38
    %v253 = vpop.f32.mrb[0].mxu0
    %v254 = vadd.f32 0.0, %v253
    %v255 = vpop.f32.mrb[0].mxu0
    %v256 = vadd.f32 0.0, %v255
    %257 = vmatprep.mubr.f32.mxu0 0.0
    %258 = vmatmul.mubr.f32.gmra.mrb[0].mxu0 %v39
    %v259 = vpop.f32.mrb[0].mxu0
    %v260 = vadd.f32 0.0, %v259
    %v261 = vpop.f32.mrb[0].mxu0
    %v262 = vadd.f32 0.0, %v261
    %263 = vmatprep.mubr.f32.mxu0 0.0
    %264 = vmatmul.mubr.f32.gmra.mrb[0].mxu0 %v40
    %v265 = vpop.f32.mrb[0].mxu0
    %v266 = vadd.f32 0.0, %v265
    %v267 = vpop.f32.mrb[0].mxu0
    %v268 = vadd.f32 0.0, %v267
    %269 = vmatprep.mubr.f32.mxu0 0.0
    %270 = vmatmul.mubr.f32.gmra.mrb[0].mxu0 %v41
    %v271 = vpop.f32.mrb[0].mxu0
    %v272 = vadd.f32 0.0, %v271
    %v273 = vpop.f32.mrb[0].mxu0
    %v274 = vadd.f32 0.0, %v273
    %275 = vmatprep.mubr.f32.mxu0 0.0
    %276 = vmatmul.mubr.f32.gmra.mrb[0].mxu0 %v42
    %v277 = vpop.f32.mrb[0].mxu0
    %v278 = vadd.f32 0.0, %v277
    %v279 = vpop.f32.mrb[0].mxu0
    %v280 = vadd.f32 0.0, %v279
    %281 = vmatprep.mubr.f32.mxu0 0.0
    %282 = vmatmul.mubr.f32.gmra.mrb[0].mxu0 %v43
    %v283 = vpop.f32.mrb[0].mxu0
    %v284 = vadd.f32 0.0, %v283
    %v285 = vpop.f32.mrb[0].mxu0
    %v286 = vadd.f32 0.0, %v285
    %287 = vmatprep.mubr.f32.mxu0 0.0
    %288 = vmatmul.mubr.f32.gmra.mrb[0].mxu0 %v44
    %v289 = vpop.f32.mrb[0].mxu0
    %v290 = vadd.f32 0.0, %v289
    %v291 = vpop.f32.mrb[0].mxu0
    %v292 = vadd.f32 0.0, %v291
    %293 = vmatprep.mubr.f32.mxu0 0.0
    %294 = vmatmul.mubr.f32.gmra.mrb[0].mxu0 %v45
    %v295 = vpop.f32.mrb[0].mxu0
    %v296 = vadd.f32 0.0, %v295
    %v297 = vpop.f32.mrb[0].mxu0
    %v298 = vadd.f32 0.0, %v297
    %299 = vmatprep.mubr.f32.mxu0 0.0
    %300 = vmatmul.mubr.f32.gmra.mrb[0].mxu0 %v46
    %v301 = vpop.f32.mrb[0].mxu0
    %v302 = vadd.f32 0.0, %v301
    %v303 = vpop.f32.mrb[0].mxu0
    %v304 = vadd.f32 0.0, %v303
    %305 = vmatprep.mubr.f32.mxu0 0.0
    %306 = vmatmul.mubr.f32.gmra.mrb[0].mxu0 %v47
    %v307 = vpop.f32.mrb[0].mxu0
    %v308 = vadd.f32 0.0, %v307
    %v309 = vpop.f32.mrb[0].mxu0
    %v310 = vadd.f32 0.0, %v309
    %311 = vmatprep.mubr.f32.mxu0 0.0
    %312 = vmatmul.mubr.f32.gmra.mrb[0].mxu0 %v48
    %v313 = vpop.f32.mrb[0].mxu0
    %v314 = vadd.f32 0.0, %v313
    %v315 = vpop.f32.mrb[0].mxu0
    %v316 = vadd.f32 0.0, %v315
    %317 = vmatprep.mubr.f32.mxu0 0.0
    %318 = vmatmul.mubr.f32.gmra.mrb[0].mxu0 %v49
    %v319 = vpop.f32.mrb[0].mxu0
    %v320 = vadd.f32 0.0, %v319
    %v321 = vpop.f32.mrb[0].mxu0
    %v322 = vadd.f32 0.0, %v321
    %323 = vmatprep.mubr.f32.mxu0 0.0
    %324 = vmatmul.mubr.f32.gmra.mrb[0].mxu0 %v50
    %v325 = vpop.f32.mrb[0].mxu0
    %v326 = vadd.f32 0.0, %v325
    %v327 = vpop.f32.mrb[0].mxu0
    %v328 = vadd.f32 0.0, %v327
    %329 = vmatprep.mubr.f32.mxu0 0.0
    %330 = vmatmul.mubr.f32.gmra.mrb[0].mxu0 %v51
    %v331 = vpop.f32.mrb[0].mxu0
    %v332 = vadd.f32 0.0, %v331
    %v333 = vpop.f32.mrb[0].mxu0
    %v334 = vadd.f32 0.0, %v333
    %335 = vmatprep.mubr.f32.mxu0 0.0
    %336 = vmatmul.mubr.f32.gmra.mrb[0].mxu0 %v52
    %v337 = vpop.f32.mrb[0].mxu0
    %v338 = vadd.f32 0.0, %v337
    %v339 = vpop.f32.mrb[0].mxu0
    %v340 = vadd.f32 0.0, %v339
    %341 = vdwg.mxu0
    %v342 = vld [vmem:[%s2] sm:$0xff]
    %v343 = vld [vmem:[%s2 + $0x8] sm:$0xff]
    %v344 = vld [vmem:[%s2 + $0x10] sm:$0xff]
    %v345 = vld [vmem:[%s2 + $0x18] sm:$0xff]
    %v346 = vld [vmem:[%s2 + $0x20] sm:$0xff]
    %v347 = vld [vmem:[%s2 + $0x28] sm:$0xff]
    %v348 = vld [vmem:[%s2 + $0x30] sm:$0xff]
    %v349 = vld [vmem:[%s2 + $0x38] sm:$0xff]
    %v350 = vld [vmem:[%s2 + $0x40] sm:$0xff]
    %v351 = vld [vmem:[%s2 + $0x48] sm:$0xff]
    %v352 = vld [vmem:[%s2 + $0x50] sm:$0xff]
    %v353 = vld [vmem:[%s2 + $0x58] sm:$0xff]
    %v354 = vld [vmem:[%s2 + $0x60] sm:$0xff]
    %v355 = vld [vmem:[%s2 + $0x68] sm:$0xff]
    %v356 = vld [vmem:[%s2 + $0x70] sm:$0xff]
    %v357 = vld [vmem:[%s2 + $0x78] sm:$0xff]
    %v358 = vmul.f32 %v152, %v152
    %v359 = vmul.f32 %v158, %v158
    %v360 = vmul.f32 %v164, %v164
    %v361 = vmul.f32 %v170, %v170
    %v362 = vmul.f32 %v176, %v176
    %v363 = vmul.f32 %v182, %v182
    %v364 = vmul.f32 %v188, %v188
    %v365 = vmul.f32 %v194, %v194
    %v366 = vmul.f32 %v200, %v200
    %v367 = vmul.f32 %v206, %v206
    %v368 = vmul.f32 %v212, %v212
    %v369 = vmul.f32 %v218, %v218
    %v370 = vmul.f32 %v224, %v224
    %v371 = vmul.f32 %v230, %v230
    %v372 = vmul.f32 %v236, %v236
    %v373 = vmul.f32 %v242, %v242
    %v374 = vmul.f32 %v154, %v154
    %v375 = vmul.f32 %v160, %v160
    %v376 = vmul.f32 %v166, %v166
    %v377 = vmul.f32 %v172, %v172
    %v378 = vmul.f32 %v178, %v178
    %v379 = vmul.f32 %v184, %v184
    %v380 = vmul.f32 %v190, %v190
    %v381 = vmul.f32 %v196, %v196
    %v382 = vmul.f32 %v202, %v202
    %v383 = vmul.f32 %v208, %v208
    %v384 = vmul.f32 %v214, %v214
    %v385 = vmul.f32 %v220, %v220
    %v386 = vmul.f32 %v226, %v226
    %v387 = vmul.f32 %v232, %v232
    %v388 = vmul.f32 %v238, %v238
    %v389 = vmul.f32 %v244, %v244
    %v390 = vadd.f32 %v358, %v374
    %v391 = vadd.f32 %v359, %v375
    %v392 = vadd.f32 %v360, %v376
    %v393 = vadd.f32 %v361, %v377
    %v394 = vadd.f32 %v362, %v378
    %v395 = vadd.f32 %v363, %v379
    %v396 = vadd.f32 %v364, %v380
    %v397 = vadd.f32 %v365, %v381
    %v398 = vadd.f32 %v366, %v382
    %v399 = vadd.f32 %v367, %v383
    %v400 = vadd.f32 %v368, %v384
    %v401 = vadd.f32 %v369, %v385
    %v402 = vadd.f32 %v370, %v386
    %v403 = vadd.f32 %v371, %v387
    %v404 = vadd.f32 %v372, %v388
    %v405 = vadd.f32 %v373, %v389
    %v406 = vrsqrt.pop %v390
    %v407 = vmul.f32 %v390, %v406
    %vm408 = vcmp.eq.f32.partialorder %v390, inf
    %v409 = vsel %vm408, %v390, %v407
    %vm410 = vcmp.eq.f32.partialorder %v390, 0.0
    %v411 = vand.u32 %v390, 2147483648
    %v412 = vsel %vm410, %v411, %v409
    %v413 = vrsqrt.pop %v391
    %v414 = vmul.f32 %v391, %v413
    %vm415 = vcmp.eq.f32.partialorder %v391, inf
    %v416 = vsel %vm415, %v391, %v414
    %vm417 = vcmp.eq.f32.partialorder %v391, 0.0
    %v418 = vand.u32 %v391, 2147483648
    %v419 = vsel %vm417, %v418, %v416
    %v420 = vrsqrt.pop %v392
    %v421 = vmul.f32 %v392, %v420
    %vm422 = vcmp.eq.f32.partialorder %v392, inf
    %v423 = vsel %vm422, %v392, %v421
    %vm424 = vcmp.eq.f32.partialorder %v392, 0.0
    %v425 = vand.u32 %v392, 2147483648
    %v426 = vsel %vm424, %v425, %v423
    %v427 = vrsqrt.pop %v393
    %v428 = vmul.f32 %v393, %v427
    %vm429 = vcmp.eq.f32.partialorder %v393, inf
    %v430 = vsel %vm429, %v393, %v428
    %vm431 = vcmp.eq.f32.partialorder %v393, 0.0
    %v432 = vand.u32 %v393, 2147483648
    %v433 = vsel %vm431, %v432, %v430
    %v434 = vrsqrt.pop %v394
    %v435 = vmul.f32 %v394, %v434
    %vm436 = vcmp.eq.f32.partialorder %v394, inf
    %v437 = vsel %vm436, %v394, %v435
    %vm438 = vcmp.eq.f32.partialorder %v394, 0.0
    %v439 = vand.u32 %v394, 2147483648
    %v440 = vsel %vm438, %v439, %v437
    %v441 = vrsqrt.pop %v395
    %v442 = vmul.f32 %v395, %v441
    %vm443 = vcmp.eq.f32.partialorder %v395, inf
    %v444 = vsel %vm443, %v395, %v442
    %vm445 = vcmp.eq.f32.partialorder %v395, 0.0
    %v446 = vand.u32 %v395, 2147483648
    %v447 = vsel %vm445, %v446, %v444
    %v448 = vrsqrt.pop %v396
    %v449 = vmul.f32 %v396, %v448
    %vm450 = vcmp.eq.f32.partialorder %v396, inf
    %v451 = vsel %vm450, %v396, %v449
    %vm452 = vcmp.eq.f32.partialorder %v396, 0.0
    %v453 = vand.u32 %v396, 2147483648
    %v454 = vsel %vm452, %v453, %v451
    %v455 = vrsqrt.pop %v397
    %v456 = vmul.f32 %v397, %v455
    %vm457 = vcmp.eq.f32.partialorder %v397, inf
    %v458 = vsel %vm457, %v397, %v456
    %vm459 = vcmp.eq.f32.partialorder %v397, 0.0
    %v460 = vand.u32 %v397, 2147483648
    %v461 = vsel %vm459, %v460, %v458
    %v462 = vrsqrt.pop %v398
    %v463 = vmul.f32 %v398, %v462
    %vm464 = vcmp.eq.f32.partialorder %v398, inf
    %v465 = vsel %vm464, %v398, %v463
    %vm466 = vcmp.eq.f32.partialorder %v398, 0.0
    %v467 = vand.u32 %v398, 2147483648
    %v468 = vsel %vm466, %v467, %v465
    %v469 = vrsqrt.pop %v399
    %v470 = vmul.f32 %v399, %v469
    %vm471 = vcmp.eq.f32.partialorder %v399, inf
    %v472 = vsel %vm471, %v399, %v470
    %vm473 = vcmp.eq.f32.partialorder %v399, 0.0
    %v474 = vand.u32 %v399, 2147483648
    %v475 = vsel %vm473, %v474, %v472
    %v476 = vrsqrt.pop %v400
    %v477 = vmul.f32 %v400, %v476
    %vm478 = vcmp.eq.f32.partialorder %v400, inf
    %v479 = vsel %vm478, %v400, %v477
    %vm480 = vcmp.eq.f32.partialorder %v400, 0.0
    %v481 = vand.u32 %v400, 2147483648
    %v482 = vsel %vm480, %v481, %v479
    %v483 = vrsqrt.pop %v401
    %v484 = vmul.f32 %v401, %v483
    %vm485 = vcmp.eq.f32.partialorder %v401, inf
    %v486 = vsel %vm485, %v401, %v484
    %vm487 = vcmp.eq.f32.partialorder %v401, 0.0
    %v488 = vand.u32 %v401, 2147483648
    %v489 = vsel %vm487, %v488, %v486
    %v490 = vrsqrt.pop %v402
    %v491 = vmul.f32 %v402, %v490
    %vm492 = vcmp.eq.f32.partialorder %v402, inf
    %v493 = vsel %vm492, %v402, %v491
    %vm494 = vcmp.eq.f32.partialorder %v402, 0.0
    %v495 = vand.u32 %v402, 2147483648
    %v496 = vsel %vm494, %v495, %v493
    %v497 = vrsqrt.pop %v403
    %v498 = vmul.f32 %v403, %v497
    %vm499 = vcmp.eq.f32.partialorder %v403, inf
    %v500 = vsel %vm499, %v403, %v498
    %vm501 = vcmp.eq.f32.partialorder %v403, 0.0
    %v502 = vand.u32 %v403, 2147483648
    %v503 = vsel %vm501, %v502, %v500
    %v504 = vrsqrt.pop %v404
    %v505 = vmul.f32 %v404, %v504
    %vm506 = vcmp.eq.f32.partialorder %v404, inf
    %v507 = vsel %vm506, %v404, %v505
    %vm508 = vcmp.eq.f32.partialorder %v404, 0.0
    %v509 = vand.u32 %v404, 2147483648
    %v510 = vsel %vm508, %v509, %v507
    %v511 = vrsqrt.pop %v405
    %v512 = vmul.f32 %v405, %v511
    %vm513 = vcmp.eq.f32.partialorder %v405, inf
    %v514 = vsel %vm513, %v405, %v512
    %vm515 = vcmp.eq.f32.partialorder %v405, 0.0
    %v516 = vand.u32 %v405, 2147483648
    %v517 = vsel %vm515, %v516, %v514
    %v518 = vmul.f32 %v248, %v248
    %v519 = vmul.f32 %v254, %v254
    %v520 = vmul.f32 %v260, %v260
    %v521 = vmul.f32 %v266, %v266
    %v522 = vmul.f32 %v272, %v272
    %v523 = vmul.f32 %v278, %v278
    %v524 = vmul.f32 %v284, %v284
    %v525 = vmul.f32 %v290, %v290
    %v526 = vmul.f32 %v296, %v296
    %v527 = vmul.f32 %v302, %v302
    %v528 = vmul.f32 %v308, %v308
    %v529 = vmul.f32 %v314, %v314
    %v530 = vmul.f32 %v320, %v320
    %v531 = vmul.f32 %v326, %v326
    %v532 = vmul.f32 %v332, %v332
    %v533 = vmul.f32 %v338, %v338
    %v534 = vmul.f32 %v250, %v250
    %v535 = vmul.f32 %v256, %v256
    %v536 = vmul.f32 %v262, %v262
    %v537 = vmul.f32 %v268, %v268
    %v538 = vmul.f32 %v274, %v274
    %v539 = vmul.f32 %v280, %v280
    %v540 = vmul.f32 %v286, %v286
    %v541 = vmul.f32 %v292, %v292
    %v542 = vmul.f32 %v298, %v298
    %v543 = vmul.f32 %v304, %v304
    %v544 = vmul.f32 %v310, %v310
    %v545 = vmul.f32 %v316, %v316
    %v546 = vmul.f32 %v322, %v322
    %v547 = vmul.f32 %v328, %v328
    %v548 = vmul.f32 %v334, %v334
    %v549 = vmul.f32 %v340, %v340
    %v550 = vadd.f32 %v518, %v534
    %v551 = vadd.f32 %v519, %v535
    %v552 = vadd.f32 %v520, %v536
    %v553 = vadd.f32 %v521, %v537
    %v554 = vadd.f32 %v522, %v538
    %v555 = vadd.f32 %v523, %v539
    %v556 = vadd.f32 %v524, %v540
    %v557 = vadd.f32 %v525, %v541
    %v558 = vadd.f32 %v526, %v542
    %v559 = vadd.f32 %v527, %v543
    %v560 = vadd.f32 %v528, %v544
    %v561 = vadd.f32 %v529, %v545
    %v562 = vadd.f32 %v530, %v546
    %v563 = vadd.f32 %v531, %v547
    %v564 = vadd.f32 %v532, %v548
    %v565 = vadd.f32 %v533, %v549
    %v566 = vrsqrt.pop %v550
    %v567 = vmul.f32 %v550, %v566
    %vm568 = vcmp.eq.f32.partialorder %v550, inf
    %v569 = vsel %vm568, %v550, %v567
    %vm570 = vcmp.eq.f32.partialorder %v550, 0.0
    %v571 = vand.u32 %v550, 2147483648
    %v572 = vsel %vm570, %v571, %v569
    %v573 = vrsqrt.pop %v551
    %v574 = vmul.f32 %v551, %v573
    %vm575 = vcmp.eq.f32.partialorder %v551, inf
    %v576 = vsel %vm575, %v551, %v574
    %vm577 = vcmp.eq.f32.partialorder %v551, 0.0
    %v578 = vand.u32 %v551, 2147483648
    %v579 = vsel %vm577, %v578, %v576
    %v580 = vrsqrt.pop %v552
    %v581 = vmul.f32 %v552, %v580
    %vm582 = vcmp.eq.f32.partialorder %v552, inf
    %v583 = vsel %vm582, %v552, %v581
    %vm584 = vcmp.eq.f32.partialorder %v552, 0.0
    %v585 = vand.u32 %v552, 2147483648
    %v586 = vsel %vm584, %v585, %v583
    %v587 = vrsqrt.pop %v553
    %v588 = vmul.f32 %v553, %v587
    %vm589 = vcmp.eq.f32.partialorder %v553, inf
    %v590 = vsel %vm589, %v553, %v588
    %vm591 = vcmp.eq.f32.partialorder %v553, 0.0
    %v592 = vand.u32 %v553, 2147483648
    %v593 = vsel %vm591, %v592, %v590
    %v594 = vrsqrt.pop %v554
    %v595 = vmul.f32 %v554, %v594
    %vm596 = vcmp.eq.f32.partialorder %v554, inf
    %v597 = vsel %vm596, %v554, %v595
    %vm598 = vcmp.eq.f32.partialorder %v554, 0.0
    %v599 = vand.u32 %v554, 2147483648
    %v600 = vsel %vm598, %v599, %v597
    %v601 = vrsqrt.pop %v555
    %v602 = vmul.f32 %v555, %v601
    %vm603 = vcmp.eq.f32.partialorder %v555, inf
    %v604 = vsel %vm603, %v555, %v602
    %vm605 = vcmp.eq.f32.partialorder %v555, 0.0
    %v606 = vand.u32 %v555, 2147483648
    %v607 = vsel %vm605, %v606, %v604
    %v608 = vrsqrt.pop %v556
    %v609 = vmul.f32 %v556, %v608
    %vm610 = vcmp.eq.f32.partialorder %v556, inf
    %v611 = vsel %vm610, %v556, %v609
    %vm612 = vcmp.eq.f32.partialorder %v556, 0.0
    %v613 = vand.u32 %v556, 2147483648
    %v614 = vsel %vm612, %v613, %v611
    %v615 = vrsqrt.pop %v557
    %v616 = vmul.f32 %v557, %v615
    %vm617 = vcmp.eq.f32.partialorder %v557, inf
    %v618 = vsel %vm617, %v557, %v616
    %vm619 = vcmp.eq.f32.partialorder %v557, 0.0
    %v620 = vand.u32 %v557, 2147483648
    %v621 = vsel %vm619, %v620, %v618
    %v622 = vrsqrt.pop %v558
    %v623 = vmul.f32 %v558, %v622
    %vm624 = vcmp.eq.f32.partialorder %v558, inf
    %v625 = vsel %vm624, %v558, %v623
    %vm626 = vcmp.eq.f32.partialorder %v558, 0.0
    %v627 = vand.u32 %v558, 2147483648
    %v628 = vsel %vm626, %v627, %v625
    %v629 = vrsqrt.pop %v559
    %v630 = vmul.f32 %v559, %v629
    %vm631 = vcmp.eq.f32.partialorder %v559, inf
    %v632 = vsel %vm631, %v559, %v630
    %vm633 = vcmp.eq.f32.partialorder %v559, 0.0
    %v634 = vand.u32 %v559, 2147483648
    %v635 = vsel %vm633, %v634, %v632
    %v636 = vrsqrt.pop %v560
    %v637 = vmul.f32 %v560, %v636
    %vm638 = vcmp.eq.f32.partialorder %v560, inf
    %v639 = vsel %vm638, %v560, %v637
    %vm640 = vcmp.eq.f32.partialorder %v560, 0.0
    %v641 = vand.u32 %v560, 2147483648
    %v642 = vsel %vm640, %v641, %v639
    %v643 = vrsqrt.pop %v561
    %v644 = vmul.f32 %v561, %v643
    %vm645 = vcmp.eq.f32.partialorder %v561, inf
    %v646 = vsel %vm645, %v561, %v644
    %vm647 = vcmp.eq.f32.partialorder %v561, 0.0
    %v648 = vand.u32 %v561, 2147483648
    %v649 = vsel %vm647, %v648, %v646
    %v650 = vrsqrt.pop %v562
    %v651 = vmul.f32 %v562, %v650
    %vm652 = vcmp.eq.f32.partialorder %v562, inf
    %v653 = vsel %vm652, %v562, %v651
    %vm654 = vcmp.eq.f32.partialorder %v562, 0.0
    %v655 = vand.u32 %v562, 2147483648
    %v656 = vsel %vm654, %v655, %v653
    %v657 = vrsqrt.pop %v563
    %v658 = vmul.f32 %v563, %v657
    %vm659 = vcmp.eq.f32.partialorder %v563, inf
    %v660 = vsel %vm659, %v563, %v658
    %vm661 = vcmp.eq.f32.partialorder %v563, 0.0
    %v662 = vand.u32 %v563, 2147483648
    %v663 = vsel %vm661, %v662, %v660
    %v664 = vrsqrt.pop %v564
    %v665 = vmul.f32 %v564, %v664
    %vm666 = vcmp.eq.f32.partialorder %v564, inf
    %v667 = vsel %vm666, %v564, %v665
    %vm668 = vcmp.eq.f32.partialorder %v564, 0.0
    %v669 = vand.u32 %v564, 2147483648
    %v670 = vsel %vm668, %v669, %v667
    %v671 = vrsqrt.pop %v565
    %v672 = vmul.f32 %v565, %v671
    %vm673 = vcmp.eq.f32.partialorder %v565, inf
    %v674 = vsel %vm673, %v565, %v672
    %vm675 = vcmp.eq.f32.partialorder %v565, 0.0
    %v676 = vand.u32 %v565, 2147483648
    %v677 = vsel %vm675, %v676, %v674
    %v678 = vsub.f32 1.0, %v342
    %v679 = vsub.f32 1.0, %v343
    %v680 = vsub.f32 1.0, %v344
    %v681 = vsub.f32 1.0, %v345
    %v682 = vsub.f32 1.0, %v346
    %v683 = vsub.f32 1.0, %v347
    %v684 = vsub.f32 1.0, %v348
    %v685 = vsub.f32 1.0, %v349
    %v686 = vsub.f32 1.0, %v350
    %v687 = vsub.f32 1.0, %v351
    %v688 = vsub.f32 1.0, %v352
    %v689 = vsub.f32 1.0, %v353
    %v690 = vsub.f32 1.0, %v354
    %v691 = vsub.f32 1.0, %v355
    %v692 = vsub.f32 1.0, %v356
    %v693 = vsub.f32 1.0, %v357
    %v694 = vmul.f32 %v678, %v412
    %v695 = vmul.f32 %v679, %v419
    %v696 = vmul.f32 %v680, %v426
    %v697 = vmul.f32 %v681, %v433
    %v698 = vmul.f32 %v682, %v440
    %v699 = vmul.f32 %v683, %v447
    %v700 = vmul.f32 %v684, %v454
    %v701 = vmul.f32 %v685, %v461
    %v702 = vmul.f32 %v686, %v468
    %v703 = vmul.f32 %v687, %v475
    %v704 = vmul.f32 %v688, %v482
    %v705 = vmul.f32 %v689, %v489
    %v706 = vmul.f32 %v690, %v496
    %v707 = vmul.f32 %v691, %v503
    %v708 = vmul.f32 %v692, %v510
    %v709 = vmul.f32 %v693, %v517
    %v710 = vmul.f32 %v342, %v572
    %v711 = vmul.f32 %v343, %v579
    %v712 = vmul.f32 %v344, %v586
    %v713 = vmul.f32 %v345, %v593
    %v714 = vmul.f32 %v346, %v600
    %v715 = vmul.f32 %v347, %v607
    %v716 = vmul.f32 %v348, %v614
    %v717 = vmul.f32 %v349, %v621
    %v718 = vmul.f32 %v350, %v628
    %v719 = vmul.f32 %v351, %v635
    %v720 = vmul.f32 %v352, %v642
    %v721 = vmul.f32 %v353, %v649
    %v722 = vmul.f32 %v354, %v656
    %v723 = vmul.f32 %v355, %v663
    %v724 = vmul.f32 %v356, %v670
    %v725 = vmul.f32 %v357, %v677
    %v726 = vadd.f32 %v694, %v710
    %v727 = vadd.f32 %v695, %v711
    %v728 = vadd.f32 %v696, %v712
    %v729 = vadd.f32 %v697, %v713
    %v730 = vadd.f32 %v698, %v714
    %v731 = vadd.f32 %v699, %v715
    %v732 = vadd.f32 %v700, %v716
    %v733 = vadd.f32 %v701, %v717
    %v734 = vadd.f32 %v702, %v718
    %v735 = vadd.f32 %v703, %v719
    %v736 = vadd.f32 %v704, %v720
    %v737 = vadd.f32 %v705, %v721
    %v738 = vadd.f32 %v706, %v722
    %v739 = vadd.f32 %v707, %v723
    %v740 = vadd.f32 %v708, %v724
    %v741 = vadd.f32 %v709, %v725
    %vm742 = vcmp.gt.f32.partialorder %v412, 1e-12
    %vm743 = vcmp.gt.f32.partialorder %v419, 1e-12
    %vm744 = vcmp.gt.f32.partialorder %v426, 1e-12
    %vm745 = vcmp.gt.f32.partialorder %v433, 1e-12
    %vm746 = vcmp.gt.f32.partialorder %v440, 1e-12
    %vm747 = vcmp.gt.f32.partialorder %v447, 1e-12
    %vm748 = vcmp.gt.f32.partialorder %v454, 1e-12
    %vm749 = vcmp.gt.f32.partialorder %v461, 1e-12
    %vm750 = vcmp.gt.f32.partialorder %v468, 1e-12
    %vm751 = vcmp.gt.f32.partialorder %v475, 1e-12
    %vm752 = vcmp.gt.f32.partialorder %v482, 1e-12
    %vm753 = vcmp.gt.f32.partialorder %v489, 1e-12
    %vm754 = vcmp.gt.f32.partialorder %v496, 1e-12
    %vm755 = vcmp.gt.f32.partialorder %v503, 1e-12
    %vm756 = vcmp.gt.f32.partialorder %v510, 1e-12
    %vm757 = vcmp.gt.f32.partialorder %v517, 1e-12
    %vm758 = vcmp.gt.f32.partialorder %v572, 1e-12
    %vm759 = vcmp.gt.f32.partialorder %v579, 1e-12
    %vm760 = vcmp.gt.f32.partialorder %v586, 1e-12
    %vm761 = vcmp.gt.f32.partialorder %v593, 1e-12
    %vm762 = vcmp.gt.f32.partialorder %v600, 1e-12
    %vm763 = vcmp.gt.f32.partialorder %v607, 1e-12
    %vm764 = vcmp.gt.f32.partialorder %v614, 1e-12
    %vm765 = vcmp.gt.f32.partialorder %v621, 1e-12
    %vm766 = vcmp.gt.f32.partialorder %v628, 1e-12
    %vm767 = vcmp.gt.f32.partialorder %v635, 1e-12
    %vm768 = vcmp.gt.f32.partialorder %v642, 1e-12
    %vm769 = vcmp.gt.f32.partialorder %v649, 1e-12
    %vm770 = vcmp.gt.f32.partialorder %v656, 1e-12
    %vm771 = vcmp.gt.f32.partialorder %v663, 1e-12
    %vm772 = vcmp.gt.f32.partialorder %v670, 1e-12
    %vm773 = vcmp.gt.f32.partialorder %v677, 1e-12
    %vm774 = vmand %vm742, %vm758
    %vm775 = vmand %vm743, %vm759
    %vm776 = vmand %vm744, %vm760
    %vm777 = vmand %vm745, %vm761
    %vm778 = vmand %vm746, %vm762
    %vm779 = vmand %vm747, %vm763
    %vm780 = vmand %vm748, %vm764
    %vm781 = vmand %vm749, %vm765
    %vm782 = vmand %vm750, %vm766
    %vm783 = vmand %vm751, %vm767
    %vm784 = vmand %vm752, %vm768
    %vm785 = vmand %vm753, %vm769
    %vm786 = vmand %vm754, %vm770
    %vm787 = vmand %vm755, %vm771
    %vm788 = vmand %vm756, %vm772
    %vm789 = vmand %vm757, %vm773
    %v790 = vmul.f32 %v248, %v152
    %v791 = vmul.f32 %v254, %v158
    %v792 = vmul.f32 %v260, %v164
    %v793 = vmul.f32 %v266, %v170
    %v794 = vmul.f32 %v272, %v176
    %v795 = vmul.f32 %v278, %v182
    %v796 = vmul.f32 %v284, %v188
    %v797 = vmul.f32 %v290, %v194
    %v798 = vmul.f32 %v296, %v200
    %v799 = vmul.f32 %v302, %v206
    %v800 = vmul.f32 %v308, %v212
    %v801 = vmul.f32 %v314, %v218
    %v802 = vmul.f32 %v320, %v224
    %v803 = vmul.f32 %v326, %v230
    %v804 = vmul.f32 %v332, %v236
    %v805 = vmul.f32 %v338, %v242
    %v806 = vmul.f32 %v250, %v154
    %v807 = vmul.f32 %v256, %v160
    %v808 = vmul.f32 %v262, %v166
    %v809 = vmul.f32 %v268, %v172
    %v810 = vmul.f32 %v274, %v178
    %v811 = vmul.f32 %v280, %v184
    %v812 = vmul.f32 %v286, %v190
    %v813 = vmul.f32 %v292, %v196
    %v814 = vmul.f32 %v298, %v202
    %v815 = vmul.f32 %v304, %v208
    %v816 = vmul.f32 %v310, %v214
    %v817 = vmul.f32 %v316, %v220
    %v818 = vmul.f32 %v322, %v226
    %v819 = vmul.f32 %v328, %v232
    %v820 = vmul.f32 %v334, %v238
    %v821 = vmul.f32 %v340, %v244
    %v822 = vadd.f32 %v790, %v806
    %v823 = vadd.f32 %v791, %v807
    %v824 = vadd.f32 %v792, %v808
    %v825 = vadd.f32 %v793, %v809
    %v826 = vadd.f32 %v794, %v810
    %v827 = vadd.f32 %v795, %v811
    %v828 = vadd.f32 %v796, %v812
    %v829 = vadd.f32 %v797, %v813
    %v830 = vadd.f32 %v798, %v814
    %v831 = vadd.f32 %v799, %v815
    %v832 = vadd.f32 %v800, %v816
    %v833 = vadd.f32 %v801, %v817
    %v834 = vadd.f32 %v802, %v818
    %v835 = vadd.f32 %v803, %v819
    %v836 = vadd.f32 %v804, %v820
    %v837 = vadd.f32 %v805, %v821
    %v838 = vmul.f32 %v250, %v152
    %v839 = vmul.f32 %v256, %v158
    %v840 = vmul.f32 %v262, %v164
    %v841 = vmul.f32 %v268, %v170
    %v842 = vmul.f32 %v274, %v176
    %v843 = vmul.f32 %v280, %v182
    %v844 = vmul.f32 %v286, %v188
    %v845 = vmul.f32 %v292, %v194
    %v846 = vmul.f32 %v298, %v200
    %v847 = vmul.f32 %v304, %v206
    %v848 = vmul.f32 %v310, %v212
    %v849 = vmul.f32 %v316, %v218
    %v850 = vmul.f32 %v322, %v224
    %v851 = vmul.f32 %v328, %v230
    %v852 = vmul.f32 %v334, %v236
    %v853 = vmul.f32 %v340, %v242
    %v854 = vmul.f32 %v248, %v154
    %v855 = vmul.f32 %v254, %v160
    %v856 = vmul.f32 %v260, %v166
    %v857 = vmul.f32 %v266, %v172
    %v858 = vmul.f32 %v272, %v178
    %v859 = vmul.f32 %v278, %v184
    %v860 = vmul.f32 %v284, %v190
    %v861 = vmul.f32 %v290, %v196
    %v862 = vmul.f32 %v296, %v202
    %v863 = vmul.f32 %v302, %v208
    %v864 = vmul.f32 %v308, %v214
    %v865 = vmul.f32 %v314, %v220
    %v866 = vmul.f32 %v320, %v226
    %v867 = vmul.f32 %v326, %v232
    %v868 = vmul.f32 %v332, %v238
    %v869 = vmul.f32 %v338, %v244
    %v870 = vsub.f32 %v838, %v854
    %v871 = vsub.f32 %v839, %v855
    %v872 = vsub.f32 %v840, %v856
    %v873 = vsub.f32 %v841, %v857
    %v874 = vsub.f32 %v842, %v858
    %v875 = vsub.f32 %v843, %v859
    %v876 = vsub.f32 %v844, %v860
    %v877 = vsub.f32 %v845, %v861
    %v878 = vsub.f32 %v846, %v862
    %v879 = vsub.f32 %v847, %v863
    %v880 = vsub.f32 %v848, %v864
    %v881 = vsub.f32 %v849, %v865
    %v882 = vsub.f32 %v850, %v866
    %v883 = vsub.f32 %v851, %v867
    %v884 = vsub.f32 %v852, %v868
    %v885 = vsub.f32 %v853, %v869
    %v886 = vmul.f32 %v412, %v572
    %v887 = vmul.f32 %v419, %v579
    %v888 = vmul.f32 %v426, %v586
    %v889 = vmul.f32 %v433, %v593
    %v890 = vmul.f32 %v440, %v600
    %v891 = vmul.f32 %v447, %v607
    %v892 = vmul.f32 %v454, %v614
    %v893 = vmul.f32 %v461, %v621
    %v894 = vmul.f32 %v468, %v628
    %v895 = vmul.f32 %v475, %v635
    %v896 = vmul.f32 %v482, %v642
    %v897 = vmul.f32 %v489, %v649
    %v898 = vmul.f32 %v496, %v656
    %v899 = vmul.f32 %v503, %v663
    %v900 = vmul.f32 %v510, %v670
    %v901 = vmul.f32 %v517, %v677
    %v902 = vsel %vm774, %v886, 1.0
    %v903 = vsel %vm775, %v887, 1.0
    %v904 = vsel %vm776, %v888, 1.0
    %v905 = vsel %vm777, %v889, 1.0
    %v906 = vsel %vm778, %v890, 1.0
    %v907 = vsel %vm779, %v891, 1.0
    %v908 = vsel %vm780, %v892, 1.0
    %v909 = vsel %vm781, %v893, 1.0
    %v910 = vsel %vm782, %v894, 1.0
    %v911 = vsel %vm783, %v895, 1.0
    %v912 = vsel %vm784, %v896, 1.0
    %v913 = vsel %vm785, %v897, 1.0
    %v914 = vsel %vm786, %v898, 1.0
    %v915 = vsel %vm787, %v899, 1.0
    %v916 = vsel %vm788, %v900, 1.0
    %v917 = vsel %vm789, %v901, 1.0
    %v918 = vrcp.pop %v902
    %v919 = vrcp.pop %v903
    %v920 = vrcp.pop %v904
    %v921 = vrcp.pop %v905
    %v922 = vrcp.pop %v906
    %v923 = vrcp.pop %v907
    %v924 = vrcp.pop %v908
    %v925 = vrcp.pop %v909
    %v926 = vrcp.pop %v910
    %v927 = vrcp.pop %v911
    %v928 = vrcp.pop %v912
    %v929 = vrcp.pop %v913
    %v930 = vrcp.pop %v914
    %v931 = vrcp.pop %v915
    %v932 = vrcp.pop %v916
    %v933 = vrcp.pop %v917
    %v934 = vsel %vm758, %v572, 1.0
    %v935 = vsel %vm759, %v579, 1.0
    %v936 = vsel %vm760, %v586, 1.0
    %v937 = vsel %vm761, %v593, 1.0
    %v938 = vsel %vm762, %v600, 1.0
    %v939 = vsel %vm763, %v607, 1.0
    %v940 = vsel %vm764, %v614, 1.0
    %v941 = vsel %vm765, %v621, 1.0
    %v942 = vsel %vm766, %v628, 1.0
    %v943 = vsel %vm767, %v635, 1.0
    %v944 = vsel %vm768, %v642, 1.0
    %v945 = vsel %vm769, %v649, 1.0
    %v946 = vsel %vm770, %v656, 1.0
    %v947 = vsel %vm771, %v663, 1.0
    %v948 = vsel %vm772, %v670, 1.0
    %v949 = vsel %vm773, %v677, 1.0
    %v950 = vrcp.pop %v934
    %v951 = vrcp.pop %v935
    %v952 = vrcp.pop %v936
    %v953 = vrcp.pop %v937
    %v954 = vrcp.pop %v938
    %v955 = vrcp.pop %v939
    %v956 = vrcp.pop %v940
    %v957 = vrcp.pop %v941
    %v958 = vrcp.pop %v942
    %v959 = vrcp.pop %v943
    %v960 = vrcp.pop %v944
    %v961 = vrcp.pop %v945
    %v962 = vrcp.pop %v946
    %v963 = vrcp.pop %v947
    %v964 = vrcp.pop %v948
    %v965 = vrcp.pop %v949
    %v966 = vsel %vm742, %v412, 1.0
    %v967 = vsel %vm743, %v419, 1.0
    %v968 = vsel %vm744, %v426, 1.0
    %v969 = vsel %vm745, %v433, 1.0
    %v970 = vsel %vm746, %v440, 1.0
    %v971 = vsel %vm747, %v447, 1.0
    %v972 = vsel %vm748, %v454, 1.0
    %v973 = vsel %vm749, %v461, 1.0
    %v974 = vsel %vm750, %v468, 1.0
    %v975 = vsel %vm751, %v475, 1.0
    %v976 = vsel %vm752, %v482, 1.0
    %v977 = vsel %vm753, %v489, 1.0
    %v978 = vsel %vm754, %v496, 1.0
    %v979 = vsel %vm755, %v503, 1.0
    %v980 = vsel %vm756, %v510, 1.0
    %v981 = vsel %vm757, %v517, 1.0
    %v982 = vrcp.pop %v966
    %v983 = vrcp.pop %v967
    %v984 = vrcp.pop %v968
    %v985 = vrcp.pop %v969
    %v986 = vrcp.pop %v970
    %v987 = vrcp.pop %v971
    %v988 = vrcp.pop %v972
    %v989 = vrcp.pop %v973
    %v990 = vrcp.pop %v974
    %v991 = vrcp.pop %v975
    %v992 = vrcp.pop %v976
    %v993 = vrcp.pop %v977
    %v994 = vrcp.pop %v978
    %v995 = vrcp.pop %v979
    %v996 = vrcp.pop %v980
    %v997 = vrcp.pop %v981
    %v998 = vmul.f32 %v822, %v918
    %v999 = vmul.f32 %v823, %v919
    %v1000 = vmul.f32 %v824, %v920
    %v1001 = vmul.f32 %v825, %v921
    %v1002 = vmul.f32 %v826, %v922
    %v1003 = vmul.f32 %v827, %v923
    %v1004 = vmul.f32 %v828, %v924
    %v1005 = vmul.f32 %v829, %v925
    %v1006 = vmul.f32 %v830, %v926
    %v1007 = vmul.f32 %v831, %v927
    %v1008 = vmul.f32 %v832, %v928
    %v1009 = vmul.f32 %v833, %v929
    %v1010 = vmul.f32 %v834, %v930
    %v1011 = vmul.f32 %v835, %v931
    %v1012 = vmul.f32 %v836, %v932
    %v1013 = vmul.f32 %v837, %v933
    %v1014 = vmul.f32 %v248, %v950
    %v1015 = vmul.f32 %v254, %v951
    %v1016 = vmul.f32 %v260, %v952
    %v1017 = vmul.f32 %v266, %v953
    %v1018 = vmul.f32 %v272, %v954
    %v1019 = vmul.f32 %v278, %v955
    %v1020 = vmul.f32 %v284, %v956
    %v1021 = vmul.f32 %v290, %v957
    %v1022 = vmul.f32 %v296, %v958
    %v1023 = vmul.f32 %v302, %v959
    %v1024 = vmul.f32 %v308, %v960
    %v1025 = vmul.f32 %v314, %v961
    %v1026 = vmul.f32 %v320, %v962
    %v1027 = vmul.f32 %v326, %v963
    %v1028 = vmul.f32 %v332, %v964
    %v1029 = vmul.f32 %v338, %v965
    %v1030 = vmul.f32 %v152, %v982
    %v1031 = vmul.f32 %v158, %v983
    %v1032 = vmul.f32 %v164, %v984
    %v1033 = vmul.f32 %v170, %v985
    %v1034 = vmul.f32 %v176, %v986
    %v1035 = vmul.f32 %v182, %v987
    %v1036 = vmul.f32 %v188, %v988
    %v1037 = vmul.f32 %v194, %v989
    %v1038 = vmul.f32 %v200, %v990
    %v1039 = vmul.f32 %v206, %v991
    %v1040 = vmul.f32 %v212, %v992
    %v1041 = vmul.f32 %v218, %v993
    %v1042 = vmul.f32 %v224, %v994
    %v1043 = vmul.f32 %v230, %v995
    %v1044 = vmul.f32 %v236, %v996
    %v1045 = vmul.f32 %v242, %v997
    %v1046 = vsel %vm742, %v1030, 1.0
    %v1047 = vsel %vm743, %v1031, 1.0
    %v1048 = vsel %vm744, %v1032, 1.0
    %v1049 = vsel %vm745, %v1033, 1.0
    %v1050 = vsel %vm746, %v1034, 1.0
    %v1051 = vsel %vm747, %v1035, 1.0
    %v1052 = vsel %vm748, %v1036, 1.0
    %v1053 = vsel %vm749, %v1037, 1.0
    %v1054 = vsel %vm750, %v1038, 1.0
    %v1055 = vsel %vm751, %v1039, 1.0
    %v1056 = vsel %vm752, %v1040, 1.0
    %v1057 = vsel %vm753, %v1041, 1.0
    %v1058 = vsel %vm754, %v1042, 1.0
    %v1059 = vsel %vm755, %v1043, 1.0
    %v1060 = vsel %vm756, %v1044, 1.0
    %v1061 = vsel %vm757, %v1045, 1.0
    %v1062 = vsel %vm758, %v1014, %v1046
    %v1063 = vsel %vm759, %v1015, %v1047
    %v1064 = vsel %vm760, %v1016, %v1048
    %v1065 = vsel %vm761, %v1017, %v1049
    %v1066 = vsel %vm762, %v1018, %v1050
    %v1067 = vsel %vm763, %v1019, %v1051
    %v1068 = vsel %vm764, %v1020, %v1052
    %v1069 = vsel %vm765, %v1021, %v1053
    %v1070 = vsel %vm766, %v1022, %v1054
    %v1071 = vsel %vm767, %v1023, %v1055
    %v1072 = vsel %vm768, %v1024, %v1056
    %v1073 = vsel %vm769, %v1025, %v1057
    %v1074 = vsel %vm770, %v1026, %v1058
    %v1075 = vsel %vm771, %v1027, %v1059
    %v1076 = vsel %vm772, %v1028, %v1060
    %v1077 = vsel %vm773, %v1029, %v1061
    %v1078 = vsel %vm774, %v998, %v1062
    %v1079 = vsel %vm775, %v999, %v1063
    %v1080 = vsel %vm776, %v1000, %v1064
    %v1081 = vsel %vm777, %v1001, %v1065
    %v1082 = vsel %vm778, %v1002, %v1066
    %v1083 = vsel %vm779, %v1003, %v1067
    %v1084 = vsel %vm780, %v1004, %v1068
    %v1085 = vsel %vm781, %v1005, %v1069
    %v1086 = vsel %vm782, %v1006, %v1070
    %v1087 = vsel %vm783, %v1007, %v1071
    %v1088 = vsel %vm784, %v1008, %v1072
    %v1089 = vsel %vm785, %v1009, %v1073
    %v1090 = vsel %vm786, %v1010, %v1074
    %v1091 = vsel %vm787, %v1011, %v1075
    %v1092 = vsel %vm788, %v1012, %v1076
    %v1093 = vsel %vm789, %v1013, %v1077
    %v1094 = vmul.f32 %v870, %v918
    %v1095 = vmul.f32 %v871, %v919
    %v1096 = vmul.f32 %v872, %v920
    %v1097 = vmul.f32 %v873, %v921
    %v1098 = vmul.f32 %v874, %v922
    %v1099 = vmul.f32 %v875, %v923
    %v1100 = vmul.f32 %v876, %v924
    %v1101 = vmul.f32 %v877, %v925
    %v1102 = vmul.f32 %v878, %v926
    %v1103 = vmul.f32 %v879, %v927
    %v1104 = vmul.f32 %v880, %v928
    %v1105 = vmul.f32 %v881, %v929
    %v1106 = vmul.f32 %v882, %v930
    %v1107 = vmul.f32 %v883, %v931
    %v1108 = vmul.f32 %v884, %v932
    %v1109 = vmul.f32 %v885, %v933
    %v1110 = vmul.f32 %v250, %v950
    %v1111 = vmul.f32 %v256, %v951
    %v1112 = vmul.f32 %v262, %v952
    %v1113 = vmul.f32 %v268, %v953
    %v1114 = vmul.f32 %v274, %v954
    %v1115 = vmul.f32 %v280, %v955
    %v1116 = vmul.f32 %v286, %v956
    %v1117 = vmul.f32 %v292, %v957
    %v1118 = vmul.f32 %v298, %v958
    %v1119 = vmul.f32 %v304, %v959
    %v1120 = vmul.f32 %v310, %v960
    %v1121 = vmul.f32 %v316, %v961
    %v1122 = vmul.f32 %v322, %v962
    %v1123 = vmul.f32 %v328, %v963
    %v1124 = vmul.f32 %v334, %v964
    %v1125 = vmul.f32 %v340, %v965
    %v1126 = vsub.f32 0.0, %v154
    %v1127 = vsub.f32 0.0, %v160
    %v1128 = vsub.f32 0.0, %v166
    %v1129 = vsub.f32 0.0, %v172
    %v1130 = vsub.f32 0.0, %v178
    %v1131 = vsub.f32 0.0, %v184
    %v1132 = vsub.f32 0.0, %v190
    %v1133 = vsub.f32 0.0, %v196
    %v1134 = vsub.f32 0.0, %v202
    %v1135 = vsub.f32 0.0, %v208
    %v1136 = vsub.f32 0.0, %v214
    %v1137 = vsub.f32 0.0, %v220
    %v1138 = vsub.f32 0.0, %v226
    %v1139 = vsub.f32 0.0, %v232
    %v1140 = vsub.f32 0.0, %v238
    %v1141 = vsub.f32 0.0, %v244
    %v1142 = vmul.f32 %v1126, %v982
    %v1143 = vmul.f32 %v1127, %v983
    %v1144 = vmul.f32 %v1128, %v984
    %v1145 = vmul.f32 %v1129, %v985
    %v1146 = vmul.f32 %v1130, %v986
    %v1147 = vmul.f32 %v1131, %v987
    %v1148 = vmul.f32 %v1132, %v988
    %v1149 = vmul.f32 %v1133, %v989
    %v1150 = vmul.f32 %v1134, %v990
    %v1151 = vmul.f32 %v1135, %v991
    %v1152 = vmul.f32 %v1136, %v992
    %v1153 = vmul.f32 %v1137, %v993
    %v1154 = vmul.f32 %v1138, %v994
    %v1155 = vmul.f32 %v1139, %v995
    %v1156 = vmul.f32 %v1140, %v996
    %v1157 = vmul.f32 %v1141, %v997
    %v1158 = vsel %vm742, %v1142, 0.0
    %v1159 = vsel %vm743, %v1143, 0.0
    %v1160 = vsel %vm744, %v1144, 0.0
    %v1161 = vsel %vm745, %v1145, 0.0
    %v1162 = vsel %vm746, %v1146, 0.0
    %v1163 = vsel %vm747, %v1147, 0.0
    %v1164 = vsel %vm748, %v1148, 0.0
    %v1165 = vsel %vm749, %v1149, 0.0
    %v1166 = vsel %vm750, %v1150, 0.0
    %v1167 = vsel %vm751, %v1151, 0.0
    %v1168 = vsel %vm752, %v1152, 0.0
    %v1169 = vsel %vm753, %v1153, 0.0
    %v1170 = vsel %vm754, %v1154, 0.0
    %v1171 = vsel %vm755, %v1155, 0.0
    %v1172 = vsel %vm756, %v1156, 0.0
    %v1173 = vsel %vm757, %v1157, 0.0
    %v1174 = vsel %vm758, %v1110, %v1158
    %v1175 = vsel %vm759, %v1111, %v1159
    %v1176 = vsel %vm760, %v1112, %v1160
    %v1177 = vsel %vm761, %v1113, %v1161
    %v1178 = vsel %vm762, %v1114, %v1162
    %v1179 = vsel %vm763, %v1115, %v1163
    %v1180 = vsel %vm764, %v1116, %v1164
    %v1181 = vsel %vm765, %v1117, %v1165
    %v1182 = vsel %vm766, %v1118, %v1166
    %v1183 = vsel %vm767, %v1119, %v1167
    %v1184 = vsel %vm768, %v1120, %v1168
    %v1185 = vsel %vm769, %v1121, %v1169
    %v1186 = vsel %vm770, %v1122, %v1170
    %v1187 = vsel %vm771, %v1123, %v1171
    %v1188 = vsel %vm772, %v1124, %v1172
    %v1189 = vsel %vm773, %v1125, %v1173
    %v1190 = vsel %vm774, %v1094, %v1174
    %v1191 = vsel %vm775, %v1095, %v1175
    %v1192 = vsel %vm776, %v1096, %v1176
    %v1193 = vsel %vm777, %v1097, %v1177
    %v1194 = vsel %vm778, %v1098, %v1178
    %v1195 = vsel %vm779, %v1099, %v1179
    %v1196 = vsel %vm780, %v1100, %v1180
    %v1197 = vsel %vm781, %v1101, %v1181
    %v1198 = vsel %vm782, %v1102, %v1182
    %v1199 = vsel %vm783, %v1103, %v1183
    %v1200 = vsel %vm784, %v1104, %v1184
    %v1201 = vsel %vm785, %v1105, %v1185
    %v1202 = vsel %vm786, %v1106, %v1186
    %v1203 = vsel %vm787, %v1107, %v1187
    %v1204 = vsel %vm788, %v1108, %v1188
    %v1205 = vsel %vm789, %v1109, %v1189
    %v1206 = vmul.f32 %v154, %v982
    %v1207 = vsel %vm742, %v1206, 0.0
    %v1208 = vlaneseq
    %v1209 = vshrl.u32 %v1208, 7
    %v1210 = vadd.s32 %v1209, 8
    %v1211 = vadd.s32 %v1209, 16
    %v1212 = vadd.s32 %v1209, 24
    %v1213 = vadd.s32 %v1209, 32
    %v1214 = vadd.s32 %v1209, 40
    %v1215 = vadd.s32 %v1209, 48
    %v1216 = vadd.s32 %v1209, 56
    %v1217 = vadd.s32 %v1209, 64
    %v1218 = vadd.s32 %v1209, 72
    %v1219 = vadd.s32 %v1209, 80
    %v1220 = vadd.s32 %v1209, 88
    %v1221 = vadd.s32 %v1209, 96
    %v1222 = vadd.s32 %v1209, 104
    %v1223 = vadd.s32 %v1209, 112
    %v1224 = vadd.s32 %v1209, 120
    %vm1225 = vcmp.ge.s32.totalorder %v1209, 1
    %vm1226 = vcmp.ge.s32.totalorder %v1210, 1
    %vm1227 = vcmp.ge.s32.totalorder %v1211, 1
    %vm1228 = vcmp.ge.s32.totalorder %v1212, 1
    %vm1229 = vcmp.ge.s32.totalorder %v1213, 1
    %vm1230 = vcmp.ge.s32.totalorder %v1214, 1
    %vm1231 = vcmp.ge.s32.totalorder %v1215, 1
    %vm1232 = vcmp.ge.s32.totalorder %v1216, 1
    %vm1233 = vcmp.ge.s32.totalorder %v1217, 1
    %vm1234 = vcmp.ge.s32.totalorder %v1218, 1
    %vm1235 = vcmp.ge.s32.totalorder %v1219, 1
    %vm1236 = vcmp.ge.s32.totalorder %v1220, 1
    %vm1237 = vcmp.ge.s32.totalorder %v1221, 1
    %vm1238 = vcmp.ge.s32.totalorder %v1222, 1
    %vm1239 = vcmp.ge.s32.totalorder %v1223, 1
    %vm1240 = vcmp.ge.s32.totalorder %v1224, 1
    %v1241 = vrot.slane %v1078, 7
    %v1242 = vrot.slane %v1079, 7
    %v1243 = vrot.slane %v1080, 7
    %v1244 = vrot.slane %v1081, 7
    %v1245 = vrot.slane %v1082, 7
    %v1246 = vrot.slane %v1083, 7
    %v1247 = vrot.slane %v1084, 7
    %v1248 = vrot.slane %v1085, 7
    %v1249 = vrot.slane %v1086, 7
    %v1250 = vrot.slane %v1087, 7
    %v1251 = vrot.slane %v1088, 7
    %v1252 = vrot.slane %v1089, 7
    %v1253 = vrot.slane %v1090, 7
    %v1254 = vrot.slane %v1091, 7
    %v1255 = vrot.slane %v1092, 7
    %v1256 = vrot.slane %v1093, 7
    %vm1257 = vcmp.lt.s32.totalorder %v1209, 1
    %v1258 = vsel %vm1257, %v1255, %v1256
    %v1259 = vsel %vm1257, %v1254, %v1255
    %v1260 = vsel %vm1257, %v1253, %v1254
    %v1261 = vsel %vm1257, %v1252, %v1253
    %v1262 = vsel %vm1257, %v1251, %v1252
    %v1263 = vsel %vm1257, %v1250, %v1251
    %v1264 = vsel %vm1257, %v1249, %v1250
    %v1265 = vsel %vm1257, %v1248, %v1249
    %v1266 = vsel %vm1257, %v1247, %v1248
    %v1267 = vsel %vm1257, %v1246, %v1247
    %v1268 = vsel %vm1257, %v1245, %v1246
    %v1269 = vsel %vm1257, %v1244, %v1245
    %v1270 = vsel %vm1257, %v1243, %v1244
    %v1271 = vsel %vm1257, %v1242, %v1243
    %v1272 = vsel %vm1257, %v1241, %v1242
    %v1273 = vsel %vm1257, %v1256, %v1241
    %v1274 = vsel %vm1225, %v1273, 1.0
    %v1275 = vsel %vm1226, %v1272, 1.0
    %v1276 = vsel %vm1227, %v1271, 1.0
    %v1277 = vsel %vm1228, %v1270, 1.0
    %v1278 = vsel %vm1229, %v1269, 1.0
    %v1279 = vsel %vm1230, %v1268, 1.0
    %v1280 = vsel %vm1231, %v1267, 1.0
    %v1281 = vsel %vm1232, %v1266, 1.0
    %v1282 = vsel %vm1233, %v1265, 1.0
    %v1283 = vsel %vm1234, %v1264, 1.0
    %v1284 = vsel %vm1235, %v1263, 1.0
    %v1285 = vsel %vm1236, %v1262, 1.0
    %v1286 = vsel %vm1237, %v1261, 1.0
    %v1287 = vsel %vm1238, %v1260, 1.0
    %v1288 = vsel %vm1239, %v1259, 1.0
    %v1289 = vsel %vm1240, %v1258, 1.0
    %v1290 = vrot.slane %v1190, 7
    %v1291 = vrot.slane %v1191, 7
    %v1292 = vrot.slane %v1192, 7
    %v1293 = vrot.slane %v1193, 7
    %v1294 = vrot.slane %v1194, 7
    %v1295 = vrot.slane %v1195, 7
    %v1296 = vrot.slane %v1196, 7
    %v1297 = vrot.slane %v1197, 7
    %v1298 = vrot.slane %v1198, 7
    %v1299 = vrot.slane %v1199, 7
    %v1300 = vrot.slane %v1200, 7
    %v1301 = vrot.slane %v1201, 7
    %v1302 = vrot.slane %v1202, 7
    %v1303 = vrot.slane %v1203, 7
    %v1304 = vrot.slane %v1204, 7
    %v1305 = vrot.slane %v1205, 7
    %v1306 = vsel %vm1257, %v1304, %v1305
    %v1307 = vsel %vm1257, %v1303, %v1304
    %v1308 = vsel %vm1257, %v1302, %v1303
    %v1309 = vsel %vm1257, %v1301, %v1302
    %v1310 = vsel %vm1257, %v1300, %v1301
    %v1311 = vsel %vm1257, %v1299, %v1300
    %v1312 = vsel %vm1257, %v1298, %v1299
    %v1313 = vsel %vm1257, %v1297, %v1298
    %v1314 = vsel %vm1257, %v1296, %v1297
    %v1315 = vsel %vm1257, %v1295, %v1296
    %v1316 = vsel %vm1257, %v1294, %v1295
    %v1317 = vsel %vm1257, %v1293, %v1294
    %v1318 = vsel %vm1257, %v1292, %v1293
    %v1319 = vsel %vm1257, %v1291, %v1292
    %v1320 = vsel %vm1257, %v1290, %v1291
    %v1321 = vsel %vm1257, %v1305, %v1290
    %v1322 = vsel %vm1225, %v1321, 0.0
    %v1323 = vsel %vm1226, %v1320, 0.0
    %v1324 = vsel %vm1227, %v1319, 0.0
    %v1325 = vsel %vm1228, %v1318, 0.0
    %v1326 = vsel %vm1229, %v1317, 0.0
    %v1327 = vsel %vm1230, %v1316, 0.0
    %v1328 = vsel %vm1231, %v1315, 0.0
    %v1329 = vsel %vm1232, %v1314, 0.0
    %v1330 = vsel %vm1233, %v1313, 0.0
    %v1331 = vsel %vm1234, %v1312, 0.0
    %v1332 = vsel %vm1235, %v1311, 0.0
    %v1333 = vsel %vm1236, %v1310, 0.0
    %v1334 = vsel %vm1237, %v1309, 0.0
    %v1335 = vsel %vm1238, %v1308, 0.0
    %v1336 = vsel %vm1239, %v1307, 0.0
    %v1337 = vsel %vm1240, %v1306, 0.0
    %v1338 = vrot.slane %v1274, 7
    %v1339 = vrot.slane %v1275, 7
    %v1340 = vrot.slane %v1276, 7
    %v1341 = vrot.slane %v1277, 7
    %v1342 = vrot.slane %v1278, 7
    %v1343 = vrot.slane %v1279, 7
    %v1344 = vrot.slane %v1280, 7
    %v1345 = vrot.slane %v1281, 7
    %v1346 = vsel %vm1257, %v1344, %v1345
    %v1347 = vsel %vm1257, %v1343, %v1344
    %v1348 = vsel %vm1257, %v1342, %v1343
    %v1349 = vsel %vm1257, %v1341, %v1342
    %v1350 = vsel %vm1257, %v1340, %v1341
    %v1351 = vsel %vm1257, %v1339, %v1340
    %v1352 = vsel %vm1257, %v1338, %v1339
    %v1353 = vsel %vm1257, %v1345, %v1338
    %v1354 = vsel %vm1225, %v1353, 1.0
    %v1355 = vsel %vm1226, %v1352, 1.0
    %v1356 = vsel %vm1227, %v1351, 1.0
    %v1357 = vsel %vm1228, %v1350, 1.0
    %v1358 = vsel %vm1229, %v1349, 1.0
    %v1359 = vsel %vm1230, %v1348, 1.0
    %v1360 = vsel %vm1231, %v1347, 1.0
    %v1361 = vsel %vm1232, %v1346, 1.0
    %v1362 = vrot.slane %v1322, 7
    %v1363 = vrot.slane %v1323, 7
    %v1364 = vrot.slane %v1324, 7
    %v1365 = vrot.slane %v1325, 7
    %v1366 = vrot.slane %v1326, 7
    %v1367 = vrot.slane %v1327, 7
    %v1368 = vrot.slane %v1328, 7
    %v1369 = vrot.slane %v1329, 7
    %v1370 = vsel %vm1257, %v1368, %v1369
    %v1371 = vsel %vm1257, %v1367, %v1368
    %v1372 = vsel %vm1257, %v1366, %v1367
    %v1373 = vsel %vm1257, %v1365, %v1366
    %v1374 = vsel %vm1257, %v1364, %v1365
    %v1375 = vsel %vm1257, %v1363, %v1364
    %v1376 = vsel %vm1257, %v1362, %v1363
    %v1377 = vsel %vm1257, %v1369, %v1362
    %v1378 = vsel %vm1225, %v1377, 0.0
    %v1379 = vsel %vm1226, %v1376, 0.0
    %v1380 = vsel %vm1227, %v1375, 0.0
    %v1381 = vsel %vm1228, %v1374, 0.0
    %v1382 = vsel %vm1229, %v1373, 0.0
    %v1383 = vsel %vm1230, %v1372, 0.0
    %v1384 = vsel %vm1231, %v1371, 0.0
    %v1385 = vsel %vm1232, %v1370, 0.0
    %v1386 = vmul.f32 %v1274, %v1354
    %v1387 = vmul.f32 %v1275, %v1355
    %v1388 = vmul.f32 %v1276, %v1356
    %v1389 = vmul.f32 %v1277, %v1357
    %v1390 = vmul.f32 %v1278, %v1358
    %v1391 = vmul.f32 %v1279, %v1359
    %v1392 = vmul.f32 %v1280, %v1360
    %v1393 = vmul.f32 %v1281, %v1361
    %v1394 = vmul.f32 %v1322, %v1378
    %v1395 = vmul.f32 %v1323, %v1379
    %v1396 = vmul.f32 %v1324, %v1380
    %v1397 = vmul.f32 %v1325, %v1381
    %v1398 = vmul.f32 %v1326, %v1382
    %v1399 = vmul.f32 %v1327, %v1383
    %v1400 = vmul.f32 %v1328, %v1384
    %v1401 = vmul.f32 %v1329, %v1385
    %v1402 = vsub.f32 %v1386, %v1394
    %v1403 = vsub.f32 %v1387, %v1395
    %v1404 = vsub.f32 %v1388, %v1396
    %v1405 = vsub.f32 %v1389, %v1397
    %v1406 = vsub.f32 %v1390, %v1398
    %v1407 = vsub.f32 %v1391, %v1399
    %v1408 = vsub.f32 %v1392, %v1400
    %v1409 = vsub.f32 %v1393, %v1401
    %v1410 = vmul.f32 %v1274, %v1378
    %v1411 = vmul.f32 %v1275, %v1379
    %v1412 = vmul.f32 %v1276, %v1380
    %v1413 = vmul.f32 %v1277, %v1381
    %v1414 = vmul.f32 %v1278, %v1382
    %v1415 = vmul.f32 %v1279, %v1383
    %v1416 = vmul.f32 %v1280, %v1384
    %v1417 = vmul.f32 %v1281, %v1385
    %v1418 = vmul.f32 %v1322, %v1354
    %v1419 = vmul.f32 %v1323, %v1355
    %v1420 = vmul.f32 %v1324, %v1356
    %v1421 = vmul.f32 %v1325, %v1357
    %v1422 = vmul.f32 %v1326, %v1358
    %v1423 = vmul.f32 %v1327, %v1359
    %v1424 = vmul.f32 %v1328, %v1360
    %v1425 = vmul.f32 %v1329, %v1361
    %v1426 = vadd.f32 %v1410, %v1418
    %v1427 = vadd.f32 %v1411, %v1419
    %v1428 = vadd.f32 %v1412, %v1420
    %v1429 = vadd.f32 %v1413, %v1421
    %v1430 = vadd.f32 %v1414, %v1422
    %v1431 = vadd.f32 %v1415, %v1423
    %v1432 = vadd.f32 %v1416, %v1424
    %v1433 = vadd.f32 %v1417, %v1425
    %vm1434 = vcmp.ge.s32.totalorder %v1209, 2
    %vm1435 = vcmp.ge.s32.totalorder %v1210, 2
    %vm1436 = vcmp.ge.s32.totalorder %v1211, 2
    %vm1437 = vcmp.ge.s32.totalorder %v1212, 2
    %vm1438 = vcmp.ge.s32.totalorder %v1213, 2
    %vm1439 = vcmp.ge.s32.totalorder %v1214, 2
    %vm1440 = vcmp.ge.s32.totalorder %v1215, 2
    %vm1441 = vcmp.ge.s32.totalorder %v1216, 2
    %v1442 = vrot.slane %v1402, 6
    %v1443 = vrot.slane %v1403, 6
    %v1444 = vrot.slane %v1404, 6
    %v1445 = vrot.slane %v1405, 6
    %v1446 = vrot.slane %v1406, 6
    %v1447 = vrot.slane %v1407, 6
    %v1448 = vrot.slane %v1408, 6
    %v1449 = vrot.slane %v1409, 6
    %vm1450 = vcmp.lt.s32.totalorder %v1209, 2
    %v1451 = vsel %vm1450, %v1448, %v1449
    %v1452 = vsel %vm1450, %v1447, %v1448
    %v1453 = vsel %vm1450, %v1446, %v1447
    %v1454 = vsel %vm1450, %v1445, %v1446
    %v1455 = vsel %vm1450, %v1444, %v1445
    %v1456 = vsel %vm1450, %v1443, %v1444
    %v1457 = vsel %vm1450, %v1442, %v1443
    %v1458 = vsel %vm1450, %v1449, %v1442
    %v1459 = vsel %vm1434, %v1458, 1.0
    %v1460 = vsel %vm1435, %v1457, 1.0
    %v1461 = vsel %vm1436, %v1456, 1.0
    %v1462 = vsel %vm1437, %v1455, 1.0
    %v1463 = vsel %vm1438, %v1454, 1.0
    %v1464 = vsel %vm1439, %v1453, 1.0
    %v1465 = vsel %vm1440, %v1452, 1.0
    %v1466 = vsel %vm1441, %v1451, 1.0
    %v1467 = vrot.slane %v1426, 6
    %v1468 = vrot.slane %v1427, 6
    %v1469 = vrot.slane %v1428, 6
    %v1470 = vrot.slane %v1429, 6
    %v1471 = vrot.slane %v1430, 6
    %v1472 = vrot.slane %v1431, 6
    %v1473 = vrot.slane %v1432, 6
    %v1474 = vrot.slane %v1433, 6
    %v1475 = vsel %vm1450, %v1473, %v1474
    %v1476 = vsel %vm1450, %v1472, %v1473
    %v1477 = vsel %vm1450, %v1471, %v1472
    %v1478 = vsel %vm1450, %v1470, %v1471
    %v1479 = vsel %vm1450, %v1469, %v1470
    %v1480 = vsel %vm1450, %v1468, %v1469
    %v1481 = vsel %vm1450, %v1467, %v1468
    %v1482 = vsel %vm1450, %v1474, %v1467
    %v1483 = vsel %vm1434, %v1482, 0.0
    %v1484 = vsel %vm1435, %v1481, 0.0
    %v1485 = vsel %vm1436, %v1480, 0.0
    %v1486 = vsel %vm1437, %v1479, 0.0
    %v1487 = vsel %vm1438, %v1478, 0.0
    %v1488 = vsel %vm1439, %v1477, 0.0
    %v1489 = vsel %vm1440, %v1476, 0.0
    %v1490 = vsel %vm1441, %v1475, 0.0
    %v1491 = vmul.f32 %v1402, %v1459
    %v1492 = vmul.f32 %v1403, %v1460
    %v1493 = vmul.f32 %v1404, %v1461
    %v1494 = vmul.f32 %v1405, %v1462
    %v1495 = vmul.f32 %v1406, %v1463
    %v1496 = vmul.f32 %v1407, %v1464
    %v1497 = vmul.f32 %v1408, %v1465
    %v1498 = vmul.f32 %v1409, %v1466
    %v1499 = vmul.f32 %v1426, %v1483
    %v1500 = vmul.f32 %v1427, %v1484
    %v1501 = vmul.f32 %v1428, %v1485
    %v1502 = vmul.f32 %v1429, %v1486
    %v1503 = vmul.f32 %v1430, %v1487
    %v1504 = vmul.f32 %v1431, %v1488
    %v1505 = vmul.f32 %v1432, %v1489
    %v1506 = vmul.f32 %v1433, %v1490
    %v1507 = vsub.f32 %v1491, %v1499
    %v1508 = vsub.f32 %v1492, %v1500
    %v1509 = vsub.f32 %v1493, %v1501
    %v1510 = vsub.f32 %v1494, %v1502
    %v1511 = vsub.f32 %v1495, %v1503
    %v1512 = vsub.f32 %v1496, %v1504
    %v1513 = vsub.f32 %v1497, %v1505
    %v1514 = vsub.f32 %v1498, %v1506
    %v1515 = vmul.f32 %v1402, %v1483
    %v1516 = vmul.f32 %v1403, %v1484
    %v1517 = vmul.f32 %v1404, %v1485
    %v1518 = vmul.f32 %v1405, %v1486
    %v1519 = vmul.f32 %v1406, %v1487
    %v1520 = vmul.f32 %v1407, %v1488
    %v1521 = vmul.f32 %v1408, %v1489
    %v1522 = vmul.f32 %v1409, %v1490
    %v1523 = vmul.f32 %v1426, %v1459
    %v1524 = vmul.f32 %v1427, %v1460
    %v1525 = vmul.f32 %v1428, %v1461
    %v1526 = vmul.f32 %v1429, %v1462
    %v1527 = vmul.f32 %v1430, %v1463
    %v1528 = vmul.f32 %v1431, %v1464
    %v1529 = vmul.f32 %v1432, %v1465
    %v1530 = vmul.f32 %v1433, %v1466
    %v1531 = vadd.f32 %v1515, %v1523
    %v1532 = vadd.f32 %v1516, %v1524
    %v1533 = vadd.f32 %v1517, %v1525
    %v1534 = vadd.f32 %v1518, %v1526
    %v1535 = vadd.f32 %v1519, %v1527
    %v1536 = vadd.f32 %v1520, %v1528
    %v1537 = vadd.f32 %v1521, %v1529
    %v1538 = vadd.f32 %v1522, %v1530
    %vm1539 = vcmp.ge.s32.totalorder %v1209, 4
    %vm1540 = vcmp.ge.s32.totalorder %v1210, 4
    %vm1541 = vcmp.ge.s32.totalorder %v1211, 4
    %vm1542 = vcmp.ge.s32.totalorder %v1212, 4
    %vm1543 = vcmp.ge.s32.totalorder %v1213, 4
    %vm1544 = vcmp.ge.s32.totalorder %v1214, 4
    %vm1545 = vcmp.ge.s32.totalorder %v1215, 4
    %vm1546 = vcmp.ge.s32.totalorder %v1216, 4
    %v1547 = vrot.slane %v1507, 4
    %v1548 = vrot.slane %v1508, 4
    %v1549 = vrot.slane %v1509, 4
    %v1550 = vrot.slane %v1510, 4
    %v1551 = vrot.slane %v1511, 4
    %v1552 = vrot.slane %v1512, 4
    %v1553 = vrot.slane %v1513, 4
    %v1554 = vrot.slane %v1514, 4
    %vm1555 = vcmp.lt.s32.totalorder %v1209, 4
    %v1556 = vsel %vm1555, %v1553, %v1554
    %v1557 = vsel %vm1555, %v1552, %v1553
    %v1558 = vsel %vm1555, %v1551, %v1552
    %v1559 = vsel %vm1555, %v1550, %v1551
    %v1560 = vsel %vm1555, %v1549, %v1550
    %v1561 = vsel %vm1555, %v1548, %v1549
    %v1562 = vsel %vm1555, %v1547, %v1548
    %v1563 = vsel %vm1555, %v1554, %v1547
    %v1564 = vsel %vm1539, %v1563, 1.0
    %v1565 = vsel %vm1540, %v1562, 1.0
    %v1566 = vsel %vm1541, %v1561, 1.0
    %v1567 = vsel %vm1542, %v1560, 1.0
    %v1568 = vsel %vm1543, %v1559, 1.0
    %v1569 = vsel %vm1544, %v1558, 1.0
    %v1570 = vsel %vm1545, %v1557, 1.0
    %v1571 = vsel %vm1546, %v1556, 1.0
    %v1572 = vrot.slane %v1531, 4
    %v1573 = vrot.slane %v1532, 4
    %v1574 = vrot.slane %v1533, 4
    %v1575 = vrot.slane %v1534, 4
    %v1576 = vrot.slane %v1535, 4
    %v1577 = vrot.slane %v1536, 4
    %v1578 = vrot.slane %v1537, 4
    %v1579 = vrot.slane %v1538, 4
    %v1580 = vsel %vm1555, %v1578, %v1579
    %v1581 = vsel %vm1555, %v1577, %v1578
    %v1582 = vsel %vm1555, %v1576, %v1577
    %v1583 = vsel %vm1555, %v1575, %v1576
    %v1584 = vsel %vm1555, %v1574, %v1575
    %v1585 = vsel %vm1555, %v1573, %v1574
    %v1586 = vsel %vm1555, %v1572, %v1573
    %v1587 = vsel %vm1555, %v1579, %v1572
    %v1588 = vsel %vm1539, %v1587, 0.0
    %v1589 = vsel %vm1540, %v1586, 0.0
    %v1590 = vsel %vm1541, %v1585, 0.0
    %v1591 = vsel %vm1542, %v1584, 0.0
    %v1592 = vsel %vm1543, %v1583, 0.0
    %v1593 = vsel %vm1544, %v1582, 0.0
    %v1594 = vsel %vm1545, %v1581, 0.0
    %v1595 = vsel %vm1546, %v1580, 0.0
    %v1596 = vmul.f32 %v1507, %v1564
    %v1597 = vmul.f32 %v1508, %v1565
    %v1598 = vmul.f32 %v1509, %v1566
    %v1599 = vmul.f32 %v1510, %v1567
    %v1600 = vmul.f32 %v1511, %v1568
    %v1601 = vmul.f32 %v1512, %v1569
    %v1602 = vmul.f32 %v1513, %v1570
    %v1603 = vmul.f32 %v1514, %v1571
    %v1604 = vmul.f32 %v1531, %v1588
    %v1605 = vmul.f32 %v1532, %v1589
    %v1606 = vmul.f32 %v1533, %v1590
    %v1607 = vmul.f32 %v1534, %v1591
    %v1608 = vmul.f32 %v1535, %v1592
    %v1609 = vmul.f32 %v1536, %v1593
    %v1610 = vmul.f32 %v1537, %v1594
    %v1611 = vmul.f32 %v1538, %v1595
    %v1612 = vsub.f32 %v1596, %v1604
    %v1613 = vsub.f32 %v1597, %v1605
    %v1614 = vsub.f32 %v1598, %v1606
    %v1615 = vsub.f32 %v1599, %v1607
    %v1616 = vsub.f32 %v1600, %v1608
    %v1617 = vsub.f32 %v1601, %v1609
    %v1618 = vsub.f32 %v1602, %v1610
    %v1619 = vsub.f32 %v1603, %v1611
    %v1620 = vmul.f32 %v1507, %v1588
    %v1621 = vmul.f32 %v1508, %v1589
    %v1622 = vmul.f32 %v1509, %v1590
    %v1623 = vmul.f32 %v1510, %v1591
    %v1624 = vmul.f32 %v1511, %v1592
    %v1625 = vmul.f32 %v1512, %v1593
    %v1626 = vmul.f32 %v1513, %v1594
    %v1627 = vmul.f32 %v1514, %v1595
    %v1628 = vmul.f32 %v1531, %v1564
    %v1629 = vmul.f32 %v1532, %v1565
    %v1630 = vmul.f32 %v1533, %v1566
    %v1631 = vmul.f32 %v1534, %v1567
    %v1632 = vmul.f32 %v1535, %v1568
    %v1633 = vmul.f32 %v1536, %v1569
    %v1634 = vmul.f32 %v1537, %v1570
    %v1635 = vmul.f32 %v1538, %v1571
    %v1636 = vadd.f32 %v1620, %v1628
    %v1637 = vadd.f32 %v1621, %v1629
    %v1638 = vadd.f32 %v1622, %v1630
    %v1639 = vadd.f32 %v1623, %v1631
    %v1640 = vadd.f32 %v1624, %v1632
    %v1641 = vadd.f32 %v1625, %v1633
    %v1642 = vadd.f32 %v1626, %v1634
    %v1643 = vadd.f32 %v1627, %v1635
    %vm1644 = vcmp.ge.s32.totalorder %v1209, 8
    %vm1645 = vcmp.ge.s32.totalorder %v1210, 8
    %vm1646 = vcmp.ge.s32.totalorder %v1211, 8
    %vm1647 = vcmp.ge.s32.totalorder %v1212, 8
    %vm1648 = vcmp.ge.s32.totalorder %v1213, 8
    %vm1649 = vcmp.ge.s32.totalorder %v1214, 8
    %vm1650 = vcmp.ge.s32.totalorder %v1215, 8
    %vm1651 = vcmp.ge.s32.totalorder %v1216, 8
    %v1652 = vsel %vm1644, %v1619, 1.0
    %v1653 = vsel %vm1645, %v1612, 1.0
    %v1654 = vsel %vm1646, %v1613, 1.0
    %v1655 = vsel %vm1647, %v1614, 1.0
    %v1656 = vsel %vm1648, %v1615, 1.0
    %v1657 = vsel %vm1649, %v1616, 1.0
    %v1658 = vsel %vm1650, %v1617, 1.0
    %v1659 = vsel %vm1651, %v1618, 1.0
    %v1660 = vsel %vm1644, %v1643, 0.0
    %v1661 = vsel %vm1645, %v1636, 0.0
    %v1662 = vsel %vm1646, %v1637, 0.0
    %v1663 = vsel %vm1647, %v1638, 0.0
    %v1664 = vsel %vm1648, %v1639, 0.0
    %v1665 = vsel %vm1649, %v1640, 0.0
    %v1666 = vsel %vm1650, %v1641, 0.0
    %v1667 = vsel %vm1651, %v1642, 0.0
    %v1668 = vmul.f32 %v1612, %v1652
    %v1669 = vmul.f32 %v1613, %v1653
    %v1670 = vmul.f32 %v1614, %v1654
    %v1671 = vmul.f32 %v1615, %v1655
    %v1672 = vmul.f32 %v1616, %v1656
    %v1673 = vmul.f32 %v1617, %v1657
    %v1674 = vmul.f32 %v1618, %v1658
    %v1675 = vmul.f32 %v1619, %v1659
    %v1676 = vmul.f32 %v1636, %v1660
    %v1677 = vmul.f32 %v1637, %v1661
    %v1678 = vmul.f32 %v1638, %v1662
    %v1679 = vmul.f32 %v1639, %v1663
    %v1680 = vmul.f32 %v1640, %v1664
    %v1681 = vmul.f32 %v1641, %v1665
    %v1682 = vmul.f32 %v1642, %v1666
    %v1683 = vmul.f32 %v1643, %v1667
    %v1684 = vsub.f32 %v1668, %v1676
    %v1685 = vsub.f32 %v1669, %v1677
    %v1686 = vsub.f32 %v1670, %v1678
    %v1687 = vsub.f32 %v1671, %v1679
    %v1688 = vsub.f32 %v1672, %v1680
    %v1689 = vsub.f32 %v1673, %v1681
    %v1690 = vsub.f32 %v1674, %v1682
    %v1691 = vsub.f32 %v1675, %v1683
    %v1692 = vmul.f32 %v1612, %v1660
    %v1693 = vmul.f32 %v1613, %v1661
    %v1694 = vmul.f32 %v1614, %v1662
    %v1695 = vmul.f32 %v1615, %v1663
    %v1696 = vmul.f32 %v1616, %v1664
    %v1697 = vmul.f32 %v1617, %v1665
    %v1698 = vmul.f32 %v1618, %v1666
    %v1699 = vmul.f32 %v1619, %v1667
    %v1700 = vmul.f32 %v1636, %v1652
    %v1701 = vmul.f32 %v1637, %v1653
    %v1702 = vmul.f32 %v1638, %v1654
    %v1703 = vmul.f32 %v1639, %v1655
    %v1704 = vmul.f32 %v1640, %v1656
    %v1705 = vmul.f32 %v1641, %v1657
    %v1706 = vmul.f32 %v1642, %v1658
    %v1707 = vmul.f32 %v1643, %v1659
    %v1708 = vadd.f32 %v1692, %v1700
    %v1709 = vadd.f32 %v1693, %v1701
    %v1710 = vadd.f32 %v1694, %v1702
    %v1711 = vadd.f32 %v1695, %v1703
    %v1712 = vadd.f32 %v1696, %v1704
    %v1713 = vadd.f32 %v1697, %v1705
    %v1714 = vadd.f32 %v1698, %v1706
    %v1715 = vadd.f32 %v1699, %v1707
    %vm1716 = vcmp.ge.s32.totalorder %v1209, 16
    %vm1717 = vcmp.ge.s32.totalorder %v1210, 16
    %vm1718 = vcmp.ge.s32.totalorder %v1211, 16
    %vm1719 = vcmp.ge.s32.totalorder %v1212, 16
    %vm1720 = vcmp.ge.s32.totalorder %v1213, 16
    %vm1721 = vcmp.ge.s32.totalorder %v1214, 16
    %vm1722 = vcmp.ge.s32.totalorder %v1215, 16
    %vm1723 = vcmp.ge.s32.totalorder %v1216, 16
    %v1724 = vsel %vm1716, %v1690, 1.0
    %v1725 = vsel %vm1717, %v1691, 1.0
    %v1726 = vsel %vm1718, %v1684, 1.0
    %v1727 = vsel %vm1719, %v1685, 1.0
    %v1728 = vsel %vm1720, %v1686, 1.0
    %v1729 = vsel %vm1721, %v1687, 1.0
    %v1730 = vsel %vm1722, %v1688, 1.0
    %v1731 = vsel %vm1723, %v1689, 1.0
    %v1732 = vsel %vm1716, %v1714, 0.0
    %v1733 = vsel %vm1717, %v1715, 0.0
    %v1734 = vsel %vm1718, %v1708, 0.0
    %v1735 = vsel %vm1719, %v1709, 0.0
    %v1736 = vsel %vm1720, %v1710, 0.0
    %v1737 = vsel %vm1721, %v1711, 0.0
    %v1738 = vsel %vm1722, %v1712, 0.0
    %v1739 = vsel %vm1723, %v1713, 0.0
    %v1740 = vmul.f32 %v1684, %v1724
    %v1741 = vmul.f32 %v1685, %v1725
    %v1742 = vmul.f32 %v1686, %v1726
    %v1743 = vmul.f32 %v1687, %v1727
    %v1744 = vmul.f32 %v1688, %v1728
    %v1745 = vmul.f32 %v1689, %v1729
    %v1746 = vmul.f32 %v1690, %v1730
    %v1747 = vmul.f32 %v1691, %v1731
    %v1748 = vmul.f32 %v1708, %v1732
    %v1749 = vmul.f32 %v1709, %v1733
    %v1750 = vmul.f32 %v1710, %v1734
    %v1751 = vmul.f32 %v1711, %v1735
    %v1752 = vmul.f32 %v1712, %v1736
    %v1753 = vmul.f32 %v1713, %v1737
    %v1754 = vmul.f32 %v1714, %v1738
    %v1755 = vmul.f32 %v1715, %v1739
    %v1756 = vsub.f32 %v1740, %v1748
    %v1757 = vsub.f32 %v1741, %v1749
    %v1758 = vsub.f32 %v1742, %v1750
    %v1759 = vsub.f32 %v1743, %v1751
    %v1760 = vsub.f32 %v1744, %v1752
    %v1761 = vsub.f32 %v1745, %v1753
    %v1762 = vsub.f32 %v1746, %v1754
    %v1763 = vsub.f32 %v1747, %v1755
    %v1764 = vmul.f32 %v1684, %v1732
    %v1765 = vmul.f32 %v1685, %v1733
    %v1766 = vmul.f32 %v1686, %v1734
    %v1767 = vmul.f32 %v1687, %v1735
    %v1768 = vmul.f32 %v1688, %v1736
    %v1769 = vmul.f32 %v1689, %v1737
    %v1770 = vmul.f32 %v1690, %v1738
    %v1771 = vmul.f32 %v1691, %v1739
    %v1772 = vmul.f32 %v1708, %v1724
    %v1773 = vmul.f32 %v1709, %v1725
    %v1774 = vmul.f32 %v1710, %v1726
    %v1775 = vmul.f32 %v1711, %v1727
    %v1776 = vmul.f32 %v1712, %v1728
    %v1777 = vmul.f32 %v1713, %v1729
    %v1778 = vmul.f32 %v1714, %v1730
    %v1779 = vmul.f32 %v1715, %v1731
    %v1780 = vadd.f32 %v1764, %v1772
    %v1781 = vadd.f32 %v1765, %v1773
    %v1782 = vadd.f32 %v1766, %v1774
    %v1783 = vadd.f32 %v1767, %v1775
    %v1784 = vadd.f32 %v1768, %v1776
    %v1785 = vadd.f32 %v1769, %v1777
    %v1786 = vadd.f32 %v1770, %v1778
    %v1787 = vadd.f32 %v1771, %v1779
    %vm1788 = vcmp.ge.s32.totalorder %v1209, 32
    %vm1789 = vcmp.ge.s32.totalorder %v1210, 32
    %vm1790 = vcmp.ge.s32.totalorder %v1211, 32
    %vm1791 = vcmp.ge.s32.totalorder %v1212, 32
    %vm1792 = vcmp.ge.s32.totalorder %v1213, 32
    %vm1793 = vcmp.ge.s32.totalorder %v1214, 32
    %vm1794 = vcmp.ge.s32.totalorder %v1215, 32
    %vm1795 = vcmp.ge.s32.totalorder %v1216, 32
    %v1796 = vsel %vm1788, %v1760, 1.0
    %v1797 = vsel %vm1789, %v1761, 1.0
    %v1798 = vsel %vm1790, %v1762, 1.0
    %v1799 = vsel %vm1791, %v1763, 1.0
    %v1800 = vsel %vm1792, %v1756, 1.0
    %v1801 = vsel %vm1793, %v1757, 1.0
    %v1802 = vsel %vm1794, %v1758, 1.0
    %v1803 = vsel %vm1795, %v1759, 1.0
    %v1804 = vsel %vm1788, %v1784, 0.0
    %v1805 = vsel %vm1789, %v1785, 0.0
    %v1806 = vsel %vm1790, %v1786, 0.0
    %v1807 = vsel %vm1791, %v1787, 0.0
    %v1808 = vsel %vm1792, %v1780, 0.0
    %v1809 = vsel %vm1793, %v1781, 0.0
    %v1810 = vsel %vm1794, %v1782, 0.0
    %v1811 = vsel %vm1795, %v1783, 0.0
    %v1812 = vmul.f32 %v1756, %v1796
    %v1813 = vmul.f32 %v1757, %v1797
    %v1814 = vmul.f32 %v1758, %v1798
    %v1815 = vmul.f32 %v1759, %v1799
    %v1816 = vmul.f32 %v1760, %v1800
    %v1817 = vmul.f32 %v1761, %v1801
    %v1818 = vmul.f32 %v1762, %v1802
    %v1819 = vmul.f32 %v1763, %v1803
    %v1820 = vmul.f32 %v1780, %v1804
    %v1821 = vmul.f32 %v1781, %v1805
    %v1822 = vmul.f32 %v1782, %v1806
    %v1823 = vmul.f32 %v1783, %v1807
    %v1824 = vmul.f32 %v1784, %v1808
    %v1825 = vmul.f32 %v1785, %v1809
    %v1826 = vmul.f32 %v1786, %v1810
    %v1827 = vmul.f32 %v1787, %v1811
    %v1828 = vsub.f32 %v1812, %v1820
    %v1829 = vsub.f32 %v1813, %v1821
    %v1830 = vsub.f32 %v1814, %v1822
    %v1831 = vsub.f32 %v1815, %v1823
    %v1832 = vsub.f32 %v1816, %v1824
    %v1833 = vsub.f32 %v1817, %v1825
    %v1834 = vsub.f32 %v1818, %v1826
    %v1835 = vsub.f32 %v1819, %v1827
    %v1836 = vmul.f32 %v1756, %v1804
    %v1837 = vmul.f32 %v1757, %v1805
    %v1838 = vmul.f32 %v1758, %v1806
    %v1839 = vmul.f32 %v1759, %v1807
    %v1840 = vmul.f32 %v1760, %v1808
    %v1841 = vmul.f32 %v1761, %v1809
    %v1842 = vmul.f32 %v1762, %v1810
    %v1843 = vmul.f32 %v1763, %v1811
    %v1844 = vmul.f32 %v1780, %v1796
    %v1845 = vmul.f32 %v1781, %v1797
    %v1846 = vmul.f32 %v1782, %v1798
    %v1847 = vmul.f32 %v1783, %v1799
    %v1848 = vmul.f32 %v1784, %v1800
    %v1849 = vmul.f32 %v1785, %v1801
    %v1850 = vmul.f32 %v1786, %v1802
    %v1851 = vmul.f32 %v1787, %v1803
    %v1852 = vadd.f32 %v1836, %v1844
    %v1853 = vadd.f32 %v1837, %v1845
    %v1854 = vadd.f32 %v1838, %v1846
    %v1855 = vadd.f32 %v1839, %v1847
    %v1856 = vadd.f32 %v1840, %v1848
    %v1857 = vadd.f32 %v1841, %v1849
    %v1858 = vadd.f32 %v1842, %v1850
    %v1859 = vadd.f32 %v1843, %v1851
    %v1860 = vlaneseq
    %v1861 = vshrl.u32 %v1860, 7
    %v1862 = vsub.s32 0, %v1861
    %v1863 = vrot.slane %v1046, %v1862
    %v1864 = vmul.f32 %v1863, %v1828
    %v1865 = vmul.f32 %v1863, %v1829
    %v1866 = vmul.f32 %v1863, %v1830
    %v1867 = vmul.f32 %v1863, %v1831
    %v1868 = vmul.f32 %v1863, %v1832
    %v1869 = vmul.f32 %v1863, %v1833
    %v1870 = vmul.f32 %v1863, %v1834
    %v1871 = vmul.f32 %v1863, %v1835
    %v1872 = vlaneseq
    %v1873 = vshrl.u32 %v1872, 7
    %v1874 = vsub.s32 0, %v1873
    %v1875 = vrot.slane %v1207, %v1874
    %v1876 = vmul.f32 %v1875, %v1852
    %v1877 = vmul.f32 %v1875, %v1853
    %v1878 = vmul.f32 %v1875, %v1854
    %v1879 = vmul.f32 %v1875, %v1855
    %v1880 = vmul.f32 %v1875, %v1856
    %v1881 = vmul.f32 %v1875, %v1857
    %v1882 = vmul.f32 %v1875, %v1858
    %v1883 = vmul.f32 %v1875, %v1859
    %v1884 = vsub.f32 %v1864, %v1876
    %v1885 = vsub.f32 %v1865, %v1877
    %v1886 = vsub.f32 %v1866, %v1878
    %v1887 = vsub.f32 %v1867, %v1879
    %v1888 = vsub.f32 %v1868, %v1880
    %v1889 = vsub.f32 %v1869, %v1881
    %v1890 = vsub.f32 %v1870, %v1882
    %v1891 = vsub.f32 %v1871, %v1883
    %v1892 = vmul.f32 %v1863, %v1852
    %v1893 = vmul.f32 %v1863, %v1853
    %v1894 = vmul.f32 %v1863, %v1854
    %v1895 = vmul.f32 %v1863, %v1855
    %v1896 = vmul.f32 %v1863, %v1856
    %v1897 = vmul.f32 %v1863, %v1857
    %v1898 = vmul.f32 %v1863, %v1858
    %v1899 = vmul.f32 %v1863, %v1859
    %v1900 = vmul.f32 %v1875, %v1828
    %v1901 = vmul.f32 %v1875, %v1829
    %v1902 = vmul.f32 %v1875, %v1830
    %v1903 = vmul.f32 %v1875, %v1831
    %v1904 = vmul.f32 %v1875, %v1832
    %v1905 = vmul.f32 %v1875, %v1833
    %v1906 = vmul.f32 %v1875, %v1834
    %v1907 = vmul.f32 %v1875, %v1835
    %v1908 = vadd.f32 %v1892, %v1900
    %v1909 = vadd.f32 %v1893, %v1901
    %v1910 = vadd.f32 %v1894, %v1902
    %v1911 = vadd.f32 %v1895, %v1903
    %v1912 = vadd.f32 %v1896, %v1904
    %v1913 = vadd.f32 %v1897, %v1905
    %v1914 = vadd.f32 %v1898, %v1906
    %v1915 = vadd.f32 %v1899, %v1907
    %v1916 = vmul.f32 %v1884, %v1884
    %v1917 = vmul.f32 %v1885, %v1885
    %v1918 = vmul.f32 %v1886, %v1886
    %v1919 = vmul.f32 %v1887, %v1887
    %v1920 = vmul.f32 %v1888, %v1888
    %v1921 = vmul.f32 %v1889, %v1889
    %v1922 = vmul.f32 %v1890, %v1890
    %v1923 = vmul.f32 %v1891, %v1891
    %v1924 = vmul.f32 %v1908, %v1908
    %v1925 = vmul.f32 %v1909, %v1909
    %v1926 = vmul.f32 %v1910, %v1910
    %v1927 = vmul.f32 %v1911, %v1911
    %v1928 = vmul.f32 %v1912, %v1912
    %v1929 = vmul.f32 %v1913, %v1913
    %v1930 = vmul.f32 %v1914, %v1914
    %v1931 = vmul.f32 %v1915, %v1915
    %v1932 = vadd.f32 %v1916, %v1924
    %v1933 = vadd.f32 %v1917, %v1925
    %v1934 = vadd.f32 %v1918, %v1926
    %v1935 = vadd.f32 %v1919, %v1927
    %v1936 = vadd.f32 %v1920, %v1928
    %v1937 = vadd.f32 %v1921, %v1929
    %v1938 = vadd.f32 %v1922, %v1930
    %v1939 = vadd.f32 %v1923, %v1931
    %v1940 = vmax.f32 %v1932, 1e-30
    %v1941 = vmax.f32 %v1933, 1e-30
    %v1942 = vmax.f32 %v1934, 1e-30
    %v1943 = vmax.f32 %v1935, 1e-30
    %v1944 = vmax.f32 %v1936, 1e-30
    %v1945 = vmax.f32 %v1937, 1e-30
    %v1946 = vmax.f32 %v1938, 1e-30
    %v1947 = vmax.f32 %v1939, 1e-30
    %v1948 = vrsqrt.pop %v1940
    %v1949 = vrsqrt.pop %v1941
    %v1950 = vrsqrt.pop %v1942
    %v1951 = vrsqrt.pop %v1943
    %v1952 = vrsqrt.pop %v1944
    %v1953 = vrsqrt.pop %v1945
    %v1954 = vrsqrt.pop %v1946
    %v1955 = vrsqrt.pop %v1947
    %v1956 = vmul.f32 %v1884, %v1948
    %v1957 = vmul.f32 %v1885, %v1949
    %v1958 = vmul.f32 %v1886, %v1950
    %v1959 = vmul.f32 %v1887, %v1951
    %v1960 = vmul.f32 %v1888, %v1952
    %v1961 = vmul.f32 %v1889, %v1953
    %v1962 = vmul.f32 %v1890, %v1954
    %v1963 = vmul.f32 %v1891, %v1955
    %v1964 = vmul.f32 %v1908, %v1948
    %v1965 = vmul.f32 %v1909, %v1949
    %v1966 = vmul.f32 %v1910, %v1950
    %v1967 = vmul.f32 %v1911, %v1951
    %v1968 = vmul.f32 %v1912, %v1952
    %v1969 = vmul.f32 %v1913, %v1953
    %v1970 = vmul.f32 %v1914, %v1954
    %v1971 = vmul.f32 %v1915, %v1955
    %v1972 = vrot.slane %v1956, 7
    %v1973 = vrot.slane %v1963, 7
    %v1974 = vsel %vm1257, %v1973, %v1972
    %v1975 = vrot.slane %v1964, 7
    %v1976 = vrot.slane %v1971, 7
    %v1977 = vsel %vm1257, %v1976, %v1975
    %v1978 = vrot.slane %v1282, 7
    %v1979 = vrot.slane %v1283, 7
    %v1980 = vrot.slane %v1284, 7
    %v1981 = vrot.slane %v1285, 7
    %v1982 = vrot.slane %v1286, 7
    %v1983 = vrot.slane %v1287, 7
    %v1984 = vrot.slane %v1288, 7
    %v1985 = vrot.slane %v1289, 7
    %v1986 = vsel %vm1257, %v1984, %v1985
    %v1987 = vsel %vm1257, %v1983, %v1984
    %v1988 = vsel %vm1257, %v1982, %v1983
    %v1989 = vsel %vm1257, %v1981, %v1982
    %v1990 = vsel %vm1257, %v1980, %v1981
    %v1991 = vsel %vm1257, %v1979, %v1980
    %v1992 = vsel %vm1257, %v1978, %v1979
    %v1993 = vsel %vm1257, %v1985, %v1978
    %v1994 = vsel %vm1225, %v1993, 1.0
    %v1995 = vsel %vm1226, %v1992, 1.0
    %v1996 = vsel %vm1227, %v1991, 1.0
    %v1997 = vsel %vm1228, %v1990, 1.0
    %v1998 = vsel %vm1229, %v1989, 1.0
    %v1999 = vsel %vm1230, %v1988, 1.0
    %v2000 = vsel %vm1231, %v1987, 1.0
    %v2001 = vsel %vm1232, %v1986, 1.0
    %v2002 = vrot.slane %v1330, 7
    %v2003 = vrot.slane %v1331, 7
    %v2004 = vrot.slane %v1332, 7
    %v2005 = vrot.slane %v1333, 7
    %v2006 = vrot.slane %v1334, 7
    %v2007 = vrot.slane %v1335, 7
    %v2008 = vrot.slane %v1336, 7
    %v2009 = vrot.slane %v1337, 7
    %v2010 = vsel %vm1257, %v2008, %v2009
    %v2011 = vsel %vm1257, %v2007, %v2008
    %v2012 = vsel %vm1257, %v2006, %v2007
    %v2013 = vsel %vm1257, %v2005, %v2006
    %v2014 = vsel %vm1257, %v2004, %v2005
    %v2015 = vsel %vm1257, %v2003, %v2004
    %v2016 = vsel %vm1257, %v2002, %v2003
    %v2017 = vsel %vm1257, %v2009, %v2002
    %v2018 = vsel %vm1225, %v2017, 0.0
    %v2019 = vsel %vm1226, %v2016, 0.0
    %v2020 = vsel %vm1227, %v2015, 0.0
    %v2021 = vsel %vm1228, %v2014, 0.0
    %v2022 = vsel %vm1229, %v2013, 0.0
    %v2023 = vsel %vm1230, %v2012, 0.0
    %v2024 = vsel %vm1231, %v2011, 0.0
    %v2025 = vsel %vm1232, %v2010, 0.0
    %v2026 = vmul.f32 %v1282, %v1994
    %v2027 = vmul.f32 %v1283, %v1995
    %v2028 = vmul.f32 %v1284, %v1996
    %v2029 = vmul.f32 %v1285, %v1997
    %v2030 = vmul.f32 %v1286, %v1998
    %v2031 = vmul.f32 %v1287, %v1999
    %v2032 = vmul.f32 %v1288, %v2000
    %v2033 = vmul.f32 %v1289, %v2001
    %v2034 = vmul.f32 %v1330, %v2018
    %v2035 = vmul.f32 %v1331, %v2019
    %v2036 = vmul.f32 %v1332, %v2020
    %v2037 = vmul.f32 %v1333, %v2021
    %v2038 = vmul.f32 %v1334, %v2022
    %v2039 = vmul.f32 %v1335, %v2023
    %v2040 = vmul.f32 %v1336, %v2024
    %v2041 = vmul.f32 %v1337, %v2025
    %v2042 = vsub.f32 %v2026, %v2034
    %v2043 = vsub.f32 %v2027, %v2035
    %v2044 = vsub.f32 %v2028, %v2036
    %v2045 = vsub.f32 %v2029, %v2037
    %v2046 = vsub.f32 %v2030, %v2038
    %v2047 = vsub.f32 %v2031, %v2039
    %v2048 = vsub.f32 %v2032, %v2040
    %v2049 = vsub.f32 %v2033, %v2041
    %v2050 = vmul.f32 %v1282, %v2018
    %v2051 = vmul.f32 %v1283, %v2019
    %v2052 = vmul.f32 %v1284, %v2020
    %v2053 = vmul.f32 %v1285, %v2021
    %v2054 = vmul.f32 %v1286, %v2022
    %v2055 = vmul.f32 %v1287, %v2023
    %v2056 = vmul.f32 %v1288, %v2024
    %v2057 = vmul.f32 %v1289, %v2025
    %v2058 = vmul.f32 %v1330, %v1994
    %v2059 = vmul.f32 %v1331, %v1995
    %v2060 = vmul.f32 %v1332, %v1996
    %v2061 = vmul.f32 %v1333, %v1997
    %v2062 = vmul.f32 %v1334, %v1998
    %v2063 = vmul.f32 %v1335, %v1999
    %v2064 = vmul.f32 %v1336, %v2000
    %v2065 = vmul.f32 %v1337, %v2001
    %v2066 = vadd.f32 %v2050, %v2058
    %v2067 = vadd.f32 %v2051, %v2059
    %v2068 = vadd.f32 %v2052, %v2060
    %v2069 = vadd.f32 %v2053, %v2061
    %v2070 = vadd.f32 %v2054, %v2062
    %v2071 = vadd.f32 %v2055, %v2063
    %v2072 = vadd.f32 %v2056, %v2064
    %v2073 = vadd.f32 %v2057, %v2065
    %v2074 = vrot.slane %v2042, 6
    %v2075 = vrot.slane %v2043, 6
    %v2076 = vrot.slane %v2044, 6
    %v2077 = vrot.slane %v2045, 6
    %v2078 = vrot.slane %v2046, 6
    %v2079 = vrot.slane %v2047, 6
    %v2080 = vrot.slane %v2048, 6
    %v2081 = vrot.slane %v2049, 6
    %v2082 = vsel %vm1450, %v2080, %v2081
    %v2083 = vsel %vm1450, %v2079, %v2080
    %v2084 = vsel %vm1450, %v2078, %v2079
    %v2085 = vsel %vm1450, %v2077, %v2078
    %v2086 = vsel %vm1450, %v2076, %v2077
    %v2087 = vsel %vm1450, %v2075, %v2076
    %v2088 = vsel %vm1450, %v2074, %v2075
    %v2089 = vsel %vm1450, %v2081, %v2074
    %v2090 = vsel %vm1434, %v2089, 1.0
    %v2091 = vsel %vm1435, %v2088, 1.0
    %v2092 = vsel %vm1436, %v2087, 1.0
    %v2093 = vsel %vm1437, %v2086, 1.0
    %v2094 = vsel %vm1438, %v2085, 1.0
    %v2095 = vsel %vm1439, %v2084, 1.0
    %v2096 = vsel %vm1440, %v2083, 1.0
    %v2097 = vsel %vm1441, %v2082, 1.0
    %v2098 = vrot.slane %v2066, 6
    %v2099 = vrot.slane %v2067, 6
    %v2100 = vrot.slane %v2068, 6
    %v2101 = vrot.slane %v2069, 6
    %v2102 = vrot.slane %v2070, 6
    %v2103 = vrot.slane %v2071, 6
    %v2104 = vrot.slane %v2072, 6
    %v2105 = vrot.slane %v2073, 6
    %v2106 = vsel %vm1450, %v2104, %v2105
    %v2107 = vsel %vm1450, %v2103, %v2104
    %v2108 = vsel %vm1450, %v2102, %v2103
    %v2109 = vsel %vm1450, %v2101, %v2102
    %v2110 = vsel %vm1450, %v2100, %v2101
    %v2111 = vsel %vm1450, %v2099, %v2100
    %v2112 = vsel %vm1450, %v2098, %v2099
    %v2113 = vsel %vm1450, %v2105, %v2098
    %v2114 = vsel %vm1434, %v2113, 0.0
    %v2115 = vsel %vm1435, %v2112, 0.0
    %v2116 = vsel %vm1436, %v2111, 0.0
    %v2117 = vsel %vm1437, %v2110, 0.0
    %v2118 = vsel %vm1438, %v2109, 0.0
    %v2119 = vsel %vm1439, %v2108, 0.0
    %v2120 = vsel %vm1440, %v2107, 0.0
    %v2121 = vsel %vm1441, %v2106, 0.0
    %v2122 = vmul.f32 %v2042, %v2090
    %v2123 = vmul.f32 %v2043, %v2091
    %v2124 = vmul.f32 %v2044, %v2092
    %v2125 = vmul.f32 %v2045, %v2093
    %v2126 = vmul.f32 %v2046, %v2094
    %v2127 = vmul.f32 %v2047, %v2095
    %v2128 = vmul.f32 %v2048, %v2096
    %v2129 = vmul.f32 %v2049, %v2097
    %v2130 = vmul.f32 %v2066, %v2114
    %v2131 = vmul.f32 %v2067, %v2115
    %v2132 = vmul.f32 %v2068, %v2116
    %v2133 = vmul.f32 %v2069, %v2117
    %v2134 = vmul.f32 %v2070, %v2118
    %v2135 = vmul.f32 %v2071, %v2119
    %v2136 = vmul.f32 %v2072, %v2120
    %v2137 = vmul.f32 %v2073, %v2121
    %v2138 = vsub.f32 %v2122, %v2130
    %v2139 = vsub.f32 %v2123, %v2131
    %v2140 = vsub.f32 %v2124, %v2132
    %v2141 = vsub.f32 %v2125, %v2133
    %v2142 = vsub.f32 %v2126, %v2134
    %v2143 = vsub.f32 %v2127, %v2135
    %v2144 = vsub.f32 %v2128, %v2136
    %v2145 = vsub.f32 %v2129, %v2137
    %v2146 = vmul.f32 %v2042, %v2114
    %v2147 = vmul.f32 %v2043, %v2115
    %v2148 = vmul.f32 %v2044, %v2116
    %v2149 = vmul.f32 %v2045, %v2117
    %v2150 = vmul.f32 %v2046, %v2118
    %v2151 = vmul.f32 %v2047, %v2119
    %v2152 = vmul.f32 %v2048, %v2120
    %v2153 = vmul.f32 %v2049, %v2121
    %v2154 = vmul.f32 %v2066, %v2090
    %v2155 = vmul.f32 %v2067, %v2091
    %v2156 = vmul.f32 %v2068, %v2092
    %v2157 = vmul.f32 %v2069, %v2093
    %v2158 = vmul.f32 %v2070, %v2094
    %v2159 = vmul.f32 %v2071, %v2095
    %v2160 = vmul.f32 %v2072, %v2096
    %v2161 = vmul.f32 %v2073, %v2097
    %v2162 = vadd.f32 %v2146, %v2154
    %v2163 = vadd.f32 %v2147, %v2155
    %v2164 = vadd.f32 %v2148, %v2156
    %v2165 = vadd.f32 %v2149, %v2157
    %v2166 = vadd.f32 %v2150, %v2158
    %v2167 = vadd.f32 %v2151, %v2159
    %v2168 = vadd.f32 %v2152, %v2160
    %v2169 = vadd.f32 %v2153, %v2161
    %v2170 = vrot.slane %v2138, 4
    %v2171 = vrot.slane %v2139, 4
    %v2172 = vrot.slane %v2140, 4
    %v2173 = vrot.slane %v2141, 4
    %v2174 = vrot.slane %v2142, 4
    %v2175 = vrot.slane %v2143, 4
    %v2176 = vrot.slane %v2144, 4
    %v2177 = vrot.slane %v2145, 4
    %v2178 = vsel %vm1555, %v2176, %v2177
    %v2179 = vsel %vm1555, %v2175, %v2176
    %v2180 = vsel %vm1555, %v2174, %v2175
    %v2181 = vsel %vm1555, %v2173, %v2174
    %v2182 = vsel %vm1555, %v2172, %v2173
    %v2183 = vsel %vm1555, %v2171, %v2172
    %v2184 = vsel %vm1555, %v2170, %v2171
    %v2185 = vsel %vm1555, %v2177, %v2170
    %v2186 = vsel %vm1539, %v2185, 1.0
    %v2187 = vsel %vm1540, %v2184, 1.0
    %v2188 = vsel %vm1541, %v2183, 1.0
    %v2189 = vsel %vm1542, %v2182, 1.0
    %v2190 = vsel %vm1543, %v2181, 1.0
    %v2191 = vsel %vm1544, %v2180, 1.0
    %v2192 = vsel %vm1545, %v2179, 1.0
    %v2193 = vsel %vm1546, %v2178, 1.0
    %v2194 = vrot.slane %v2162, 4
    %v2195 = vrot.slane %v2163, 4
    %v2196 = vrot.slane %v2164, 4
    %v2197 = vrot.slane %v2165, 4
    %v2198 = vrot.slane %v2166, 4
    %v2199 = vrot.slane %v2167, 4
    %v2200 = vrot.slane %v2168, 4
    %v2201 = vrot.slane %v2169, 4
    %v2202 = vsel %vm1555, %v2200, %v2201
    %v2203 = vsel %vm1555, %v2199, %v2200
    %v2204 = vsel %vm1555, %v2198, %v2199
    %v2205 = vsel %vm1555, %v2197, %v2198
    %v2206 = vsel %vm1555, %v2196, %v2197
    %v2207 = vsel %vm1555, %v2195, %v2196
    %v2208 = vsel %vm1555, %v2194, %v2195
    %v2209 = vsel %vm1555, %v2201, %v2194
    %v2210 = vsel %vm1539, %v2209, 0.0
    %v2211 = vsel %vm1540, %v2208, 0.0
    %v2212 = vsel %vm1541, %v2207, 0.0
    %v2213 = vsel %vm1542, %v2206, 0.0
    %v2214 = vsel %vm1543, %v2205, 0.0
    %v2215 = vsel %vm1544, %v2204, 0.0
    %v2216 = vsel %vm1545, %v2203, 0.0
    %v2217 = vsel %vm1546, %v2202, 0.0
    %v2218 = vmul.f32 %v2138, %v2186
    %v2219 = vmul.f32 %v2139, %v2187
    %v2220 = vmul.f32 %v2140, %v2188
    %v2221 = vmul.f32 %v2141, %v2189
    %v2222 = vmul.f32 %v2142, %v2190
    %v2223 = vmul.f32 %v2143, %v2191
    %v2224 = vmul.f32 %v2144, %v2192
    %v2225 = vmul.f32 %v2145, %v2193
    %v2226 = vmul.f32 %v2162, %v2210
    %v2227 = vmul.f32 %v2163, %v2211
    %v2228 = vmul.f32 %v2164, %v2212
    %v2229 = vmul.f32 %v2165, %v2213
    %v2230 = vmul.f32 %v2166, %v2214
    %v2231 = vmul.f32 %v2167, %v2215
    %v2232 = vmul.f32 %v2168, %v2216
    %v2233 = vmul.f32 %v2169, %v2217
    %v2234 = vsub.f32 %v2218, %v2226
    %v2235 = vsub.f32 %v2219, %v2227
    %v2236 = vsub.f32 %v2220, %v2228
    %v2237 = vsub.f32 %v2221, %v2229
    %v2238 = vsub.f32 %v2222, %v2230
    %v2239 = vsub.f32 %v2223, %v2231
    %v2240 = vsub.f32 %v2224, %v2232
    %v2241 = vsub.f32 %v2225, %v2233
    %v2242 = vmul.f32 %v2138, %v2210
    %v2243 = vmul.f32 %v2139, %v2211
    %v2244 = vmul.f32 %v2140, %v2212
    %v2245 = vmul.f32 %v2141, %v2213
    %v2246 = vmul.f32 %v2142, %v2214
    %v2247 = vmul.f32 %v2143, %v2215
    %v2248 = vmul.f32 %v2144, %v2216
    %v2249 = vmul.f32 %v2145, %v2217
    %v2250 = vmul.f32 %v2162, %v2186
    %v2251 = vmul.f32 %v2163, %v2187
    %v2252 = vmul.f32 %v2164, %v2188
    %v2253 = vmul.f32 %v2165, %v2189
    %v2254 = vmul.f32 %v2166, %v2190
    %v2255 = vmul.f32 %v2167, %v2191
    %v2256 = vmul.f32 %v2168, %v2192
    %v2257 = vmul.f32 %v2169, %v2193
    %v2258 = vadd.f32 %v2242, %v2250
    %v2259 = vadd.f32 %v2243, %v2251
    %v2260 = vadd.f32 %v2244, %v2252
    %v2261 = vadd.f32 %v2245, %v2253
    %v2262 = vadd.f32 %v2246, %v2254
    %v2263 = vadd.f32 %v2247, %v2255
    %v2264 = vadd.f32 %v2248, %v2256
    %v2265 = vadd.f32 %v2249, %v2257
    %v2266 = vsel %vm1644, %v2241, 1.0
    %v2267 = vsel %vm1645, %v2234, 1.0
    %v2268 = vsel %vm1646, %v2235, 1.0
    %v2269 = vsel %vm1647, %v2236, 1.0
    %v2270 = vsel %vm1648, %v2237, 1.0
    %v2271 = vsel %vm1649, %v2238, 1.0
    %v2272 = vsel %vm1650, %v2239, 1.0
    %v2273 = vsel %vm1651, %v2240, 1.0
    %v2274 = vsel %vm1644, %v2265, 0.0
    %v2275 = vsel %vm1645, %v2258, 0.0
    %v2276 = vsel %vm1646, %v2259, 0.0
    %v2277 = vsel %vm1647, %v2260, 0.0
    %v2278 = vsel %vm1648, %v2261, 0.0
    %v2279 = vsel %vm1649, %v2262, 0.0
    %v2280 = vsel %vm1650, %v2263, 0.0
    %v2281 = vsel %vm1651, %v2264, 0.0
    %v2282 = vmul.f32 %v2234, %v2266
    %v2283 = vmul.f32 %v2235, %v2267
    %v2284 = vmul.f32 %v2236, %v2268
    %v2285 = vmul.f32 %v2237, %v2269
    %v2286 = vmul.f32 %v2238, %v2270
    %v2287 = vmul.f32 %v2239, %v2271
    %v2288 = vmul.f32 %v2240, %v2272
    %v2289 = vmul.f32 %v2241, %v2273
    %v2290 = vmul.f32 %v2258, %v2274
    %v2291 = vmul.f32 %v2259, %v2275
    %v2292 = vmul.f32 %v2260, %v2276
    %v2293 = vmul.f32 %v2261, %v2277
    %v2294 = vmul.f32 %v2262, %v2278
    %v2295 = vmul.f32 %v2263, %v2279
    %v2296 = vmul.f32 %v2264, %v2280
    %v2297 = vmul.f32 %v2265, %v2281
    %v2298 = vsub.f32 %v2282, %v2290
    %v2299 = vsub.f32 %v2283, %v2291
    %v2300 = vsub.f32 %v2284, %v2292
    %v2301 = vsub.f32 %v2285, %v2293
    %v2302 = vsub.f32 %v2286, %v2294
    %v2303 = vsub.f32 %v2287, %v2295
    %v2304 = vsub.f32 %v2288, %v2296
    %v2305 = vsub.f32 %v2289, %v2297
    %v2306 = vmul.f32 %v2234, %v2274
    %v2307 = vmul.f32 %v2235, %v2275
    %v2308 = vmul.f32 %v2236, %v2276
    %v2309 = vmul.f32 %v2237, %v2277
    %v2310 = vmul.f32 %v2238, %v2278
    %v2311 = vmul.f32 %v2239, %v2279
    %v2312 = vmul.f32 %v2240, %v2280
    %v2313 = vmul.f32 %v2241, %v2281
    %v2314 = vmul.f32 %v2258, %v2266
    %v2315 = vmul.f32 %v2259, %v2267
    %v2316 = vmul.f32 %v2260, %v2268
    %v2317 = vmul.f32 %v2261, %v2269
    %v2318 = vmul.f32 %v2262, %v2270
    %v2319 = vmul.f32 %v2263, %v2271
    %v2320 = vmul.f32 %v2264, %v2272
    %v2321 = vmul.f32 %v2265, %v2273
    %v2322 = vadd.f32 %v2306, %v2314
    %v2323 = vadd.f32 %v2307, %v2315
    %v2324 = vadd.f32 %v2308, %v2316
    %v2325 = vadd.f32 %v2309, %v2317
    %v2326 = vadd.f32 %v2310, %v2318
    %v2327 = vadd.f32 %v2311, %v2319
    %v2328 = vadd.f32 %v2312, %v2320
    %v2329 = vadd.f32 %v2313, %v2321
    %v2330 = vsel %vm1716, %v2304, 1.0
    %v2331 = vsel %vm1717, %v2305, 1.0
    %v2332 = vsel %vm1718, %v2298, 1.0
    %v2333 = vsel %vm1719, %v2299, 1.0
    %v2334 = vsel %vm1720, %v2300, 1.0
    %v2335 = vsel %vm1721, %v2301, 1.0
    %v2336 = vsel %vm1722, %v2302, 1.0
    %v2337 = vsel %vm1723, %v2303, 1.0
    %v2338 = vsel %vm1716, %v2328, 0.0
    %v2339 = vsel %vm1717, %v2329, 0.0
    %v2340 = vsel %vm1718, %v2322, 0.0
    %v2341 = vsel %vm1719, %v2323, 0.0
    %v2342 = vsel %vm1720, %v2324, 0.0
    %v2343 = vsel %vm1721, %v2325, 0.0
    %v2344 = vsel %vm1722, %v2326, 0.0
    %v2345 = vsel %vm1723, %v2327, 0.0
    %v2346 = vmul.f32 %v2298, %v2330
    %v2347 = vmul.f32 %v2299, %v2331
    %v2348 = vmul.f32 %v2300, %v2332
    %v2349 = vmul.f32 %v2301, %v2333
    %v2350 = vmul.f32 %v2302, %v2334
    %v2351 = vmul.f32 %v2303, %v2335
    %v2352 = vmul.f32 %v2304, %v2336
    %v2353 = vmul.f32 %v2305, %v2337
    %v2354 = vmul.f32 %v2322, %v2338
    %v2355 = vmul.f32 %v2323, %v2339
    %v2356 = vmul.f32 %v2324, %v2340
    %v2357 = vmul.f32 %v2325, %v2341
    %v2358 = vmul.f32 %v2326, %v2342
    %v2359 = vmul.f32 %v2327, %v2343
    %v2360 = vmul.f32 %v2328, %v2344
    %v2361 = vmul.f32 %v2329, %v2345
    %v2362 = vsub.f32 %v2346, %v2354
    %v2363 = vsub.f32 %v2347, %v2355
    %v2364 = vsub.f32 %v2348, %v2356
    %v2365 = vsub.f32 %v2349, %v2357
    %v2366 = vsub.f32 %v2350, %v2358
    %v2367 = vsub.f32 %v2351, %v2359
    %v2368 = vsub.f32 %v2352, %v2360
    %v2369 = vsub.f32 %v2353, %v2361
    %v2370 = vmul.f32 %v2298, %v2338
    %v2371 = vmul.f32 %v2299, %v2339
    %v2372 = vmul.f32 %v2300, %v2340
    %v2373 = vmul.f32 %v2301, %v2341
    %v2374 = vmul.f32 %v2302, %v2342
    %v2375 = vmul.f32 %v2303, %v2343
    %v2376 = vmul.f32 %v2304, %v2344
    %v2377 = vmul.f32 %v2305, %v2345
    %v2378 = vmul.f32 %v2322, %v2330
    %v2379 = vmul.f32 %v2323, %v2331
    %v2380 = vmul.f32 %v2324, %v2332
    %v2381 = vmul.f32 %v2325, %v2333
    %v2382 = vmul.f32 %v2326, %v2334
    %v2383 = vmul.f32 %v2327, %v2335
    %v2384 = vmul.f32 %v2328, %v2336
    %v2385 = vmul.f32 %v2329, %v2337
    %v2386 = vadd.f32 %v2370, %v2378
    %v2387 = vadd.f32 %v2371, %v2379
    %v2388 = vadd.f32 %v2372, %v2380
    %v2389 = vadd.f32 %v2373, %v2381
    %v2390 = vadd.f32 %v2374, %v2382
    %v2391 = vadd.f32 %v2375, %v2383
    %v2392 = vadd.f32 %v2376, %v2384
    %v2393 = vadd.f32 %v2377, %v2385
    %v2394 = vsel %vm1788, %v2366, 1.0
    %v2395 = vsel %vm1789, %v2367, 1.0
    %v2396 = vsel %vm1790, %v2368, 1.0
    %v2397 = vsel %vm1791, %v2369, 1.0
    %v2398 = vsel %vm1792, %v2362, 1.0
    %v2399 = vsel %vm1793, %v2363, 1.0
    %v2400 = vsel %vm1794, %v2364, 1.0
    %v2401 = vsel %vm1795, %v2365, 1.0
    %v2402 = vsel %vm1788, %v2390, 0.0
    %v2403 = vsel %vm1789, %v2391, 0.0
    %v2404 = vsel %vm1790, %v2392, 0.0
    %v2405 = vsel %vm1791, %v2393, 0.0
    %v2406 = vsel %vm1792, %v2386, 0.0
    %v2407 = vsel %vm1793, %v2387, 0.0
    %v2408 = vsel %vm1794, %v2388, 0.0
    %v2409 = vsel %vm1795, %v2389, 0.0
    %v2410 = vmul.f32 %v2362, %v2394
    %v2411 = vmul.f32 %v2363, %v2395
    %v2412 = vmul.f32 %v2364, %v2396
    %v2413 = vmul.f32 %v2365, %v2397
    %v2414 = vmul.f32 %v2366, %v2398
    %v2415 = vmul.f32 %v2367, %v2399
    %v2416 = vmul.f32 %v2368, %v2400
    %v2417 = vmul.f32 %v2369, %v2401
    %v2418 = vmul.f32 %v2386, %v2402
    %v2419 = vmul.f32 %v2387, %v2403
    %v2420 = vmul.f32 %v2388, %v2404
    %v2421 = vmul.f32 %v2389, %v2405
    %v2422 = vmul.f32 %v2390, %v2406
    %v2423 = vmul.f32 %v2391, %v2407
    %v2424 = vmul.f32 %v2392, %v2408
    %v2425 = vmul.f32 %v2393, %v2409
    %v2426 = vsub.f32 %v2410, %v2418
    %v2427 = vsub.f32 %v2411, %v2419
    %v2428 = vsub.f32 %v2412, %v2420
    %v2429 = vsub.f32 %v2413, %v2421
    %v2430 = vsub.f32 %v2414, %v2422
    %v2431 = vsub.f32 %v2415, %v2423
    %v2432 = vsub.f32 %v2416, %v2424
    %v2433 = vsub.f32 %v2417, %v2425
    %v2434 = vmul.f32 %v2362, %v2402
    %v2435 = vmul.f32 %v2363, %v2403
    %v2436 = vmul.f32 %v2364, %v2404
    %v2437 = vmul.f32 %v2365, %v2405
    %v2438 = vmul.f32 %v2366, %v2406
    %v2439 = vmul.f32 %v2367, %v2407
    %v2440 = vmul.f32 %v2368, %v2408
    %v2441 = vmul.f32 %v2369, %v2409
    %v2442 = vmul.f32 %v2386, %v2394
    %v2443 = vmul.f32 %v2387, %v2395
    %v2444 = vmul.f32 %v2388, %v2396
    %v2445 = vmul.f32 %v2389, %v2397
    %v2446 = vmul.f32 %v2390, %v2398
    %v2447 = vmul.f32 %v2391, %v2399
    %v2448 = vmul.f32 %v2392, %v2400
    %v2449 = vmul.f32 %v2393, %v2401
    %v2450 = vadd.f32 %v2434, %v2442
    %v2451 = vadd.f32 %v2435, %v2443
    %v2452 = vadd.f32 %v2436, %v2444
    %v2453 = vadd.f32 %v2437, %v2445
    %v2454 = vadd.f32 %v2438, %v2446
    %v2455 = vadd.f32 %v2439, %v2447
    %v2456 = vadd.f32 %v2440, %v2448
    %v2457 = vadd.f32 %v2441, %v2449
    %v2458 = vlaneseq
    %v2459 = vshrl.u32 %v2458, 7
    %v2460 = vsub.s32 0, %v2459
    %v2461 = vrot.slane %v1974, %v2460
    %v2462 = vmul.f32 %v2461, %v2426
    %v2463 = vmul.f32 %v2461, %v2427
    %v2464 = vmul.f32 %v2461, %v2428
    %v2465 = vmul.f32 %v2461, %v2429
    %v2466 = vmul.f32 %v2461, %v2430
    %v2467 = vmul.f32 %v2461, %v2431
    %v2468 = vmul.f32 %v2461, %v2432
    %v2469 = vmul.f32 %v2461, %v2433
    %v2470 = vlaneseq
    %v2471 = vshrl.u32 %v2470, 7
    %v2472 = vsub.s32 0, %v2471
    %v2473 = vrot.slane %v1977, %v2472
    %v2474 = vmul.f32 %v2473, %v2450
    %v2475 = vmul.f32 %v2473, %v2451
    %v2476 = vmul.f32 %v2473, %v2452
    %v2477 = vmul.f32 %v2473, %v2453
    %v2478 = vmul.f32 %v2473, %v2454
    %v2479 = vmul.f32 %v2473, %v2455
    %v2480 = vmul.f32 %v2473, %v2456
    %v2481 = vmul.f32 %v2473, %v2457
    %v2482 = vsub.f32 %v2462, %v2474
    %v2483 = vsub.f32 %v2463, %v2475
    %v2484 = vsub.f32 %v2464, %v2476
    %v2485 = vsub.f32 %v2465, %v2477
    %v2486 = vsub.f32 %v2466, %v2478
    %v2487 = vsub.f32 %v2467, %v2479
    %v2488 = vsub.f32 %v2468, %v2480
    %v2489 = vsub.f32 %v2469, %v2481
    %v2490 = vmul.f32 %v2461, %v2450
    %v2491 = vmul.f32 %v2461, %v2451
    %v2492 = vmul.f32 %v2461, %v2452
    %v2493 = vmul.f32 %v2461, %v2453
    %v2494 = vmul.f32 %v2461, %v2454
    %v2495 = vmul.f32 %v2461, %v2455
    %v2496 = vmul.f32 %v2461, %v2456
    %v2497 = vmul.f32 %v2461, %v2457
    %v2498 = vmul.f32 %v2473, %v2426
    %v2499 = vmul.f32 %v2473, %v2427
    %v2500 = vmul.f32 %v2473, %v2428
    %v2501 = vmul.f32 %v2473, %v2429
    %v2502 = vmul.f32 %v2473, %v2430
    %v2503 = vmul.f32 %v2473, %v2431
    %v2504 = vmul.f32 %v2473, %v2432
    %v2505 = vmul.f32 %v2473, %v2433
    %v2506 = vadd.f32 %v2490, %v2498
    %v2507 = vadd.f32 %v2491, %v2499
    %v2508 = vadd.f32 %v2492, %v2500
    %v2509 = vadd.f32 %v2493, %v2501
    %v2510 = vadd.f32 %v2494, %v2502
    %v2511 = vadd.f32 %v2495, %v2503
    %v2512 = vadd.f32 %v2496, %v2504
    %v2513 = vadd.f32 %v2497, %v2505
    %v2514 = vmul.f32 %v2482, %v2482
    %v2515 = vmul.f32 %v2483, %v2483
    %v2516 = vmul.f32 %v2484, %v2484
    %v2517 = vmul.f32 %v2485, %v2485
    %v2518 = vmul.f32 %v2486, %v2486
    %v2519 = vmul.f32 %v2487, %v2487
    %v2520 = vmul.f32 %v2488, %v2488
    %v2521 = vmul.f32 %v2489, %v2489
    %v2522 = vmul.f32 %v2506, %v2506
    %v2523 = vmul.f32 %v2507, %v2507
    %v2524 = vmul.f32 %v2508, %v2508
    %v2525 = vmul.f32 %v2509, %v2509
    %v2526 = vmul.f32 %v2510, %v2510
    %v2527 = vmul.f32 %v2511, %v2511
    %v2528 = vmul.f32 %v2512, %v2512
    %v2529 = vmul.f32 %v2513, %v2513
    %v2530 = vadd.f32 %v2514, %v2522
    %v2531 = vadd.f32 %v2515, %v2523
    %v2532 = vadd.f32 %v2516, %v2524
    %v2533 = vadd.f32 %v2517, %v2525
    %v2534 = vadd.f32 %v2518, %v2526
    %v2535 = vadd.f32 %v2519, %v2527
    %v2536 = vadd.f32 %v2520, %v2528
    %v2537 = vadd.f32 %v2521, %v2529
    %v2538 = vmax.f32 %v2530, 1e-30
    %v2539 = vmax.f32 %v2531, 1e-30
    %v2540 = vmax.f32 %v2532, 1e-30
    %v2541 = vmax.f32 %v2533, 1e-30
    %v2542 = vmax.f32 %v2534, 1e-30
    %v2543 = vmax.f32 %v2535, 1e-30
    %v2544 = vmax.f32 %v2536, 1e-30
    %v2545 = vmax.f32 %v2537, 1e-30
    %v2546 = vrsqrt.pop %v2538
    %v2547 = vrsqrt.pop %v2539
    %v2548 = vrsqrt.pop %v2540
    %v2549 = vrsqrt.pop %v2541
    %v2550 = vrsqrt.pop %v2542
    %v2551 = vrsqrt.pop %v2543
    %v2552 = vrsqrt.pop %v2544
    %v2553 = vrsqrt.pop %v2545
    %v2554 = vmul.f32 %v2482, %v2546
    %v2555 = vmul.f32 %v2483, %v2547
    %v2556 = vmul.f32 %v2484, %v2548
    %v2557 = vmul.f32 %v2485, %v2549
    %v2558 = vmul.f32 %v2486, %v2550
    %v2559 = vmul.f32 %v2487, %v2551
    %v2560 = vmul.f32 %v2488, %v2552
    %v2561 = vmul.f32 %v2489, %v2553
    %v2562 = vmul.f32 %v2506, %v2546
    %v2563 = vmul.f32 %v2507, %v2547
    %v2564 = vmul.f32 %v2508, %v2548
    %v2565 = vmul.f32 %v2509, %v2549
    %v2566 = vmul.f32 %v2510, %v2550
    %v2567 = vmul.f32 %v2511, %v2551
    %v2568 = vmul.f32 %v2512, %v2552
    %v2569 = vmul.f32 %v2513, %v2553
    %v2570 = vmul.f32 %v726, %v1956
    %v2571 = vmul.f32 %v727, %v1957
    %v2572 = vmul.f32 %v728, %v1958
    %v2573 = vmul.f32 %v729, %v1959
    %v2574 = vmul.f32 %v730, %v1960
    %v2575 = vmul.f32 %v731, %v1961
    %v2576 = vmul.f32 %v732, %v1962
    %v2577 = vmul.f32 %v733, %v1963
    %v2578 = vmul.f32 %v734, %v2554
    %v2579 = vmul.f32 %v735, %v2555
    %v2580 = vmul.f32 %v736, %v2556
    %v2581 = vmul.f32 %v737, %v2557
    %v2582 = vmul.f32 %v738, %v2558
    %v2583 = vmul.f32 %v739, %v2559
    %v2584 = vmul.f32 %v740, %v2560
    %v2585 = vmul.f32 %v741, %v2561
    %v2586 = vmul.f32 %v726, %v1964
    %v2587 = vmul.f32 %v727, %v1965
    %v2588 = vmul.f32 %v728, %v1966
    %v2589 = vmul.f32 %v729, %v1967
    %v2590 = vmul.f32 %v730, %v1968
    %v2591 = vmul.f32 %v731, %v1969
    %v2592 = vmul.f32 %v732, %v1970
    %v2593 = vmul.f32 %v733, %v1971
    %v2594 = vmul.f32 %v734, %v2562
    %v2595 = vmul.f32 %v735, %v2563
    %v2596 = vmul.f32 %v736, %v2564
    %v2597 = vmul.f32 %v737, %v2565
    %v2598 = vmul.f32 %v738, %v2566
    %v2599 = vmul.f32 %v739, %v2567
    %v2600 = vmul.f32 %v740, %v2568
    %v2601 = vmul.f32 %v741, %v2569
    %v2602 = vld [vmem:[%s3] sm:$0xff]
    %v2603 = vld [vmem:[%s3 + $0x8] sm:$0xff]
    %v2604 = vld [vmem:[%s3 + $0x10] sm:$0xff]
    %v2605 = vld [vmem:[%s3 + $0x18] sm:$0xff]
    %v2606 = vld [vmem:[%s3 + $0x20] sm:$0xff]
    %v2607 = vld [vmem:[%s3 + $0x28] sm:$0xff]
    %v2608 = vld [vmem:[%s3 + $0x30] sm:$0xff]
    %v2609 = vld [vmem:[%s3 + $0x38] sm:$0xff]
    %v2610 = vld [vmem:[%s3 + $0x40] sm:$0xff]
    %v2611 = vld [vmem:[%s3 + $0x48] sm:$0xff]
    %v2612 = vld [vmem:[%s3 + $0x50] sm:$0xff]
    %v2613 = vld [vmem:[%s3 + $0x58] sm:$0xff]
    %v2614 = vld [vmem:[%s3 + $0x60] sm:$0xff]
    %v2615 = vld [vmem:[%s3 + $0x68] sm:$0xff]
    %v2616 = vld [vmem:[%s3 + $0x70] sm:$0xff]
    %v2617 = vld [vmem:[%s3 + $0x78] sm:$0xff]
    %v2618 = vld [vmem:[%s3 + $0x80] sm:$0xff]
    %v2619 = vld [vmem:[%s3 + $0x88] sm:$0xff]
    %v2620 = vld [vmem:[%s3 + $0x90] sm:$0xff]
    %v2621 = vld [vmem:[%s3 + $0x98] sm:$0xff]
    %v2622 = vld [vmem:[%s3 + $0xa0] sm:$0xff]
    %v2623 = vld [vmem:[%s3 + $0xa8] sm:$0xff]
    %v2624 = vld [vmem:[%s3 + $0xb0] sm:$0xff]
    %v2625 = vld [vmem:[%s3 + $0xb8] sm:$0xff]
    %v2626 = vld [vmem:[%s3 + $0xc0] sm:$0xff]
    %v2627 = vld [vmem:[%s3 + $0xc8] sm:$0xff]
    %v2628 = vld [vmem:[%s3 + $0xd0] sm:$0xff]
    %v2629 = vld [vmem:[%s3 + $0xd8] sm:$0xff]
    %v2630 = vld [vmem:[%s3 + $0xe0] sm:$0xff]
    %v2631 = vld [vmem:[%s3 + $0xe8] sm:$0xff]
    %v2632 = vld [vmem:[%s3 + $0xf0] sm:$0xff]
    %v2633 = vld [vmem:[%s3 + $0xf8] sm:$0xff]
    %2634 = vmatprep.subr.mxu0 0.0
    %2635 = vmatpush1.msra.mxu0 %v2602
    %2636 = vmatprep.subr.mxu0 0.0
    %2637 = vmatpush1.msra.mxu0 %v2603
    %2638 = vmatprep.subr.mxu0 0.0
    %2639 = vmatpush1.msra.mxu0 %v2604
    %2640 = vmatprep.subr.mxu0 0.0
    %2641 = vmatpush1.msra.mxu0 %v2605
    %2642 = vmatprep.subr.mxu0 0.0
    %2643 = vmatpush1.msra.mxu0 %v2606
    %2644 = vmatprep.subr.mxu0 0.0
    %2645 = vmatpush1.msra.mxu0 %v2607
    %2646 = vmatprep.subr.mxu0 0.0
    %2647 = vmatpush1.msra.mxu0 %v2608
    %2648 = vmatprep.subr.mxu0 0.0
    %2649 = vmatpush1.msra.mxu0 %v2609
    %2650 = vmatprep.subr.mxu0 0.0
    %2651 = vmatpush1.msra.mxu0 %v2610
    %2652 = vmatprep.subr.mxu0 0.0
    %2653 = vmatpush1.msra.mxu0 %v2611
    %2654 = vmatprep.subr.mxu0 0.0
    %2655 = vmatpush1.msra.mxu0 %v2612
    %2656 = vmatprep.subr.mxu0 0.0
    %2657 = vmatpush1.msra.mxu0 %v2613
    %2658 = vmatprep.subr.mxu0 0.0
    %2659 = vmatpush1.msra.mxu0 %v2614
    %2660 = vmatprep.subr.mxu0 0.0
    %2661 = vmatpush1.msra.mxu0 %v2615
    %2662 = vmatprep.subr.mxu0 0.0
    %2663 = vmatpush1.msra.mxu0 %v2616
    %2664 = vmatprep.subr.mxu0 0.0
    %2665 = vmatpush1.msra.mxu0 %v2617
    %2666 = vmatprep.subr.mxu0 0.0
    %2667 = vmatpush1.msra.mxu0 %v2618
    %2668 = vmatprep.subr.mxu0 0.0
    %2669 = vmatpush1.msra.mxu0 %v2619
    %2670 = vmatprep.subr.mxu0 0.0
    %2671 = vmatpush1.msra.mxu0 %v2620
    %2672 = vmatprep.subr.mxu0 0.0
    %2673 = vmatpush1.msra.mxu0 %v2621
    %2674 = vmatprep.subr.mxu0 0.0
    %2675 = vmatpush1.msra.mxu0 %v2622
    %2676 = vmatprep.subr.mxu0 0.0
    %2677 = vmatpush1.msra.mxu0 %v2623
    %2678 = vmatprep.subr.mxu0 0.0
    %2679 = vmatpush1.msra.mxu0 %v2624
    %2680 = vmatprep.subr.mxu0 0.0
    %2681 = vmatpush1.msra.mxu0 %v2625
    %2682 = vmatprep.subr.mxu0 0.0
    %2683 = vmatpush1.msra.mxu0 %v2626
    %2684 = vmatprep.subr.mxu0 0.0
    %2685 = vmatpush1.msra.mxu0 %v2627
    %2686 = vmatprep.subr.mxu0 0.0
    %2687 = vmatpush1.msra.mxu0 %v2628
    %2688 = vmatprep.subr.mxu0 0.0
    %2689 = vmatpush1.msra.mxu0 %v2629
    %2690 = vmatprep.subr.mxu0 0.0
    %2691 = vmatpush1.msra.mxu0 %v2630
    %2692 = vmatprep.subr.mxu0 0.0
    %2693 = vmatpush1.msra.mxu0 %v2631
    %2694 = vmatprep.subr.mxu0 0.0
    %2695 = vmatpush1.msra.mxu0 %v2632
    %2696 = vmatprep.subr.mxu0 0.0
    %2697 = vmatpush1.msra.mxu0 %v2633
    %2698 = vmatprep.mubr.f32.mxu0 %v2586
    %2699 = vmatmul.mubr.f32.gmra.mrb[0].mxu0 %v2570
    %v2700 = vpop.f32.mrb[0].mxu0
    %v2701 = vadd.f32 0.0, %v2700
    %v2702 = vpop.f32.mrb[0].mxu0
    %2703 = vmatprep.mubr.f32.mxu0 %v2587
    %2704 = vmatmul.mubr.f32.gmra.mrb[0].mxu0 %v2571
    %v2705 = vpop.f32.mrb[0].mxu0
    %v2706 = vadd.f32 0.0, %v2705
    %v2707 = vpop.f32.mrb[0].mxu0
    %2708 = vmatprep.mubr.f32.mxu0 %v2588
    %2709 = vmatmul.mubr.f32.gmra.mrb[0].mxu0 %v2572
    %v2710 = vpop.f32.mrb[0].mxu0
    %v2711 = vadd.f32 0.0, %v2710
    %v2712 = vpop.f32.mrb[0].mxu0
    %2713 = vmatprep.mubr.f32.mxu0 %v2589
    %2714 = vmatmul.mubr.f32.gmra.mrb[0].mxu0 %v2573
    %v2715 = vpop.f32.mrb[0].mxu0
    %v2716 = vadd.f32 0.0, %v2715
    %v2717 = vpop.f32.mrb[0].mxu0
    %2718 = vmatprep.mubr.f32.mxu0 %v2590
    %2719 = vmatmul.mubr.f32.gmra.mrb[0].mxu0 %v2574
    %v2720 = vpop.f32.mrb[0].mxu0
    %v2721 = vadd.f32 0.0, %v2720
    %v2722 = vpop.f32.mrb[0].mxu0
    %2723 = vmatprep.mubr.f32.mxu0 %v2591
    %2724 = vmatmul.mubr.f32.gmra.mrb[0].mxu0 %v2575
    %v2725 = vpop.f32.mrb[0].mxu0
    %v2726 = vadd.f32 0.0, %v2725
    %v2727 = vpop.f32.mrb[0].mxu0
    %2728 = vmatprep.mubr.f32.mxu0 %v2592
    %2729 = vmatmul.mubr.f32.gmra.mrb[0].mxu0 %v2576
    %v2730 = vpop.f32.mrb[0].mxu0
    %v2731 = vadd.f32 0.0, %v2730
    %v2732 = vpop.f32.mrb[0].mxu0
    %2733 = vmatprep.mubr.f32.mxu0 %v2593
    %2734 = vmatmul.mubr.f32.gmra.mrb[0].mxu0 %v2577
    %v2735 = vpop.f32.mrb[0].mxu0
    %v2736 = vadd.f32 0.0, %v2735
    %v2737 = vpop.f32.mrb[0].mxu0
    %2738 = vmatprep.mubr.f32.mxu0 %v2594
    %2739 = vmatmul.mubr.f32.gmra.mrb[0].mxu0 %v2578
    %v2740 = vpop.f32.mrb[0].mxu0
    %v2741 = vadd.f32 0.0, %v2740
    %v2742 = vpop.f32.mrb[0].mxu0
    %2743 = vmatprep.mubr.f32.mxu0 %v2595
    %2744 = vmatmul.mubr.f32.gmra.mrb[0].mxu0 %v2579
    %v2745 = vpop.f32.mrb[0].mxu0
    %v2746 = vadd.f32 0.0, %v2745
    %v2747 = vpop.f32.mrb[0].mxu0
    %2748 = vmatprep.mubr.f32.mxu0 %v2596
    %2749 = vmatmul.mubr.f32.gmra.mrb[0].mxu0 %v2580
    %v2750 = vpop.f32.mrb[0].mxu0
    %v2751 = vadd.f32 0.0, %v2750
    %v2752 = vpop.f32.mrb[0].mxu0
    %2753 = vmatprep.mubr.f32.mxu0 %v2597
    %2754 = vmatmul.mubr.f32.gmra.mrb[0].mxu0 %v2581
    %v2755 = vpop.f32.mrb[0].mxu0
    %v2756 = vadd.f32 0.0, %v2755
    %v2757 = vpop.f32.mrb[0].mxu0
    %2758 = vmatprep.mubr.f32.mxu0 %v2598
    %2759 = vmatmul.mubr.f32.gmra.mrb[0].mxu0 %v2582
    %v2760 = vpop.f32.mrb[0].mxu0
    %v2761 = vadd.f32 0.0, %v2760
    %v2762 = vpop.f32.mrb[0].mxu0
    %2763 = vmatprep.mubr.f32.mxu0 %v2599
    %2764 = vmatmul.mubr.f32.gmra.mrb[0].mxu0 %v2583
    %v2765 = vpop.f32.mrb[0].mxu0
    %v2766 = vadd.f32 0.0, %v2765
    %v2767 = vpop.f32.mrb[0].mxu0
    %2768 = vmatprep.mubr.f32.mxu0 %v2600
    %2769 = vmatmul.mubr.f32.gmra.mrb[0].mxu0 %v2584
    %v2770 = vpop.f32.mrb[0].mxu0
    %v2771 = vadd.f32 0.0, %v2770
    %v2772 = vpop.f32.mrb[0].mxu0
    %2773 = vmatprep.mubr.f32.mxu0 %v2601
    %2774 = vmatmul.mubr.f32.gmra.mrb[0].mxu0 %v2585
    %v2775 = vpop.f32.mrb[0].mxu0
    %v2776 = vadd.f32 0.0, %v2775
    %v2777 = vpop.f32.mrb[0].mxu0
    %2778 = vdwg.mxu0
    %v2779 = vrot.slane %v2701, 7
    %v2780 = vrot.slane %v2706, 7
    %v2781 = vrot.slane %v2711, 7
    %v2782 = vrot.slane %v2716, 7
    %v2783 = vrot.slane %v2721, 7
    %v2784 = vrot.slane %v2726, 7
    %v2785 = vrot.slane %v2731, 7
    %v2786 = vrot.slane %v2736, 7
    %v2787 = vrot.slane %v2741, 7
    %v2788 = vrot.slane %v2746, 7
    %v2789 = vrot.slane %v2751, 7
    %v2790 = vrot.slane %v2756, 7
    %v2791 = vrot.slane %v2761, 7
    %v2792 = vrot.slane %v2766, 7
    %v2793 = vrot.slane %v2771, 7
    %v2794 = vrot.slane %v2776, 7
    %v2795 = vsel %vm1257, %v2793, %v2794
    %v2796 = vsel %vm1257, %v2792, %v2793
    %v2797 = vsel %vm1257, %v2791, %v2792
    %v2798 = vsel %vm1257, %v2790, %v2791
    %v2799 = vsel %vm1257, %v2789, %v2790
    %v2800 = vsel %vm1257, %v2788, %v2789
    %v2801 = vsel %vm1257, %v2787, %v2788
    %v2802 = vsel %vm1257, %v2786, %v2787
    %v2803 = vsel %vm1257, %v2785, %v2786
    %v2804 = vsel %vm1257, %v2784, %v2785
    %v2805 = vsel %vm1257, %v2783, %v2784
    %v2806 = vsel %vm1257, %v2782, %v2783
    %v2807 = vsel %vm1257, %v2781, %v2782
    %v2808 = vsel %vm1257, %v2780, %v2781
    %v2809 = vsel %vm1257, %v2779, %v2780
    %v2810 = vsel %vm1257, %v2794, %v2779
    %2811 = vrot.lane.b32.xlu0 %v2810, 96
    %v2812 = vpop.permute.xlu0 %2811
    %2813 = vrot.lane.b32.xlu0 %v2809, 96
    %v2814 = vpop.permute.xlu0 %2813
    %2815 = vrot.lane.b32.xlu0 %v2808, 96
    %v2816 = vpop.permute.xlu0 %2815
    %2817 = vrot.lane.b32.xlu0 %v2807, 96
    %v2818 = vpop.permute.xlu0 %2817
    %2819 = vrot.lane.b32.xlu0 %v2806, 96
    %v2820 = vpop.permute.xlu0 %2819
    %2821 = vrot.lane.b32.xlu0 %v2805, 96
    %v2822 = vpop.permute.xlu0 %2821
    %2823 = vrot.lane.b32.xlu0 %v2804, 96
    %v2824 = vpop.permute.xlu0 %2823
    %2825 = vrot.lane.b32.xlu0 %v2803, 96
    %v2826 = vpop.permute.xlu0 %2825
    %2827 = vrot.lane.b32.xlu0 %v2802, 96
    %v2828 = vpop.permute.xlu0 %2827
    %2829 = vrot.lane.b32.xlu0 %v2801, 96
    %v2830 = vpop.permute.xlu0 %2829
    %2831 = vrot.lane.b32.xlu0 %v2800, 96
    %v2832 = vpop.permute.xlu0 %2831
    %2833 = vrot.lane.b32.xlu0 %v2799, 96
    %v2834 = vpop.permute.xlu0 %2833
    %2835 = vrot.lane.b32.xlu0 %v2798, 96
    %v2836 = vpop.permute.xlu0 %2835
    %2837 = vrot.lane.b32.xlu0 %v2797, 96
    %v2838 = vpop.permute.xlu0 %2837
    %2839 = vrot.lane.b32.xlu0 %v2796, 96
    %v2840 = vpop.permute.xlu0 %2839
    %2841 = vrot.lane.b32.xlu0 %v2795, 96
    %v2842 = vpop.permute.xlu0 %2841
    %v2843 = vadd.f32 %v2701, %v2812
    %v2844 = vadd.f32 %v2706, %v2814
    %v2845 = vadd.f32 %v2711, %v2816
    %v2846 = vadd.f32 %v2716, %v2818
    %v2847 = vadd.f32 %v2721, %v2820
    %v2848 = vadd.f32 %v2726, %v2822
    %v2849 = vadd.f32 %v2731, %v2824
    %v2850 = vadd.f32 %v2736, %v2826
    %v2851 = vadd.f32 %v2741, %v2828
    %v2852 = vadd.f32 %v2746, %v2830
    %v2853 = vadd.f32 %v2751, %v2832
    %v2854 = vadd.f32 %v2756, %v2834
    %v2855 = vadd.f32 %v2761, %v2836
    %v2856 = vadd.f32 %v2766, %v2838
    %v2857 = vadd.f32 %v2771, %v2840
    %v2858 = vadd.f32 %v2776, %v2842
    %v2859 = vrot.slane %v2701, 6
    %v2860 = vrot.slane %v2706, 6
    %v2861 = vrot.slane %v2711, 6
    %v2862 = vrot.slane %v2716, 6
    %v2863 = vrot.slane %v2721, 6
    %v2864 = vrot.slane %v2726, 6
    %v2865 = vrot.slane %v2731, 6
    %v2866 = vrot.slane %v2736, 6
    %v2867 = vrot.slane %v2741, 6
    %v2868 = vrot.slane %v2746, 6
    %v2869 = vrot.slane %v2751, 6
    %v2870 = vrot.slane %v2756, 6
    %v2871 = vrot.slane %v2761, 6
    %v2872 = vrot.slane %v2766, 6
    %v2873 = vrot.slane %v2771, 6
    %v2874 = vrot.slane %v2776, 6
    %v2875 = vsel %vm1450, %v2873, %v2874
    %v2876 = vsel %vm1450, %v2872, %v2873
    %v2877 = vsel %vm1450, %v2871, %v2872
    %v2878 = vsel %vm1450, %v2870, %v2871
    %v2879 = vsel %vm1450, %v2869, %v2870
    %v2880 = vsel %vm1450, %v2868, %v2869
    %v2881 = vsel %vm1450, %v2867, %v2868
    %v2882 = vsel %vm1450, %v2866, %v2867
    %v2883 = vsel %vm1450, %v2865, %v2866
    %v2884 = vsel %vm1450, %v2864, %v2865
    %v2885 = vsel %vm1450, %v2863, %v2864
    %v2886 = vsel %vm1450, %v2862, %v2863
    %v2887 = vsel %vm1450, %v2861, %v2862
    %v2888 = vsel %vm1450, %v2860, %v2861
    %v2889 = vsel %vm1450, %v2859, %v2860
    %v2890 = vsel %vm1450, %v2874, %v2859
    %2891 = vrot.lane.b32.xlu0 %v2890, 64
    %v2892 = vpop.permute.xlu0 %2891
    %2893 = vrot.lane.b32.xlu0 %v2889, 64
    %v2894 = vpop.permute.xlu0 %2893
    %2895 = vrot.lane.b32.xlu0 %v2888, 64
    %v2896 = vpop.permute.xlu0 %2895
    %2897 = vrot.lane.b32.xlu0 %v2887, 64
    %v2898 = vpop.permute.xlu0 %2897
    %2899 = vrot.lane.b32.xlu0 %v2886, 64
    %v2900 = vpop.permute.xlu0 %2899
    %2901 = vrot.lane.b32.xlu0 %v2885, 64
    %v2902 = vpop.permute.xlu0 %2901
    %2903 = vrot.lane.b32.xlu0 %v2884, 64
    %v2904 = vpop.permute.xlu0 %2903
    %2905 = vrot.lane.b32.xlu0 %v2883, 64
    %v2906 = vpop.permute.xlu0 %2905
    %2907 = vrot.lane.b32.xlu0 %v2882, 64
    %v2908 = vpop.permute.xlu0 %2907
    %2909 = vrot.lane.b32.xlu0 %v2881, 64
    %v2910 = vpop.permute.xlu0 %2909
    %2911 = vrot.lane.b32.xlu0 %v2880, 64
    %v2912 = vpop.permute.xlu0 %2911
    %2913 = vrot.lane.b32.xlu0 %v2879, 64
    %v2914 = vpop.permute.xlu0 %2913
    %2915 = vrot.lane.b32.xlu0 %v2878, 64
    %v2916 = vpop.permute.xlu0 %2915
    %2917 = vrot.lane.b32.xlu0 %v2877, 64
    %v2918 = vpop.permute.xlu0 %2917
    %2919 = vrot.lane.b32.xlu0 %v2876, 64
    %v2920 = vpop.permute.xlu0 %2919
    %2921 = vrot.lane.b32.xlu0 %v2875, 64
    %v2922 = vpop.permute.xlu0 %2921
    %v2923 = vadd.f32 %v2843, %v2892
    %v2924 = vadd.f32 %v2844, %v2894
    %v2925 = vadd.f32 %v2845, %v2896
    %v2926 = vadd.f32 %v2846, %v2898
    %v2927 = vadd.f32 %v2847, %v2900
    %v2928 = vadd.f32 %v2848, %v2902
    %v2929 = vadd.f32 %v2849, %v2904
    %v2930 = vadd.f32 %v2850, %v2906
    %v2931 = vadd.f32 %v2851, %v2908
    %v2932 = vadd.f32 %v2852, %v2910
    %v2933 = vadd.f32 %v2853, %v2912
    %v2934 = vadd.f32 %v2854, %v2914
    %v2935 = vadd.f32 %v2855, %v2916
    %v2936 = vadd.f32 %v2856, %v2918
    %v2937 = vadd.f32 %v2857, %v2920
    %v2938 = vadd.f32 %v2858, %v2922
    %v2939 = vrot.slane %v2701, 5
    %v2940 = vrot.slane %v2706, 5
    %v2941 = vrot.slane %v2711, 5
    %v2942 = vrot.slane %v2716, 5
    %v2943 = vrot.slane %v2721, 5
    %v2944 = vrot.slane %v2726, 5
    %v2945 = vrot.slane %v2731, 5
    %v2946 = vrot.slane %v2736, 5
    %v2947 = vrot.slane %v2741, 5
    %v2948 = vrot.slane %v2746, 5
    %v2949 = vrot.slane %v2751, 5
    %v2950 = vrot.slane %v2756, 5
    %v2951 = vrot.slane %v2761, 5
    %v2952 = vrot.slane %v2766, 5
    %v2953 = vrot.slane %v2771, 5
    %v2954 = vrot.slane %v2776, 5
    %vm2955 = vcmp.lt.s32.totalorder %v1209, 3
    %v2956 = vsel %vm2955, %v2953, %v2954
    %v2957 = vsel %vm2955, %v2952, %v2953
    %v2958 = vsel %vm2955, %v2951, %v2952
    %v2959 = vsel %vm2955, %v2950, %v2951
    %v2960 = vsel %vm2955, %v2949, %v2950
    %v2961 = vsel %vm2955, %v2948, %v2949
    %v2962 = vsel %vm2955, %v2947, %v2948
    %v2963 = vsel %vm2955, %v2946, %v2947
    %v2964 = vsel %vm2955, %v2945, %v2946
    %v2965 = vsel %vm2955, %v2944, %v2945
    %v2966 = vsel %vm2955, %v2943, %v2944
    %v2967 = vsel %vm2955, %v2942, %v2943
    %v2968 = vsel %vm2955, %v2941, %v2942
    %v2969 = vsel %vm2955, %v2940, %v2941
    %v2970 = vsel %vm2955, %v2939, %v2940
    %v2971 = vsel %vm2955, %v2954, %v2939
    %2972 = vrot.lane.b32.xlu0 %v2971, 32
    %v2973 = vpop.permute.xlu0 %2972
    %2974 = vrot.lane.b32.xlu0 %v2970, 32
    %v2975 = vpop.permute.xlu0 %2974
    %2976 = vrot.lane.b32.xlu0 %v2969, 32
    %v2977 = vpop.permute.xlu0 %2976
    %2978 = vrot.lane.b32.xlu0 %v2968, 32
    %v2979 = vpop.permute.xlu0 %2978
    %2980 = vrot.lane.b32.xlu0 %v2967, 32
    %v2981 = vpop.permute.xlu0 %2980
    %2982 = vrot.lane.b32.xlu0 %v2966, 32
    %v2983 = vpop.permute.xlu0 %2982
    %2984 = vrot.lane.b32.xlu0 %v2965, 32
    %v2985 = vpop.permute.xlu0 %2984
    %2986 = vrot.lane.b32.xlu0 %v2964, 32
    %v2987 = vpop.permute.xlu0 %2986
    %2988 = vrot.lane.b32.xlu0 %v2963, 32
    %v2989 = vpop.permute.xlu0 %2988
    %2990 = vrot.lane.b32.xlu0 %v2962, 32
    %v2991 = vpop.permute.xlu0 %2990
    %2992 = vrot.lane.b32.xlu0 %v2961, 32
    %v2993 = vpop.permute.xlu0 %2992
    %2994 = vrot.lane.b32.xlu0 %v2960, 32
    %v2995 = vpop.permute.xlu0 %2994
    %2996 = vrot.lane.b32.xlu0 %v2959, 32
    %v2997 = vpop.permute.xlu0 %2996
    %2998 = vrot.lane.b32.xlu0 %v2958, 32
    %v2999 = vpop.permute.xlu0 %2998
    %3000 = vrot.lane.b32.xlu0 %v2957, 32
    %v3001 = vpop.permute.xlu0 %3000
    %3002 = vrot.lane.b32.xlu0 %v2956, 32
    %v3003 = vpop.permute.xlu0 %3002
    %v3004 = vadd.f32 %v2923, %v2973
    %v3005 = vadd.f32 %v2924, %v2975
    %v3006 = vadd.f32 %v2925, %v2977
    %v3007 = vadd.f32 %v2926, %v2979
    %v3008 = vadd.f32 %v2927, %v2981
    %v3009 = vadd.f32 %v2928, %v2983
    %v3010 = vadd.f32 %v2929, %v2985
    %v3011 = vadd.f32 %v2930, %v2987
    %v3012 = vadd.f32 %v2931, %v2989
    %v3013 = vadd.f32 %v2932, %v2991
    %v3014 = vadd.f32 %v2933, %v2993
    %v3015 = vadd.f32 %v2934, %v2995
    %v3016 = vadd.f32 %v2935, %v2997
    %v3017 = vadd.f32 %v2936, %v2999
    %v3018 = vadd.f32 %v2937, %v3001
    %v3019 = vadd.f32 %v2938, %v3003
    %v3020 = vld [vmem:[%s4] sm:$0xff]
    %v3021 = vld [vmem:[%s4 + $0x8] sm:$0xff]
    %v3022 = vld [vmem:[%s4 + $0x10] sm:$0xff]
    %v3023 = vld [vmem:[%s4 + $0x18] sm:$0xff]
    %v3024 = vld [vmem:[%s4 + $0x20] sm:$0xff]
    %v3025 = vld [vmem:[%s4 + $0x28] sm:$0xff]
    %v3026 = vld [vmem:[%s4 + $0x30] sm:$0xff]
    %v3027 = vld [vmem:[%s4 + $0x38] sm:$0xff]
    %v3028 = vld [vmem:[%s4 + $0x40] sm:$0xff]
    %v3029 = vld [vmem:[%s4 + $0x48] sm:$0xff]
    %v3030 = vld [vmem:[%s4 + $0x50] sm:$0xff]
    %v3031 = vld [vmem:[%s4 + $0x58] sm:$0xff]
    %v3032 = vld [vmem:[%s4 + $0x60] sm:$0xff]
    %v3033 = vld [vmem:[%s4 + $0x68] sm:$0xff]
    %v3034 = vld [vmem:[%s4 + $0x70] sm:$0xff]
    %v3035 = vld [vmem:[%s4 + $0x78] sm:$0xff]
    %v3036 = vmul.f32 %v3004, %v3020
    %v3037 = vmul.f32 %v3005, %v3021
    %v3038 = vmul.f32 %v3006, %v3022
    %v3039 = vmul.f32 %v3007, %v3023
    %v3040 = vmul.f32 %v3008, %v3024
    %v3041 = vmul.f32 %v3009, %v3025
    %v3042 = vmul.f32 %v3010, %v3026
    %v3043 = vmul.f32 %v3011, %v3027
    %v3044 = vmul.f32 %v3012, %v3028
    %v3045 = vmul.f32 %v3013, %v3029
    %v3046 = vmul.f32 %v3014, %v3030
    %v3047 = vmul.f32 %v3015, %v3031
    %v3048 = vmul.f32 %v3016, %v3032
    %v3049 = vmul.f32 %v3017, %v3033
    %v3050 = vmul.f32 %v3018, %v3034
    %v3051 = vmul.f32 %v3019, %v3035
    %3052 = vst [vmem:[#allocation2] sm:$0xff] %v3036
    %3053 = vst [vmem:[#allocation2 + $0x8] sm:$0xff] %v3037
    %3054 = vst [vmem:[#allocation2 + $0x10] sm:$0xff] %v3038
    %3055 = vst [vmem:[#allocation2 + $0x18] sm:$0xff] %v3039
    %3056 = vst [vmem:[#allocation2 + $0x20] sm:$0xff] %v3040
    %3057 = vst [vmem:[#allocation2 + $0x28] sm:$0xff] %v3041
    %3058 = vst [vmem:[#allocation2 + $0x30] sm:$0xff] %v3042
    %3059 = vst [vmem:[#allocation2 + $0x38] sm:$0xff] %v3043
    %3060 = vst [vmem:[#allocation2 + $0x40] sm:$0xff] %v3044
    %3061 = vst [vmem:[#allocation2 + $0x48] sm:$0xff] %v3045
    %3062 = vst [vmem:[#allocation2 + $0x50] sm:$0xff] %v3046
    %3063 = vst [vmem:[#allocation2 + $0x58] sm:$0xff] %v3047
    %3064 = vst [vmem:[#allocation2 + $0x60] sm:$0xff] %v3048
    %3065 = vst [vmem:[#allocation2 + $0x68] sm:$0xff] %v3049
    %3066 = vst [vmem:[#allocation2 + $0x70] sm:$0xff] %v3050
    %3067 = vst [vmem:[#allocation2 + $0x78] sm:$0xff] %v3051
    // Predicated region
    $region22: #{_stretch_core.1} parent=1 // pred_check
      _
    $region23: #{_stretch_core.1} parent=1 // pred_check_branch
      %3069 = sbr.rel (0) target = $region25
    $region24: #{_stretch_core.1} parent=1 // pred_region
      %s3071 = ssub.s32 2048, 2048
      %3072 = vsyncadd [#allocation3], %s3071
      %s3073 = sshll.u32 [#allocation2], 4
      %s3074 = int_to_ptr.vmem [resolvable:$true] %s3073
      %3079 = dma.vmem_to_hbm [thread:$0]  %s3074, 2048, %s5, [#allocation3], 128, 128, 8
    $region25: #{_stretch_core.1} parent=1 // pred_fallthru
      _
    // Predicated region
    $region26: #{_stretch_core.1} parent=1 // pred_check
      _
    $region27: #{_stretch_core.1} parent=1 // pred_check_branch
      %3081 = sbr.rel (0) target = $region29
    $region28: #{_stretch_core.1} parent=1 // pred_region
      %3082 = dma.done [#allocation3], 2048
    $region29: #{_stretch_core.1} parent=1 // pred_fallthru
      _
    %3083 = vsyncpa [#allocation3], 1

</llo_original>
